<compile_context>
chip_gen: v7x
topology: tpu7x:2x2x1
jax: 0.10.0
libtpu: 0.0.40
codegen_flags: <defaults>
</compile_context>

<pallas_src>
import functools
import math

import jax
import jax.numpy as jnp
from jax.experimental import pallas as pl
from jax.experimental.pallas import tpu as pltpu


# ----------------------------- Pallas kernels ------------------------------


def _conv_stage_kernel(x_ref, w_ref, b_ref, o_ref, xpad_ref, patches_ref, *,
                       H, W, Cin, Cout, pool):
    """Fused 3x3 conv (pad=1) + bias + ReLU (+ optional fused 2x2 maxpool).

    x_ref      : (1, H, W*Cin)     lane-dense NHWC row for one batch element
    w_ref      : (9*Cin, Cout)     3x3 taps folded into the matmul K dimension
    b_ref      : (1, Cout)
    o_ref      : (1, Ho, Wo*Cout)  Ho, Wo = H//2, W//2 if pool else H, W
    xpad_ref   : VMEM scratch (H+2, W+2, Cin) -- zero halo built in VMEM
    patches_ref: VMEM scratch (H*W, 9*Cin)    -- im2col patch matrix
    """
    x = x_ref[0].reshape(H, W, Cin)

    # Zero-halo padding entirely in VMEM (no wrapper-side jnp.pad HBM pass).
    xpad_ref[...] = jnp.zeros_like(xpad_ref)
    xpad_ref[1:H + 1, 1:W + 1, :] = x
    xp = xpad_ref[...]

    # im2col: columns ordered (dy, dx, cin) to match the weight reshape at init.
    for dy in range(3):
        for dx in range(3):
            idx = 3 * dy + dx
            patch = xp[dy:dy + H, dx:dx + W, :].reshape(H * W, Cin)
            patches_ref[:, idx * Cin:(idx + 1) * Cin] = patch

    # Single MXU matmul with K = 9*Cin (instead of 9 matmuls with K = Cin).
    acc = jnp.dot(patches_ref[...], w_ref[...],
                  preferred_element_type=jnp.float32)
    acc = jnp.maximum(acc + b_ref[...], 0.0)            # bias + fused ReLU

    if pool:                                            # fused 2x2/2 maxpool
        y = jnp.max(acc.reshape(H // 2, 2, W, Cout), axis=1)
        y = jnp.max(y.reshape(H // 2, W // 2, 2, Cout), axis=2)
        o_ref[...] = y.reshape(1, H // 2, (W // 2) * Cout).astype(o_ref.dtype)
    else:
        o_ref[...] = acc.reshape(1, H, W * Cout).astype(o_ref.dtype)


def _classifier_kernel(x_ref, w1_ref, b1_ref, w2_ref, b2_ref, w3_ref, b3_ref,
                       o_ref):
    """Three Linear layers (+ReLU, +identity Dropout) fused in one kernel; the
    (N, HIDDEN) intermediates never leave VMEM/vregs."""
    h = jnp.dot(x_ref[...], w1_ref[...], preferred_element_type=jnp.float32)
    h = jnp.maximum(h + b1_ref[...], 0.0)
    # nn.Dropout(): identity in eval/inference mode.
    # TODO(synk): training-mode dropout (p=0.5 mask + rescale) not applied.
    h = jnp.dot(h, w2_ref[...], preferred_element_type=jnp.float32)
    h = jnp.maximum(h + b2_ref[...], 0.0)
    o = jnp.dot(h, w3_ref[...], preferred_element_type=jnp.float32)
    o_ref[...] = (o + b3_ref[...]).astype(o_ref.dtype)


# ------------------------------ JAX wrappers --------------------------------


def conv3x3_relu_pool(x, w_mat, b, *, H, W, Cin, Cout, pool):
    """x: (N, H, W*Cin); w_mat: (9*Cin, Cout); b: (1, Cout)."""
    N = x.shape[0]
    Ho, Wo = (H // 2, W // 2) if pool else (H, W)
    kernel = functools.partial(_conv_stage_kernel, H=H, W=W, Cin=Cin,
                               Cout=Cout, pool=pool)
    return pl.pallas_call(
        kernel,
        out_shape=jax.ShapeDtypeStruct((N, Ho, Wo * Cout), x.dtype),
        grid=(N,),
        in_specs=[
            pl.BlockSpec((1, H, W * Cin), lambda n: (n, 0, 0)),
            pl.BlockSpec((9 * Cin, Cout), lambda n: (0, 0)),
            pl.BlockSpec((1, Cout), lambda n: (0, 0)),
        ],
        out_specs=pl.BlockSpec((1, Ho, Wo * Cout), lambda n: (n, 0, 0)),
        scratch_shapes=[
            pltpu.VMEM((H + 2, W + 2, Cin), jnp.float32),
            pltpu.VMEM((H * W, 9 * Cin), jnp.float32),
        ],
        compiler_params=pltpu.CompilerParams(
            # Batch axis parallel: keeps both TensorCores busy on v7x megacore.
            dimension_semantics=("parallel",),
        ),
    )(x, w_mat, b)


def classifier_fused(x, cls_params):
    """x: (N, flat_dim) already in NHWC-flatten order (w1 rows pre-permuted)."""
    (w1, b1), (w2, b2), (w3, b3) = cls_params
    N = x.shape[0]
    num_classes = w3.shape[1]
    return pl.pallas_call(
        _classifier_kernel,
        out_shape=jax.ShapeDtypeStruct((N, num_classes), x.dtype),
    )(x, w1, b1, w2, b2, w3, b3)


# ---------------------------- Parameter creation ----------------------------

# Small VGG-style config: [(Cin, Cout), 'M', ...]; each conv is 3x3 / pad 1
# followed by ReLU, 'M' is 2x2 maxpool stride 2 (mirrors torchvision make_layers).
FEATURES_CFG = [(3, 16), "M", (16, 32), "M"]
HIDDEN = 64          # stands in for 4096 at small scale
NUM_CLASSES = 10     # stands in for 1000 at small scale


def _parse_cfg(cfg):
    """-> list of (cin, cout, pool_after) conv stages."""
    items = list(cfg)
    stages = []
    for idx, item in enumerate(items):
        if item == "M":
            continue
        cin, cout = item
        pool = idx + 1 < len(items) and items[idx + 1] == "M"
        stages.append((cin, cout, pool))
    return stages


STAGES = _parse_cfg(FEATURES_CFG)


def init_params(key, in_spatial):
    keys = iter(jax.random.split(key, len(STAGES) + 4))
    features = []
    spatial = in_spatial
    last_c = FEATURES_CFG[0][0]
    for cin, cout, pool in STAGES:
        # PyTorch Conv2d init: normal(0, sqrt(2 / (kh*kw*out_channels))), bias 0.
        std = math.sqrt(2.0 / (3 * 3 * cout))
        w = std * jax.random.normal(next(keys), (3, 3, cin, cout),
                                    dtype=jnp.float32)
        w_mat = w.reshape(9 * cin, cout)      # fold 3x3 taps into the K dim
        b = jnp.zeros((1, cout), dtype=jnp.float32)
        features.append((w_mat, b))
        if pool:
            spatial //= 2
        last_c = cout
    flat_dim = last_c * spatial * spatial

    def lin_init(k, fan_in, fan_out):
        # PyTorch Linear init: weight ~ normal(0, 0.01), bias 0.
        w = 0.01 * jax.random.normal(k, (fan_in, fan_out), dtype=jnp.float32)
        b = jnp.zeros((1, fan_out), dtype=jnp.float32)
        return w, b

    w1, b1 = lin_init(next(keys), flat_dim, HIDDEN)
    # PyTorch flattens activations in (C, H, W) order; the kernels flatten in
    # (H, W, C) order.  Fold that permutation into w1's rows once at init so no
    # runtime transpose is needed before the classifier.
    perm = jnp.transpose(
        jnp.arange(flat_dim).reshape(last_c, spatial, spatial), (1, 2, 0)
    ).reshape(-1)
    w1 = w1[perm]

    classifier_params = [
        (w1, b1),
        lin_init(next(keys), HIDDEN, HIDDEN),
        lin_init(next(keys), HIDDEN, NUM_CLASSES),
    ]
    return {"features": features, "classifier": classifier_params}


# ------------------------------ Forward pass --------------------------------


def vgg_forward(params, x_nchw):
    N, C, H, W = x_nchw.shape
    # Single entry layout op: NCHW -> lane-dense (N, H, W*C).  All subsequent
    # layers exchange activations in this layout, so there are no per-layer
    # pad / transpose XLA ops on the memory-bound path.
    x = jnp.transpose(x_nchw, (0, 2, 3, 1)).reshape(N, H, W * C)
    spatial = H
    for (cin, cout, pool), (w_mat, b) in zip(STAGES, params["features"]):
        x = conv3x3_relu_pool(x, w_mat, b, H=spatial, W=spatial,
                              Cin=cin, Cout=cout, pool=pool)
        if pool:
            spatial //= 2
    # Flatten is a free contiguous reshape; the (C,H,W)-vs-(H,W,C) ordering
    # difference was folded into w1's rows at init.
    x = x.reshape(N, -1)
    return classifier_fused(x, params["classifier"])


# ---------------------------------- Main -------------------------------------

if __name__ == "__main__":
    key = jax.random.PRNGKey(0)
    k_x, k_p = jax.random.split(key)

    # Small input consistent with the module: batch=2, 3 channels, 16x16 image.
    x = jax.random.normal(k_x, (2, 3, 16, 16), dtype=jnp.float32)
    params = init_params(k_p, in_spatial=16)

    out = vgg_forward(params, x)
    out = jax.block_until_ready(out)
    assert out.shape == (2, NUM_CLASSES), out.shape
    assert bool(jnp.all(jnp.isfinite(out)))
    print("KERNEL_OK")
</pallas_src>

<mosaic_0001>
module attributes {stable_mosaic.version = 11 : i64} {
  func.func @_conv_stage_kernel(%arg0: i32, %arg1: memref<1x16x48xf32, #tpu.memory_space<vmem>>, %arg2: memref<27x16xf32, #tpu.memory_space<vmem>>, %arg3: memref<1x16xf32, #tpu.memory_space<vmem>>, %arg4: memref<1x8x128xf32, #tpu.memory_space<vmem>>, %arg5: memref<18x18x3xf32, #tpu.memory_space<vmem>>, %arg6: memref<256x27xf32, #tpu.memory_space<vmem>>) attributes {dimension_semantics = [#tpu.dimension_semantics<parallel>], iteration_bounds = array<i64: 2>, scalar_prefetch = 0 : i64, scratch_operands = 2 : i64, tpu.core_type = #tpu.core_type<tc>, window_params = [{transform_indices = @transform_0, window_bounds = array<i64: 1, 16, 48>}, {pipeline_mode = #tpu.pipeline_mode<synchronous>, transform_indices = @transform_1, window_bounds = array<i64: 27, 16>}, {pipeline_mode = #tpu.pipeline_mode<synchronous>, transform_indices = @transform_2, window_bounds = array<i64: 1, 16>}, {transform_indices = @transform_3, window_bounds = array<i64: 1, 8, 128>}]} {
    %c0 = arith.constant 0 : index
    %c0_0 = arith.constant 0 : index
    %c0_1 = arith.constant 0 : index
    %0 = vector.load %arg1[%c0, %c0_0, %c0_1] : memref<1x16x48xf32, #tpu.memory_space<vmem>>, vector<1x16x48xf32>
    %1 = vector.shape_cast %0 : vector<1x16x48xf32> to vector<16x48xf32>
    %2 = vector.shape_cast %1 : vector<16x48xf32> to vector<16x16x3xf32>
    %cst = arith.constant 0.000000e+00 : f32
    %3 = vector.broadcast %cst : f32 to vector<18x18x3xf32>
    %c0_2 = arith.constant 0 : index
    %c0_3 = arith.constant 0 : index
    %c0_4 = arith.constant 0 : index
    %4 = vector.load %arg5[%c0_2, %c0_3, %c0_4] : memref<18x18x3xf32, #tpu.memory_space<vmem>>, vector<18x18x3xf32>
    tpu.vector_store %arg5[%c0_2, %c0_3, %c0_4], %3 {strides = array<i32>} : memref<18x18x3xf32, #tpu.memory_space<vmem>>, vector<18x18x3xf32>,
    %c1 = arith.constant 1 : index
    %c1_5 = arith.constant 1 : index
    %c0_6 = arith.constant 0 : index
    %5 = vector.load %arg5[%c1, %c1_5, %c0_6] : memref<18x18x3xf32, #tpu.memory_space<vmem>>, vector<16x16x3xf32>
    tpu.vector_store %arg5[%c1, %c1_5, %c0_6], %2 {strides = array<i32>} : memref<18x18x3xf32, #tpu.memory_space<vmem>>, vector<16x16x3xf32>,
    %c0_7 = arith.constant 0 : index
    %c0_8 = arith.constant 0 : index
    %c0_9 = arith.constant 0 : index
    %6 = vector.load %arg5[%c0_7, %c0_8, %c0_9] : memref<18x18x3xf32, #tpu.memory_space<vmem>>, vector<18x18x3xf32>
    %7 = vector.extract_strided_slice %6 {offsets = [0, 0, 0], sizes = [16, 16, 3], strides = [1, 1, 1]} : vector<18x18x3xf32> to vector<16x16x3xf32>
    %8 = vector.shape_cast %7 : vector<16x16x3xf32> to vector<256x3xf32>
    %c0_10 = arith.constant 0 : index
    %c0_11 = arith.constant 0 : index
    %9 = vector.load %arg6[%c0_10, %c0_11] : memref<256x27xf32, #tpu.memory_space<vmem>>, vector<256x3xf32>
    tpu.vector_store %arg6[%c0_10, %c0_11], %8 {strides = array<i32>} : memref<256x27xf32, #tpu.memory_space<vmem>>, vector<256x3xf32>,
    %10 = vector.extract_strided_slice %6 {offsets = [0, 1, 0], sizes = [16, 16, 3], strides = [1, 1, 1]} : vector<18x18x3xf32> to vector<16x16x3xf32>
    %11 = vector.shape_cast %10 : vector<16x16x3xf32> to vector<256x3xf32>
    %c0_12 = arith.constant 0 : index
    %c3 = arith.constant 3 : index
    %12 = vector.load %arg6[%c0_12, %c3] : memref<256x27xf32, #tpu.memory_space<vmem>>, vector<256x3xf32>
    tpu.vector_store %arg6[%c0_12, %c3], %11 {strides = array<i32>} : memref<256x27xf32, #tpu.memory_space<vmem>>, vector<256x3xf32>,
    %13 = vector.extract_strided_slice %6 {offsets = [0, 2, 0], sizes = [16, 16, 3], strides = [1, 1, 1]} : vector<18x18x3xf32> to vector<16x16x3xf32>
    %14 = vector.shape_cast %13 : vector<16x16x3xf32> to vector<256x3xf32>
    %c0_13 = arith.constant 0 : index
    %c6 = arith.constant 6 : index
    %15 = vector.load %arg6[%c0_13, %c6] : memref<256x27xf32, #tpu.memory_space<vmem>>, vector<256x3xf32>
    tpu.vector_store %arg6[%c0_13, %c6], %14 {strides = array<i32>} : memref<256x27xf32, #tpu.memory_space<vmem>>, vector<256x3xf32>,
    %16 = vector.extract_strided_slice %6 {offsets = [1, 0, 0], sizes = [16, 16, 3], strides = [1, 1, 1]} : vector<18x18x3xf32> to vector<16x16x3xf32>
    %17 = vector.shape_cast %16 : vector<16x16x3xf32> to vector<256x3xf32>
    %c0_14 = arith.constant 0 : index
    %c9 = arith.constant 9 : index
    %18 = vector.load %arg6[%c0_14, %c9] : memref<256x27xf32, #tpu.memory_space<vmem>>, vector<256x3xf32>
    tpu.vector_store %arg6[%c0_14, %c9], %17 {strides = array<i32>} : memref<256x27xf32, #tpu.memory_space<vmem>>, vector<256x3xf32>,
    %19 = vector.extract_strided_slice %6 {offsets = [1, 1, 0], sizes = [16, 16, 3], strides = [1, 1, 1]} : vector<18x18x3xf32> to vector<16x16x3xf32>
    %20 = vector.shape_cast %19 : vector<16x16x3xf32> to vector<256x3xf32>
    %c0_15 = arith.constant 0 : index
    %c12 = arith.constant 12 : index
    %21 = vector.load %arg6[%c0_15, %c12] : memref<256x27xf32, #tpu.memory_space<vmem>>, vector<256x3xf32>
    tpu.vector_store %arg6[%c0_15, %c12], %20 {strides = array<i32>} : memref<256x27xf32, #tpu.memory_space<vmem>>, vector<256x3xf32>,
    %22 = vector.extract_strided_slice %6 {offsets = [1, 2, 0], sizes = [16, 16, 3], strides = [1, 1, 1]} : vector<18x18x3xf32> to vector<16x16x3xf32>
    %23 = vector.shape_cast %22 : vector<16x16x3xf32> to vector<256x3xf32>
    %c0_16 = arith.constant 0 : index
    %c15 = arith.constant 15 : index
    %24 = vector.load %arg6[%c0_16, %c15] : memref<256x27xf32, #tpu.memory_space<vmem>>, vector<256x3xf32>
    tpu.vector_store %arg6[%c0_16, %c15], %23 {strides = array<i32>} : memref<256x27xf32, #tpu.memory_space<vmem>>, vector<256x3xf32>,
    %25 = vector.extract_strided_slice %6 {offsets = [2, 0, 0], sizes = [16, 16, 3], strides = [1, 1, 1]} : vector<18x18x3xf32> to vector<16x16x3xf32>
    %26 = vector.shape_cast %25 : vector<16x16x3xf32> to vector<256x3xf32>
    %c0_17 = arith.constant 0 : index
    %c18 = arith.constant 18 : index
    %27 = vector.load %arg6[%c0_17, %c18] : memref<256x27xf32, #tpu.memory_space<vmem>>, vector<256x3xf32>
    tpu.vector_store %arg6[%c0_17, %c18], %26 {strides = array<i32>} : memref<256x27xf32, #tpu.memory_space<vmem>>, vector<256x3xf32>,
    %28 = vector.extract_strided_slice %6 {offsets = [2, 1, 0], sizes = [16, 16, 3], strides = [1, 1, 1]} : vector<18x18x3xf32> to vector<16x16x3xf32>
    %29 = vector.shape_cast %28 : vector<16x16x3xf32> to vector<256x3xf32>
    %c0_18 = arith.constant 0 : index
    %c21 = arith.constant 21 : index
    %30 = vector.load %arg6[%c0_18, %c21] : memref<256x27xf32, #tpu.memory_space<vmem>>, vector<256x3xf32>
    tpu.vector_store %arg6[%c0_18, %c21], %29 {strides = array<i32>} : memref<256x27xf32, #tpu.memory_space<vmem>>, vector<256x3xf32>,
    %31 = vector.extract_strided_slice %6 {offsets = [2, 2, 0], sizes = [16, 16, 3], strides = [1, 1, 1]} : vector<18x18x3xf32> to vector<16x16x3xf32>
    %32 = vector.shape_cast %31 : vector<16x16x3xf32> to vector<256x3xf32>
    %c0_19 = arith.constant 0 : index
    %c24 = arith.constant 24 : index
    %33 = vector.load %arg6[%c0_19, %c24] : memref<256x27xf32, #tpu.memory_space<vmem>>, vector<256x3xf32>
    tpu.vector_store %arg6[%c0_19, %c24], %32 {strides = array<i32>} : memref<256x27xf32, #tpu.memory_space<vmem>>, vector<256x3xf32>,
    %c0_20 = arith.constant 0 : index
    %c0_21 = arith.constant 0 : index
    %34 = vector.load %arg6[%c0_20, %c0_21] : memref<256x27xf32, #tpu.memory_space<vmem>>, vector<256x27xf32>
    %c0_22 = arith.constant 0 : index
    %c0_23 = arith.constant 0 : index
    %35 = vector.load %arg2[%c0_22, %c0_23] : memref<27x16xf32, #tpu.memory_space<vmem>>, vector<27x16xf32>
    %cst_24 = arith.constant dense<0.000000e+00> : vector<256x16xf32>
    %36 = tpu.matmul %34, %35, %cst_24 {dimension_numbers = #tpu.dot_dimension_numbers<[1], [0], [0], [1], [0, 0, 1, 1], [], []>} : vector<256x27xf32>, vector<27x16xf32>, vector<256x16xf32> -> vector<256x16xf32>
    %c0_25 = arith.constant 0 : index
    %c0_26 = arith.constant 0 : index
    %37 = vector.load %arg3[%c0_25, %c0_26] : memref<1x16xf32, #tpu.memory_space<vmem>>, vector<1x16xf32>
    %38 = vector.broadcast %37 : vector<1x16xf32> to vector<256x16xf32>
    %39 = arith.addf %36, %38 : vector<256x16xf32>
    %cst_27 = arith.constant 0.000000e+00 : f32
    %40 = vector.broadcast %cst_27 : f32 to vector<256x16xf32>
    %41 = arith.maximumf %39, %40 : vector<256x16xf32>
    %42 = vector.shape_cast %41 : vector<256x16xf32> to vector<8x2x16x16xf32>
    %cst_28 = arith.constant dense<0xFF800000> : vector<8x16x16xf32>
    %43 = vector.multi_reduction <maximumf>, %42, %cst_28 [1] : vector<8x2x16x16xf32> to vector<8x16x16xf32>
    %44 = vector.shape_cast %43 : vector<8x16x16xf32> to vector<8x8x2x16xf32>
    %cst_29 = arith.constant dense<0xFF800000> : vector<8x8x16xf32>
    %45 = vector.multi_reduction <maximumf>, %44, %cst_29 [2] : vector<8x8x2x16xf32> to vector<8x8x16xf32>
    %46 = vector.shape_cast %45 : vector<8x8x16xf32> to vector<1x8x128xf32>
    %c0_30 = arith.constant 0 : index
    %c0_31 = arith.constant 0 : index
    %c0_32 = arith.constant 0 : index
    %47 = vector.load %arg4[%c0_30, %c0_31, %c0_32] : memref<1x8x128xf32, #tpu.memory_space<vmem>>, vector<1x8x128xf32>
    tpu.vector_store %arg4[%c0_30, %c0_31, %c0_32], %46 {strides = array<i32>} : memref<1x8x128xf32, #tpu.memory_space<vmem>>, vector<1x8x128xf32>,
    return
  }
  func.func @transform_0(%arg0: i32) -> (i32, i32, i32) {
    %c0_i32 = arith.constant 0 : i32
    %c0_i32_0 = arith.constant 0 : i32
    %c0_i32_1 = arith.constant 0 : i32
    return %arg0, %c0_i32, %c0_i32_0 : i32, i32, i32
  }
  func.func @transform_1(%arg0: i32) -> (i32, i32) {
    %c0_i32 = arith.constant 0 : i32
    %c0_i32_0 = arith.constant 0 : i32
    %c0_i32_1 = arith.constant 0 : i32
    return %c0_i32, %c0_i32_0 : i32, i32
  }
  func.func @transform_2(%arg0: i32) -> (i32, i32) {
    %c0_i32 = arith.constant 0 : i32
    %c0_i32_0 = arith.constant 0 : i32
    %c0_i32_1 = arith.constant 0 : i32
    return %c0_i32, %c0_i32_0 : i32, i32
  }
  func.func @transform_3(%arg0: i32) -> (i32, i32, i32) {
    %c0_i32 = arith.constant 0 : i32
    %c0_i32_0 = arith.constant 0 : i32
    %c0_i32_1 = arith.constant 0 : i32
    return %arg0, %c0_i32, %c0_i32_0 : i32, i32, i32
  }
}

</mosaic_0001>

<llo_original>
// kernel: tpu_custom_call.1
$region0: #{tpu_custom_call.1}
  #allocation0 [shape = 'u32[]', space=smem, size = 0x4, offset = 0x4, fixed_abs, tag = 'smem constant byte address 0x4 - core index']
  #allocation1 [shape = 'u32[144,128]{1,0:T(1,128)}', space=vmem, size = 0x12000, scoped, tag = 'internal scratch']
  #allocation2 [shape = 'f32[18,18,3]{2,1,0:T(8,128)}', space=vmem, size = 0x36000, scoped, tag = 'scratch operand']
  #allocation3 [shape = 'f32[256,27]{1,0:T(8,128)}', space=vmem, size = 0x20000, scoped, tag = 'scratch operand']
  %s0 = inlined_call_operand.vmem [shape: f32[2,16,48], index: 0, kind: input, shape index: {}]
  %s1 = inlined_call_operand.vmem [shape: f32[27,16], index: 1, kind: input, shape index: {}]
  %s2 = inlined_call_operand.vmem [shape: f32[1,16], index: 2, kind: input, shape index: {}]
  %s3 = inlined_call_operand.hbm [shape: f32[2,8,128], index: 3, kind: output, shape index: {}]
  %s4 = sld [smem:[#allocation0]]
  $region45: #{tpu_custom_call.1} parent=0
    _
  %s6 = ssub.s32 1, %s4
  %s7 = scalar_select 0, %s6, %s4
  $region1: #{tpu_custom_call.1} parent=0
    #allocation4 [shape = 'u8[8192]{0}', space=vmem, size = 0x2000, scoped, tag = 'output window, operand 0']
    #allocation5 [shape = 's32[2]{0}', space=sflag, size = 0x8, scoped, tag = 'scoped memory for tpu_custom_call.1']
    %8 = vsyncpa [#allocation5], 0
    %s9 = scalar_lea.sflag [#allocation5], 1
    %10 = vsyncpa %s9, 0
    loop: start=0, step=1, limit=4
    $region2: #{tpu_custom_call.1} parent=1 // loop_pre_header
      _
    $region3: #{tpu_custom_call.1} parent=1 // loop_header
      %s12 = sphi 0, %s16
      %p13 = scmp.ge.s32.totalorder %s12, 4
      %s22 = sphi 0, %s24
      %s25 = sphi 0, %s22
      %s26 = sphi 0, %s25
      %s42 = sphi 0, %s26
      %s46 = sphi 0, %s46
      %s48 = sphi 0, %s46
      %s49 = sphi 0, %s48
      %s63 = sphi 0, %s49
      %s67 = sphi 0, %s67
      %s69 = sphi 0, %s67
      %s70 = sphi 0, %s69
      %s84 = sphi 0, %s70
      %s90 = sphi 0, %s92
      %s93 = sphi 0, %s90
      %s94 = sphi 0, %s93
      %s110 = sphi 0, %s94
    $region4: #{tpu_custom_call.1} parent=1 // loop_header_branch
      %15 = sbr.rel (%p13) target = $region8
    $region5: #{tpu_custom_call.1} parent=1 // loop_body
      %s17 = ssub.s32 %s12, 1
      %s18 = ssub.s32 %s12, 2
      %s19 = sadd.s32 %s12, 1
      %s20 = ssub.s32 %s12, %s19
      %p21 = scmp.eq.s32.totalorder %s20, 0
      %s23 = sadd.s32 %s22, 1
      %s24 = scalar_select %p21, %s22, %s23
      %p27 = pneg %p21
      %p28 = scmp.eq.s32.totalorder %s12, 1
      %p29 = por %p27, %p28
      %p30 = scmp.ne.s32.totalorder %s22, %s25
      %p31 = scmp.eq.s32.totalorder %s12, 0
      %p32 = por %p30, %p31
      %p33 = scmp.ne.s32.totalorder %s22, %s25
      %p34 = scmp.eq.s32.totalorder %s17, 1
      %p35 = por %p33, %p34
      %p36 = scmp.ne.s32.totalorder %s25, %s26
      %p37 = scmp.eq.s32.totalorder %s17, 0
      %p38 = por %p36, %p37
      %p39 = scmp.ne.s32.totalorder %s25, %s26
      %p40 = scmp.eq.s32.totalorder %s18, 1
      %p41 = por %p39, %p40
      %p43 = scmp.ne.s32.totalorder %s26, %s42
      %p44 = scmp.eq.s32.totalorder %s18, 0
      %p45 = por %p43, %p44
      %s47 = sadd.s32 %s46, 1
      %p50 = scmp.eq.s32.totalorder %s12, 1
      %p51 = scmp.ne.s32.totalorder %s46, %s48
      %p52 = scmp.eq.s32.totalorder %s12, 0
      %p53 = por %p51, %p52
      %p54 = scmp.ne.s32.totalorder %s46, %s48
      %p55 = scmp.eq.s32.totalorder %s17, 1
      %p56 = por %p54, %p55
      %p57 = scmp.ne.s32.totalorder %s48, %s49
      %p58 = scmp.eq.s32.totalorder %s17, 0
      %p59 = por %p57, %p58
      %p60 = scmp.ne.s32.totalorder %s48, %s49
      %p61 = scmp.eq.s32.totalorder %s18, 1
      %p62 = por %p60, %p61
      %p64 = scmp.ne.s32.totalorder %s49, %s63
      %p65 = scmp.eq.s32.totalorder %s18, 0
      %p66 = por %p64, %p65
      %s68 = sadd.s32 %s67, 1
      %p71 = scmp.eq.s32.totalorder %s12, 1
      %p72 = scmp.ne.s32.totalorder %s67, %s69
      %p73 = scmp.eq.s32.totalorder %s12, 0
      %p74 = por %p72, %p73
      %p75 = scmp.ne.s32.totalorder %s67, %s69
      %p76 = scmp.eq.s32.totalorder %s17, 1
      %p77 = por %p75, %p76
      %p78 = scmp.ne.s32.totalorder %s69, %s70
      %p79 = scmp.eq.s32.totalorder %s17, 0
      %p80 = por %p78, %p79
      %p81 = scmp.ne.s32.totalorder %s69, %s70
      %p82 = scmp.eq.s32.totalorder %s18, 1
      %p83 = por %p81, %p82
      %p85 = scmp.ne.s32.totalorder %s70, %s84
      %p86 = scmp.eq.s32.totalorder %s18, 0
      %p87 = por %p85, %p86
      %s88 = ssub.s32 %s12, %s19
      %p89 = scmp.eq.s32.totalorder %s88, 0
      %s91 = sadd.s32 %s90, 1
      %s92 = scalar_select %p89, %s90, %s91
      %p95 = pneg %p89
      %p96 = scmp.eq.s32.totalorder %s12, 1
      %p97 = por %p95, %p96
      %p98 = scmp.ne.s32.totalorder %s90, %s93
      %p99 = scmp.eq.s32.totalorder %s12, 0
      %p100 = por %p98, %p99
      %p101 = scmp.ne.s32.totalorder %s90, %s93
      %p102 = scmp.eq.s32.totalorder %s17, 1
      %p103 = por %p101, %p102
      %p104 = scmp.ne.s32.totalorder %s93, %s94
      %p105 = scmp.eq.s32.totalorder %s17, 0
      %p106 = por %p104, %p105
      %p107 = scmp.ne.s32.totalorder %s93, %s94
      %p108 = scmp.eq.s32.totalorder %s18, 1
      %p109 = por %p107, %p108
      %p111 = scmp.ne.s32.totalorder %s94, %s110
      %p112 = scmp.eq.s32.totalorder %s18, 0
      %p113 = por %p111, %p112
      %p114 = scmp.le.s32.totalorder 1, %s12
      %p115 = scmp.lt.s32.totalorder %s12, 3
      %p116 = pnand %p114, %p115
      %p117 = pneg %p116
      // Predicated region
      $region9: #{tpu_custom_call.1} parent=5 // pred_check
        _
      $region10: #{tpu_custom_call.1} parent=5 // pred_check_branch
        %119 = sbr.rel (%p116) target = $region12
      $region11: #{tpu_custom_call.1} parent=5 // pred_region
        %s120 = ssub.s32 %s12, 1
        // Predicated region
        $region13: #{tpu_custom_call.1} parent=11 // pred_check
          %p121 = pneg %p59
        $region14: #{tpu_custom_call.1} parent=11 // pred_check_branch
          %123 = sbr.rel (%p121) target = $region16
        $region15: #{tpu_custom_call.1} parent=11 // pred_region
          _
        $region16: #{tpu_custom_call.1} parent=11 // pred_fallthru
          _
        // Predicated region
        $region17: #{tpu_custom_call.1} parent=11 // pred_check
          %p124 = pneg %p80
        $region18: #{tpu_custom_call.1} parent=11 // pred_check_branch
          %126 = sbr.rel (%p124) target = $region20
        $region19: #{tpu_custom_call.1} parent=11 // pred_region
          _
        $region20: #{tpu_custom_call.1} parent=11 // pred_fallthru
          _
      $region12: #{tpu_custom_call.1} parent=5 // pred_fallthru
        _
      %p127 = scmp.lt.s32.totalorder %s12, 2
      // Predicated region
      $region21: #{tpu_custom_call.1} parent=5 // pred_check
        %p128 = pneg %p127
      $region22: #{tpu_custom_call.1} parent=5 // pred_check_branch
        %130 = sbr.rel (%p128) target = $region24
      $region23: #{tpu_custom_call.1} parent=5 // pred_region
        // Predicated region
        $region25: #{tpu_custom_call.1} parent=23 // pred_check
          %p131 = pneg %p32
        $region26: #{tpu_custom_call.1} parent=23 // pred_check_branch
          %133 = sbr.rel (%p131) target = $region28
        $region27: #{tpu_custom_call.1} parent=23 // pred_region
          %p134 = scmp.lt.s32.totalorder %s12, 1
          %s135 = scalar_select %p134, %s12, 1
          %s136 = smul.addr %s135, 2
          %s137 = smul.addr %s136, 8
          %s138 = scalar_lea.vmem %s0, %s137
        $region28: #{tpu_custom_call.1} parent=23 // pred_fallthru
          _
      $region24: #{tpu_custom_call.1} parent=5 // pred_fallthru
        _
      %p139 = scmp.le.s32.totalorder 1, %s12
      %p140 = scmp.lt.s32.totalorder %s12, 3
      %p141 = pnand %p139, %p140
      %p142 = pneg %p141
      // Predicated region
      $region29: #{tpu_custom_call.1} parent=5 // pred_check
        _
      $region30: #{tpu_custom_call.1} parent=5 // pred_check_branch
        %144 = sbr.rel (%p141) target = $region32
      $region31: #{tpu_custom_call.1} parent=5 // pred_region
        %s145 = ssub.s32 %s12, 1
        %p146 = scmp.lt.s32.totalorder %s17, 1
        %s147 = scalar_select %p146, %s17, 1
        %s148 = smul.addr %s147, 2
        %s149 = smul.addr %s148, 8
        %s150 = scalar_lea.vmem %s0, %s149
        %p151 = pneg %p38
        %p152 = pneg %p35
        %p153 = pneg %p59
        %p154 = pneg %p56
        %p155 = pneg %p80
        %p156 = pneg %p77
        %p157 = pneg %p106
        %p158 = pneg %p103
        %s159 = sand.u32 %s93, 1
        %s160 = scalar_lea.sflag [#allocation5], %s159
        %s161 = sand.u32 %s93, 1
        %s162 = smul.addr %s161, 8
        %s163 = scalar_lea.vmem [#allocation4], %s162
        %p164 = scmp.lt.s32.totalorder %s17, 1
        %s165 = scalar_select %p164, %s17, 1
        %s166 = smul.addr %s165, 2
        %s167 = smul.addr %s166, 8
        %s168 = scalar_lea.vmem %s0, %s167
        %v169 = vld [vmem:[%s168] sm:$0xff]
        %v170 = vld [vmem:[%s168 + $0x8] sm:$0xff]
        %173 = vrot.lane.b32.xlu0 %v169, 125
        %v174 = vpop.permute.xlu0 %173
        %175 = vrot.lane.b32.xlu0 %v170, 125
        %v176 = vpop.permute.xlu0 %175
        %179 = vrot.lane.b32.xlu0 %v169, 122
        %v180 = vpop.permute.xlu0 %179
        %181 = vrot.lane.b32.xlu0 %v170, 122
        %v182 = vpop.permute.xlu0 %181
        %185 = vrot.lane.b32.xlu0 %v169, 119
        %v186 = vpop.permute.xlu0 %185
        %187 = vrot.lane.b32.xlu0 %v170, 119
        %v188 = vpop.permute.xlu0 %187
        %191 = vrot.lane.b32.xlu0 %v169, 116
        %v192 = vpop.permute.xlu0 %191
        %193 = vrot.lane.b32.xlu0 %v170, 116
        %v194 = vpop.permute.xlu0 %193
        %197 = vrot.lane.b32.xlu0 %v169, 113
        %v198 = vpop.permute.xlu0 %197
        %199 = vrot.lane.b32.xlu0 %v170, 113
        %v200 = vpop.permute.xlu0 %199
        %203 = vrot.lane.b32.xlu0 %v169, 110
        %v204 = vpop.permute.xlu0 %203
        %205 = vrot.lane.b32.xlu0 %v170, 110
        %v206 = vpop.permute.xlu0 %205
        %209 = vrot.lane.b32.xlu0 %v169, 107
        %v210 = vpop.permute.xlu0 %209
        %211 = vrot.lane.b32.xlu0 %v170, 107
        %v212 = vpop.permute.xlu0 %211
        %215 = vrot.lane.b32.xlu0 %v169, 104
        %v216 = vpop.permute.xlu0 %215
        %217 = vrot.lane.b32.xlu0 %v170, 104
        %v218 = vpop.permute.xlu0 %217
        %221 = vrot.lane.b32.xlu0 %v169, 101
        %v222 = vpop.permute.xlu0 %221
        %223 = vrot.lane.b32.xlu0 %v170, 101
        %v224 = vpop.permute.xlu0 %223
        %227 = vrot.lane.b32.xlu0 %v169, 98
        %v228 = vpop.permute.xlu0 %227
        %229 = vrot.lane.b32.xlu0 %v170, 98
        %v230 = vpop.permute.xlu0 %229
        %233 = vrot.lane.b32.xlu0 %v169, 95
        %v234 = vpop.permute.xlu0 %233
        %235 = vrot.lane.b32.xlu0 %v170, 95
        %v236 = vpop.permute.xlu0 %235
        %239 = vrot.lane.b32.xlu0 %v169, 92
        %v240 = vpop.permute.xlu0 %239
        %241 = vrot.lane.b32.xlu0 %v170, 92
        %v242 = vpop.permute.xlu0 %241
        %245 = vrot.lane.b32.xlu0 %v169, 89
        %v246 = vpop.permute.xlu0 %245
        %247 = vrot.lane.b32.xlu0 %v170, 89
        %v248 = vpop.permute.xlu0 %247
        %251 = vrot.lane.b32.xlu0 %v169, 86
        %v252 = vpop.permute.xlu0 %251
        %253 = vrot.lane.b32.xlu0 %v170, 86
        %v254 = vpop.permute.xlu0 %253
        %257 = vrot.lane.b32.xlu0 %v169, 83
        %v258 = vpop.permute.xlu0 %257
        %259 = vrot.lane.b32.xlu0 %v170, 83
        %v260 = vpop.permute.xlu0 %259
        %v263 = vcombine.low %v169, %v180
        %v264 = vcombine.high %v169, %v180
        %v266 = vunpack.c.l.s4 1983009808
        %v267 = vunpack.c.0.s8 %v266
        %v268 = vlaneseq
        %v269 = vshrl.u32 %v268, 7
        %v270 = vsub.s32 %v267, %v269
        %v271 = vrot.slane %v263, %v270
        %v273 = vunpack.c.l.s4 1983009808
        %v274 = vunpack.c.0.s8 %v273
        %v275 = vlaneseq
        %v276 = vshrl.u32 %v275, 7
        %v277 = vsub.s32 %v274, %v276
        %v278 = vrot.slane %v264, %v277
        %v279 = vcombine.low %v174, %v186
        %v280 = vcombine.high %v174, %v186
        %v282 = vunpack.c.l.s4 1983009808
        %v283 = vunpack.c.0.s8 %v282
        %v284 = vlaneseq
        %v285 = vshrl.u32 %v284, 7
        %v286 = vsub.s32 %v283, %v285
        %v287 = vrot.slane %v279, %v286
        %v289 = vunpack.c.l.s4 1983009808
        %v290 = vunpack.c.0.s8 %v289
        %v291 = vlaneseq
        %v292 = vshrl.u32 %v291, 7
        %v293 = vsub.s32 %v290, %v292
        %v294 = vrot.slane %v280, %v293
        %v295 = vcombine.low %v192, %v204
        %v296 = vcombine.high %v192, %v204
        %v298 = vunpack.c.l.s4 1983009808
        %v299 = vunpack.c.0.s8 %v298
        %v300 = vlaneseq
        %v301 = vshrl.u32 %v300, 7
        %v302 = vsub.s32 %v299, %v301
        %v303 = vrot.slane %v295, %v302
        %v305 = vunpack.c.l.s4 1983009808
        %v306 = vunpack.c.0.s8 %v305
        %v307 = vlaneseq
        %v308 = vshrl.u32 %v307, 7
        %v309 = vsub.s32 %v306, %v308
        %v310 = vrot.slane %v296, %v309
        %v311 = vcombine.low %v198, %v210
        %v312 = vcombine.high %v198, %v210
        %v314 = vunpack.c.l.s4 1983009808
        %v315 = vunpack.c.0.s8 %v314
        %v316 = vlaneseq
        %v317 = vshrl.u32 %v316, 7
        %v318 = vsub.s32 %v315, %v317
        %v319 = vrot.slane %v311, %v318
        %v321 = vunpack.c.l.s4 1983009808
        %v322 = vunpack.c.0.s8 %v321
        %v323 = vlaneseq
        %v324 = vshrl.u32 %v323, 7
        %v325 = vsub.s32 %v322, %v324
        %v326 = vrot.slane %v312, %v325
        %v327 = vcombine.low %v271, %v287
        %v328 = vcombine.high %v271, %v287
        %v330 = vunpack.c.l.s4 1934713408
        %v331 = vunpack.c.0.s8 %v330
        %v332 = vlaneseq
        %v333 = vshrl.u32 %v332, 7
        %v334 = vsub.s32 %v331, %v333
        %v335 = vrot.slane %v327, %v334
        %v337 = vunpack.c.l.s4 1934713408
        %v338 = vunpack.c.0.s8 %v337
        %v339 = vlaneseq
        %v340 = vshrl.u32 %v339, 7
        %v341 = vsub.s32 %v338, %v340
        %v342 = vrot.slane %v328, %v341
        %v343 = vcombine.low %v278, %v294
        %v344 = vcombine.high %v278, %v294
        %v346 = vunpack.c.l.s4 1934713408
        %v347 = vunpack.c.0.s8 %v346
        %v348 = vlaneseq
        %v349 = vshrl.u32 %v348, 7
        %v350 = vsub.s32 %v347, %v349
        %v351 = vrot.slane %v343, %v350
        %v353 = vunpack.c.l.s4 1934713408
        %v354 = vunpack.c.0.s8 %v353
        %v355 = vlaneseq
        %v356 = vshrl.u32 %v355, 7
        %v357 = vsub.s32 %v354, %v356
        %v358 = vrot.slane %v344, %v357
        %v359 = vcombine.low %v303, %v319
        %v360 = vcombine.high %v303, %v319
        %v362 = vunpack.c.l.s4 1934713408
        %v363 = vunpack.c.0.s8 %v362
        %v364 = vlaneseq
        %v365 = vshrl.u32 %v364, 7
        %v366 = vsub.s32 %v363, %v365
        %v367 = vrot.slane %v359, %v366
        %v369 = vunpack.c.l.s4 1934713408
        %v370 = vunpack.c.0.s8 %v369
        %v371 = vlaneseq
        %v372 = vshrl.u32 %v371, 7
        %v373 = vsub.s32 %v370, %v372
        %v374 = vrot.slane %v360, %v373
        %v375 = vcombine.low %v310, %v326
        %v376 = vcombine.high %v310, %v326
        %v378 = vunpack.c.l.s4 1934713408
        %v379 = vunpack.c.0.s8 %v378
        %v380 = vlaneseq
        %v381 = vshrl.u32 %v380, 7
        %v382 = vsub.s32 %v379, %v381
        %v383 = vrot.slane %v375, %v382
        %v385 = vunpack.c.l.s4 1934713408
        %v386 = vunpack.c.0.s8 %v385
        %v387 = vlaneseq
        %v388 = vshrl.u32 %v387, 7
        %v389 = vsub.s32 %v386, %v388
        %v390 = vrot.slane %v376, %v389
        %v391 = vcombine.low %v335, %v367
        %v392 = vcombine.high %v335, %v367
        %v393 = vcombine.low %v342, %v374
        %v394 = vcombine.high %v342, %v374
        %v395 = vcombine.low %v351, %v383
        %v396 = vcombine.high %v351, %v383
        %v397 = vcombine.low %v358, %v390
        %v398 = vcombine.high %v358, %v390
        %v399 = vcombine.low %v216, %v228
        %v400 = vcombine.high %v216, %v228
        %v402 = vunpack.c.l.s4 1983009808
        %v403 = vunpack.c.0.s8 %v402
        %v404 = vlaneseq
        %v405 = vshrl.u32 %v404, 7
        %v406 = vsub.s32 %v403, %v405
        %v407 = vrot.slane %v399, %v406
        %v409 = vunpack.c.l.s4 1983009808
        %v410 = vunpack.c.0.s8 %v409
        %v411 = vlaneseq
        %v412 = vshrl.u32 %v411, 7
        %v413 = vsub.s32 %v410, %v412
        %v414 = vrot.slane %v400, %v413
        %v415 = vcombine.low %v222, %v234
        %v416 = vcombine.high %v222, %v234
        %v418 = vunpack.c.l.s4 1983009808
        %v419 = vunpack.c.0.s8 %v418
        %v420 = vlaneseq
        %v421 = vshrl.u32 %v420, 7
        %v422 = vsub.s32 %v419, %v421
        %v423 = vrot.slane %v415, %v422
        %v425 = vunpack.c.l.s4 1983009808
        %v426 = vunpack.c.0.s8 %v425
        %v427 = vlaneseq
        %v428 = vshrl.u32 %v427, 7
        %v429 = vsub.s32 %v426, %v428
        %v430 = vrot.slane %v416, %v429
        %v431 = vcombine.low %v240, %v252
        %v432 = vcombine.high %v240, %v252
        %v434 = vunpack.c.l.s4 1983009808
        %v435 = vunpack.c.0.s8 %v434
        %v436 = vlaneseq
        %v437 = vshrl.u32 %v436, 7
        %v438 = vsub.s32 %v435, %v437
        %v439 = vrot.slane %v431, %v438
        %v441 = vunpack.c.l.s4 1983009808
        %v442 = vunpack.c.0.s8 %v441
        %v443 = vlaneseq
        %v444 = vshrl.u32 %v443, 7
        %v445 = vsub.s32 %v442, %v444
        %v446 = vrot.slane %v432, %v445
        %v447 = vcombine.low %v246, %v258
        %v448 = vcombine.high %v246, %v258
        %v450 = vunpack.c.l.s4 1983009808
        %v451 = vunpack.c.0.s8 %v450
        %v452 = vlaneseq
        %v453 = vshrl.u32 %v452, 7
        %v454 = vsub.s32 %v451, %v453
        %v455 = vrot.slane %v447, %v454
        %v457 = vunpack.c.l.s4 1983009808
        %v458 = vunpack.c.0.s8 %v457
        %v459 = vlaneseq
        %v460 = vshrl.u32 %v459, 7
        %v461 = vsub.s32 %v458, %v460
        %v462 = vrot.slane %v448, %v461
        %v463 = vcombine.low %v407, %v423
        %v464 = vcombine.high %v407, %v423
        %v466 = vunpack.c.l.s4 1934713408
        %v467 = vunpack.c.0.s8 %v466
        %v468 = vlaneseq
        %v469 = vshrl.u32 %v468, 7
        %v470 = vsub.s32 %v467, %v469
        %v471 = vrot.slane %v463, %v470
        %v473 = vunpack.c.l.s4 1934713408
        %v474 = vunpack.c.0.s8 %v473
        %v475 = vlaneseq
        %v476 = vshrl.u32 %v475, 7
        %v477 = vsub.s32 %v474, %v476
        %v478 = vrot.slane %v464, %v477
        %v479 = vcombine.low %v414, %v430
        %v480 = vcombine.high %v414, %v430
        %v482 = vunpack.c.l.s4 1934713408
        %v483 = vunpack.c.0.s8 %v482
        %v484 = vlaneseq
        %v485 = vshrl.u32 %v484, 7
        %v486 = vsub.s32 %v483, %v485
        %v487 = vrot.slane %v479, %v486
        %v489 = vunpack.c.l.s4 1934713408
        %v490 = vunpack.c.0.s8 %v489
        %v491 = vlaneseq
        %v492 = vshrl.u32 %v491, 7
        %v493 = vsub.s32 %v490, %v492
        %v494 = vrot.slane %v480, %v493
        %v495 = vcombine.low %v439, %v455
        %v496 = vcombine.high %v439, %v455
        %v498 = vunpack.c.l.s4 1934713408
        %v499 = vunpack.c.0.s8 %v498
        %v500 = vlaneseq
        %v501 = vshrl.u32 %v500, 7
        %v502 = vsub.s32 %v499, %v501
        %v503 = vrot.slane %v495, %v502
        %v505 = vunpack.c.l.s4 1934713408
        %v506 = vunpack.c.0.s8 %v505
        %v507 = vlaneseq
        %v508 = vshrl.u32 %v507, 7
        %v509 = vsub.s32 %v506, %v508
        %v510 = vrot.slane %v496, %v509
        %v511 = vcombine.low %v446, %v462
        %v512 = vcombine.high %v446, %v462
        %v514 = vunpack.c.l.s4 1934713408
        %v515 = vunpack.c.0.s8 %v514
        %v516 = vlaneseq
        %v517 = vshrl.u32 %v516, 7
        %v518 = vsub.s32 %v515, %v517
        %v519 = vrot.slane %v511, %v518
        %v521 = vunpack.c.l.s4 1934713408
        %v522 = vunpack.c.0.s8 %v521
        %v523 = vlaneseq
        %v524 = vshrl.u32 %v523, 7
        %v525 = vsub.s32 %v522, %v524
        %v526 = vrot.slane %v512, %v525
        %v527 = vcombine.low %v471, %v503
        %v528 = vcombine.high %v471, %v503
        %v529 = vcombine.low %v478, %v510
        %v530 = vcombine.high %v478, %v510
        %v531 = vcombine.low %v487, %v519
        %v532 = vcombine.high %v487, %v519
        %v533 = vcombine.low %v494, %v526
        %v534 = vcombine.high %v494, %v526
        %v535 = vcombine.low %v170, %v182
        %v536 = vcombine.high %v170, %v182
        %v538 = vunpack.c.l.s4 1983009808
        %v539 = vunpack.c.0.s8 %v538
        %v540 = vlaneseq
        %v541 = vshrl.u32 %v540, 7
        %v542 = vsub.s32 %v539, %v541
        %v543 = vrot.slane %v535, %v542
        %v545 = vunpack.c.l.s4 1983009808
        %v546 = vunpack.c.0.s8 %v545
        %v547 = vlaneseq
        %v548 = vshrl.u32 %v547, 7
        %v549 = vsub.s32 %v546, %v548
        %v550 = vrot.slane %v536, %v549
        %v551 = vcombine.low %v176, %v188
        %v552 = vcombine.high %v176, %v188
        %v554 = vunpack.c.l.s4 1983009808
        %v555 = vunpack.c.0.s8 %v554
        %v556 = vlaneseq
        %v557 = vshrl.u32 %v556, 7
        %v558 = vsub.s32 %v555, %v557
        %v559 = vrot.slane %v551, %v558
        %v561 = vunpack.c.l.s4 1983009808
        %v562 = vunpack.c.0.s8 %v561
        %v563 = vlaneseq
        %v564 = vshrl.u32 %v563, 7
        %v565 = vsub.s32 %v562, %v564
        %v566 = vrot.slane %v552, %v565
        %v567 = vcombine.low %v194, %v206
        %v568 = vcombine.high %v194, %v206
        %v570 = vunpack.c.l.s4 1983009808
        %v571 = vunpack.c.0.s8 %v570
        %v572 = vlaneseq
        %v573 = vshrl.u32 %v572, 7
        %v574 = vsub.s32 %v571, %v573
        %v575 = vrot.slane %v567, %v574
        %v577 = vunpack.c.l.s4 1983009808
        %v578 = vunpack.c.0.s8 %v577
        %v579 = vlaneseq
        %v580 = vshrl.u32 %v579, 7
        %v581 = vsub.s32 %v578, %v580
        %v582 = vrot.slane %v568, %v581
        %v583 = vcombine.low %v200, %v212
        %v584 = vcombine.high %v200, %v212
        %v586 = vunpack.c.l.s4 1983009808
        %v587 = vunpack.c.0.s8 %v586
        %v588 = vlaneseq
        %v589 = vshrl.u32 %v588, 7
        %v590 = vsub.s32 %v587, %v589
        %v591 = vrot.slane %v583, %v590
        %v593 = vunpack.c.l.s4 1983009808
        %v594 = vunpack.c.0.s8 %v593
        %v595 = vlaneseq
        %v596 = vshrl.u32 %v595, 7
        %v597 = vsub.s32 %v594, %v596
        %v598 = vrot.slane %v584, %v597
        %v599 = vcombine.low %v543, %v559
        %v600 = vcombine.high %v543, %v559
        %v602 = vunpack.c.l.s4 1934713408
        %v603 = vunpack.c.0.s8 %v602
        %v604 = vlaneseq
        %v605 = vshrl.u32 %v604, 7
        %v606 = vsub.s32 %v603, %v605
        %v607 = vrot.slane %v599, %v606
        %v609 = vunpack.c.l.s4 1934713408
        %v610 = vunpack.c.0.s8 %v609
        %v611 = vlaneseq
        %v612 = vshrl.u32 %v611, 7
        %v613 = vsub.s32 %v610, %v612
        %v614 = vrot.slane %v600, %v613
        %v615 = vcombine.low %v550, %v566
        %v616 = vcombine.high %v550, %v566
        %v618 = vunpack.c.l.s4 1934713408
        %v619 = vunpack.c.0.s8 %v618
        %v620 = vlaneseq
        %v621 = vshrl.u32 %v620, 7
        %v622 = vsub.s32 %v619, %v621
        %v623 = vrot.slane %v615, %v622
        %v625 = vunpack.c.l.s4 1934713408
        %v626 = vunpack.c.0.s8 %v625
        %v627 = vlaneseq
        %v628 = vshrl.u32 %v627, 7
        %v629 = vsub.s32 %v626, %v628
        %v630 = vrot.slane %v616, %v629
        %v631 = vcombine.low %v575, %v591
        %v632 = vcombine.high %v575, %v591
        %v634 = vunpack.c.l.s4 1934713408
        %v635 = vunpack.c.0.s8 %v634
        %v636 = vlaneseq
        %v637 = vshrl.u32 %v636, 7
        %v638 = vsub.s32 %v635, %v637
        %v639 = vrot.slane %v631, %v638
        %v641 = vunpack.c.l.s4 1934713408
        %v642 = vunpack.c.0.s8 %v641
        %v643 = vlaneseq
        %v644 = vshrl.u32 %v643, 7
        %v645 = vsub.s32 %v642, %v644
        %v646 = vrot.slane %v632, %v645
        %v647 = vcombine.low %v582, %v598
        %v648 = vcombine.high %v582, %v598
        %v650 = vunpack.c.l.s4 1934713408
        %v651 = vunpack.c.0.s8 %v650
        %v652 = vlaneseq
        %v653 = vshrl.u32 %v652, 7
        %v654 = vsub.s32 %v651, %v653
        %v655 = vrot.slane %v647, %v654
        %v657 = vunpack.c.l.s4 1934713408
        %v658 = vunpack.c.0.s8 %v657
        %v659 = vlaneseq
        %v660 = vshrl.u32 %v659, 7
        %v661 = vsub.s32 %v658, %v660
        %v662 = vrot.slane %v648, %v661
        %v663 = vcombine.low %v607, %v639
        %v664 = vcombine.high %v607, %v639
        %v665 = vcombine.low %v614, %v646
        %v666 = vcombine.high %v614, %v646
        %v667 = vcombine.low %v623, %v655
        %v668 = vcombine.high %v623, %v655
        %v669 = vcombine.low %v630, %v662
        %v670 = vcombine.high %v630, %v662
        %v671 = vcombine.low %v218, %v230
        %v672 = vcombine.high %v218, %v230
        %v674 = vunpack.c.l.s4 1983009808
        %v675 = vunpack.c.0.s8 %v674
        %v676 = vlaneseq
        %v677 = vshrl.u32 %v676, 7
        %v678 = vsub.s32 %v675, %v677
        %v679 = vrot.slane %v671, %v678
        %v681 = vunpack.c.l.s4 1983009808
        %v682 = vunpack.c.0.s8 %v681
        %v683 = vlaneseq
        %v684 = vshrl.u32 %v683, 7
        %v685 = vsub.s32 %v682, %v684
        %v686 = vrot.slane %v672, %v685
        %v687 = vcombine.low %v224, %v236
        %v688 = vcombine.high %v224, %v236
        %v690 = vunpack.c.l.s4 1983009808
        %v691 = vunpack.c.0.s8 %v690
        %v692 = vlaneseq
        %v693 = vshrl.u32 %v692, 7
        %v694 = vsub.s32 %v691, %v693
        %v695 = vrot.slane %v687, %v694
        %v697 = vunpack.c.l.s4 1983009808
        %v698 = vunpack.c.0.s8 %v697
        %v699 = vlaneseq
        %v700 = vshrl.u32 %v699, 7
        %v701 = vsub.s32 %v698, %v700
        %v702 = vrot.slane %v688, %v701
        %v703 = vcombine.low %v242, %v254
        %v704 = vcombine.high %v242, %v254
        %v706 = vunpack.c.l.s4 1983009808
        %v707 = vunpack.c.0.s8 %v706
        %v708 = vlaneseq
        %v709 = vshrl.u32 %v708, 7
        %v710 = vsub.s32 %v707, %v709
        %v711 = vrot.slane %v703, %v710
        %v713 = vunpack.c.l.s4 1983009808
        %v714 = vunpack.c.0.s8 %v713
        %v715 = vlaneseq
        %v716 = vshrl.u32 %v715, 7
        %v717 = vsub.s32 %v714, %v716
        %v718 = vrot.slane %v704, %v717
        %v719 = vcombine.low %v248, %v260
        %v720 = vcombine.high %v248, %v260
        %v722 = vunpack.c.l.s4 1983009808
        %v723 = vunpack.c.0.s8 %v722
        %v724 = vlaneseq
        %v725 = vshrl.u32 %v724, 7
        %v726 = vsub.s32 %v723, %v725
        %v727 = vrot.slane %v719, %v726
        %v729 = vunpack.c.l.s4 1983009808
        %v730 = vunpack.c.0.s8 %v729
        %v731 = vlaneseq
        %v732 = vshrl.u32 %v731, 7
        %v733 = vsub.s32 %v730, %v732
        %v734 = vrot.slane %v720, %v733
        %v735 = vcombine.low %v679, %v695
        %v736 = vcombine.high %v679, %v695
        %v738 = vunpack.c.l.s4 1934713408
        %v739 = vunpack.c.0.s8 %v738
        %v740 = vlaneseq
        %v741 = vshrl.u32 %v740, 7
        %v742 = vsub.s32 %v739, %v741
        %v743 = vrot.slane %v735, %v742
        %v745 = vunpack.c.l.s4 1934713408
        %v746 = vunpack.c.0.s8 %v745
        %v747 = vlaneseq
        %v748 = vshrl.u32 %v747, 7
        %v749 = vsub.s32 %v746, %v748
        %v750 = vrot.slane %v736, %v749
        %v751 = vcombine.low %v686, %v702
        %v752 = vcombine.high %v686, %v702
        %v754 = vunpack.c.l.s4 1934713408
        %v755 = vunpack.c.0.s8 %v754
        %v756 = vlaneseq
        %v757 = vshrl.u32 %v756, 7
        %v758 = vsub.s32 %v755, %v757
        %v759 = vrot.slane %v751, %v758
        %v761 = vunpack.c.l.s4 1934713408
        %v762 = vunpack.c.0.s8 %v761
        %v763 = vlaneseq
        %v764 = vshrl.u32 %v763, 7
        %v765 = vsub.s32 %v762, %v764
        %v766 = vrot.slane %v752, %v765
        %v767 = vcombine.low %v711, %v727
        %v768 = vcombine.high %v711, %v727
        %v770 = vunpack.c.l.s4 1934713408
        %v771 = vunpack.c.0.s8 %v770
        %v772 = vlaneseq
        %v773 = vshrl.u32 %v772, 7
        %v774 = vsub.s32 %v771, %v773
        %v775 = vrot.slane %v767, %v774
        %v777 = vunpack.c.l.s4 1934713408
        %v778 = vunpack.c.0.s8 %v777
        %v779 = vlaneseq
        %v780 = vshrl.u32 %v779, 7
        %v781 = vsub.s32 %v778, %v780
        %v782 = vrot.slane %v768, %v781
        %v783 = vcombine.low %v718, %v734
        %v784 = vcombine.high %v718, %v734
        %v786 = vunpack.c.l.s4 1934713408
        %v787 = vunpack.c.0.s8 %v786
        %v788 = vlaneseq
        %v789 = vshrl.u32 %v788, 7
        %v790 = vsub.s32 %v787, %v789
        %v791 = vrot.slane %v783, %v790
        %v793 = vunpack.c.l.s4 1934713408
        %v794 = vunpack.c.0.s8 %v793
        %v795 = vlaneseq
        %v796 = vshrl.u32 %v795, 7
        %v797 = vsub.s32 %v794, %v796
        %v798 = vrot.slane %v784, %v797
        %v799 = vcombine.low %v743, %v775
        %v800 = vcombine.high %v743, %v775
        %v801 = vcombine.low %v750, %v782
        %v802 = vcombine.high %v750, %v782
        %v803 = vcombine.low %v759, %v791
        %v804 = vcombine.high %v759, %v791
        %v805 = vcombine.low %v766, %v798
        %v806 = vcombine.high %v766, %v798
        %vm807 = vcmask 23552
        %808 = vst.msk [vmem:[#allocation2] sm:$0xff] %vm807, 0.0
        %809 = vst.msk [vmem:[#allocation2 + $0x8] sm:$0xff] %vm807, 0.0
        %vm810 = vcmask 17408
        %811 = vst.msk [vmem:[#allocation2 + $0x10] sm:$0x3] %vm810, 0.0
        %812 = vst.msk [vmem:[#allocation2 + $0x18] sm:$0xff] %vm807, 0.0
        %813 = vst.msk [vmem:[#allocation2 + $0x20] sm:$0xff] %vm807, 0.0
        %814 = vst.msk [vmem:[#allocation2 + $0x28] sm:$0x3] %vm810, 0.0
        %815 = vst.msk [vmem:[#allocation2 + $0x30] sm:$0xff] %vm807, 0.0
        %816 = vst.msk [vmem:[#allocation2 + $0x38] sm:$0xff] %vm807, 0.0
        %817 = vst.msk [vmem:[#allocation2 + $0x40] sm:$0x3] %vm810, 0.0
        %818 = vst.msk [vmem:[#allocation2 + $0x48] sm:$0xff] %vm807, 0.0
        %819 = vst.msk [vmem:[#allocation2 + $0x50] sm:$0xff] %vm807, 0.0
        %820 = vst.msk [vmem:[#allocation2 + $0x58] sm:$0x3] %vm810, 0.0
        %821 = vst.msk [vmem:[#allocation2 + $0x60] sm:$0xff] %vm807, 0.0
        %822 = vst.msk [vmem:[#allocation2 + $0x68] sm:$0xff] %vm807, 0.0
        %823 = vst.msk [vmem:[#allocation2 + $0x70] sm:$0x3] %vm810, 0.0
        %824 = vst.msk [vmem:[#allocation2 + $0x78] sm:$0xff] %vm807, 0.0
        %825 = vst.msk [vmem:[#allocation2 + $0x80] sm:$0xff] %vm807, 0.0
        %826 = vst.msk [vmem:[#allocation2 + $0x88] sm:$0x3] %vm810, 0.0
        %827 = vst.msk [vmem:[#allocation2 + $0x90] sm:$0xff] %vm807, 0.0
        %828 = vst.msk [vmem:[#allocation2 + $0x98] sm:$0xff] %vm807, 0.0
        %829 = vst.msk [vmem:[#allocation2 + $0xa0] sm:$0x3] %vm810, 0.0
        %830 = vst.msk [vmem:[#allocation2 + $0xa8] sm:$0xff] %vm807, 0.0
        %831 = vst.msk [vmem:[#allocation2 + $0xb0] sm:$0xff] %vm807, 0.0
        %832 = vst.msk [vmem:[#allocation2 + $0xb8] sm:$0x3] %vm810, 0.0
        %833 = vst.msk [vmem:[#allocation2 + $0xc0] sm:$0xff] %vm807, 0.0
        %834 = vst.msk [vmem:[#allocation2 + $0xc8] sm:$0xff] %vm807, 0.0
        %835 = vst.msk [vmem:[#allocation2 + $0xd0] sm:$0x3] %vm810, 0.0
        %836 = vst.msk [vmem:[#allocation2 + $0xd8] sm:$0xff] %vm807, 0.0
        %837 = vst.msk [vmem:[#allocation2 + $0xe0] sm:$0xff] %vm807, 0.0
        %838 = vst.msk [vmem:[#allocation2 + $0xe8] sm:$0x3] %vm810, 0.0
        %839 = vst.msk [vmem:[#allocation2 + $0xf0] sm:$0xff] %vm807, 0.0
        %840 = vst.msk [vmem:[#allocation2 + $0xf8] sm:$0xff] %vm807, 0.0
        %841 = vst.msk [vmem:[#allocation2 + $0x100] sm:$0x3] %vm810, 0.0
        %842 = vst.msk [vmem:[#allocation2 + $0x108] sm:$0xff] %vm807, 0.0
        %843 = vst.msk [vmem:[#allocation2 + $0x110] sm:$0xff] %vm807, 0.0
        %844 = vst.msk [vmem:[#allocation2 + $0x118] sm:$0x3] %vm810, 0.0
        %845 = vst.msk [vmem:[#allocation2 + $0x120] sm:$0xff] %vm807, 0.0
        %846 = vst.msk [vmem:[#allocation2 + $0x128] sm:$0xff] %vm807, 0.0
        %847 = vst.msk [vmem:[#allocation2 + $0x130] sm:$0x3] %vm810, 0.0
        %848 = vst.msk [vmem:[#allocation2 + $0x138] sm:$0xff] %vm807, 0.0
        %849 = vst.msk [vmem:[#allocation2 + $0x140] sm:$0xff] %vm807, 0.0
        %850 = vst.msk [vmem:[#allocation2 + $0x148] sm:$0x3] %vm810, 0.0
        %851 = vst.msk [vmem:[#allocation2 + $0x150] sm:$0xff] %vm807, 0.0
        %852 = vst.msk [vmem:[#allocation2 + $0x158] sm:$0xff] %vm807, 0.0
        %853 = vst.msk [vmem:[#allocation2 + $0x160] sm:$0x3] %vm810, 0.0
        %854 = vst.msk [vmem:[#allocation2 + $0x168] sm:$0xff] %vm807, 0.0
        %855 = vst.msk [vmem:[#allocation2 + $0x170] sm:$0xff] %vm807, 0.0
        %856 = vst.msk [vmem:[#allocation2 + $0x178] sm:$0x3] %vm810, 0.0
        %857 = vst.msk [vmem:[#allocation2 + $0x180] sm:$0xff] %vm807, 0.0
        %858 = vst.msk [vmem:[#allocation2 + $0x188] sm:$0xff] %vm807, 0.0
        %859 = vst.msk [vmem:[#allocation2 + $0x190] sm:$0x3] %vm810, 0.0
        %860 = vst.msk [vmem:[#allocation2 + $0x198] sm:$0xff] %vm807, 0.0
        %861 = vst.msk [vmem:[#allocation2 + $0x1a0] sm:$0xff] %vm807, 0.0
        %862 = vst.msk [vmem:[#allocation2 + $0x1a8] sm:$0x3] %vm810, 0.0
        %s863 = scalar_lea.vmem [#allocation2], 24
        %864 = vst.msk [vmem:[%s863 + $0x1] sm:$0xff] %vm807, %v391
        %865 = vst.msk [vmem:[%s863 + $0x9] sm:$0xff] %vm807, %v527
        %866 = vst.msk [vmem:[%s863 + $0x19] sm:$0xff] %vm807, %v392
        %867 = vst.msk [vmem:[%s863 + $0x21] sm:$0xff] %vm807, %v528
        %868 = vst.msk [vmem:[%s863 + $0x31] sm:$0xff] %vm807, %v393
        %869 = vst.msk [vmem:[%s863 + $0x39] sm:$0xff] %vm807, %v529
        %870 = vst.msk [vmem:[%s863 + $0x49] sm:$0xff] %vm807, %v394
        %871 = vst.msk [vmem:[%s863 + $0x51] sm:$0xff] %vm807, %v530
        %872 = vst.msk [vmem:[%s863 + $0x61] sm:$0xff] %vm807, %v395
        %873 = vst.msk [vmem:[%s863 + $0x69] sm:$0xff] %vm807, %v531
        %874 = vst.msk [vmem:[%s863 + $0x79] sm:$0xff] %vm807, %v396
        %875 = vst.msk [vmem:[%s863 + $0x81] sm:$0xff] %vm807, %v532
        %876 = vst.msk [vmem:[%s863 + $0x91] sm:$0xff] %vm807, %v397
        %877 = vst.msk [vmem:[%s863 + $0x99] sm:$0xff] %vm807, %v533
        %878 = vst.msk [vmem:[%s863 + $0xa9] sm:$0xff] %vm807, %v398
        %879 = vst.msk [vmem:[%s863 + $0xb1] sm:$0xff] %vm807, %v534
        %880 = vst.msk [vmem:[%s863 + $0xc1] sm:$0xff] %vm807, %v663
        %881 = vst.msk [vmem:[%s863 + $0xc9] sm:$0xff] %vm807, %v799
        %882 = vst.msk [vmem:[%s863 + $0xd9] sm:$0xff] %vm807, %v664
        %883 = vst.msk [vmem:[%s863 + $0xe1] sm:$0xff] %vm807, %v800
        %884 = vst.msk [vmem:[%s863 + $0xf1] sm:$0xff] %vm807, %v665
        %885 = vst.msk [vmem:[%s863 + $0xf9] sm:$0xff] %vm807, %v801
        %886 = vst.msk [vmem:[%s863 + $0x109] sm:$0xff] %vm807, %v666
        %887 = vst.msk [vmem:[%s863 + $0x111] sm:$0xff] %vm807, %v802
        %888 = vst.msk [vmem:[%s863 + $0x121] sm:$0xff] %vm807, %v667
        %889 = vst.msk [vmem:[%s863 + $0x129] sm:$0xff] %vm807, %v803
        %890 = vst.msk [vmem:[%s863 + $0x139] sm:$0xff] %vm807, %v668
        %891 = vst.msk [vmem:[%s863 + $0x141] sm:$0xff] %vm807, %v804
        %892 = vst.msk [vmem:[%s863 + $0x151] sm:$0xff] %vm807, %v669
        %893 = vst.msk [vmem:[%s863 + $0x159] sm:$0xff] %vm807, %v805
        %894 = vst.msk [vmem:[%s863 + $0x169] sm:$0xff] %vm807, %v670
        %895 = vst.msk [vmem:[%s863 + $0x171] sm:$0xff] %vm807, %v806
        %v896 = vld [vmem:[#allocation2] sm:$0xff]
        %v897 = vld [vmem:[#allocation2 + $0x8] sm:$0xff]
        %v898 = vld [vmem:[#allocation2 + $0x10] sm:$0x3]
        %v899 = vld [vmem:[#allocation2 + $0x18] sm:$0xff]
        %v900 = vld [vmem:[#allocation2 + $0x20] sm:$0xff]
        %v901 = vld [vmem:[#allocation2 + $0x28] sm:$0x3]
        %v902 = vld [vmem:[#allocation2 + $0x30] sm:$0xff]
        %v903 = vld [vmem:[#allocation2 + $0x38] sm:$0xff]
        %v904 = vld [vmem:[#allocation2 + $0x40] sm:$0x3]
        %v905 = vld [vmem:[#allocation2 + $0x48] sm:$0xff]
        %v906 = vld [vmem:[#allocation2 + $0x50] sm:$0xff]
        %v907 = vld [vmem:[#allocation2 + $0x58] sm:$0x3]
        %v908 = vld [vmem:[#allocation2 + $0x60] sm:$0xff]
        %v909 = vld [vmem:[#allocation2 + $0x68] sm:$0xff]
        %v910 = vld [vmem:[#allocation2 + $0x70] sm:$0x3]
        %v911 = vld [vmem:[#allocation2 + $0x78] sm:$0xff]
        %v912 = vld [vmem:[#allocation2 + $0x80] sm:$0xff]
        %v913 = vld [vmem:[#allocation2 + $0x88] sm:$0x3]
        %v914 = vld [vmem:[#allocation2 + $0x90] sm:$0xff]
        %v915 = vld [vmem:[#allocation2 + $0x98] sm:$0xff]
        %v916 = vld [vmem:[#allocation2 + $0xa0] sm:$0x3]
        %v917 = vld [vmem:[#allocation2 + $0xa8] sm:$0xff]
        %v918 = vld [vmem:[#allocation2 + $0xb0] sm:$0xff]
        %v919 = vld [vmem:[#allocation2 + $0xb8] sm:$0x3]
        %v920 = vld [vmem:[#allocation2 + $0xc0] sm:$0xff]
        %v921 = vld [vmem:[#allocation2 + $0xc8] sm:$0xff]
        %v922 = vld [vmem:[#allocation2 + $0xd0] sm:$0x3]
        %v923 = vld [vmem:[#allocation2 + $0xd8] sm:$0xff]
        %v924 = vld [vmem:[#allocation2 + $0xe0] sm:$0xff]
        %v925 = vld [vmem:[#allocation2 + $0xe8] sm:$0x3]
        %v926 = vld [vmem:[#allocation2 + $0xf0] sm:$0xff]
        %v927 = vld [vmem:[#allocation2 + $0xf8] sm:$0xff]
        %v928 = vld [vmem:[#allocation2 + $0x100] sm:$0x3]
        %v929 = vld [vmem:[#allocation2 + $0x108] sm:$0xff]
        %v930 = vld [vmem:[#allocation2 + $0x110] sm:$0xff]
        %v931 = vld [vmem:[#allocation2 + $0x118] sm:$0x3]
        %v932 = vld [vmem:[#allocation2 + $0x120] sm:$0xff]
        %v933 = vld [vmem:[#allocation2 + $0x128] sm:$0xff]
        %v934 = vld [vmem:[#allocation2 + $0x130] sm:$0x3]
        %v935 = vld [vmem:[#allocation2 + $0x138] sm:$0xff]
        %v936 = vld [vmem:[#allocation2 + $0x140] sm:$0xff]
        %v937 = vld [vmem:[#allocation2 + $0x148] sm:$0x3]
        %v938 = vld [vmem:[#allocation2 + $0x150] sm:$0xff]
        %v939 = vld [vmem:[#allocation2 + $0x158] sm:$0xff]
        %v940 = vld [vmem:[#allocation2 + $0x160] sm:$0x3]
        %v941 = vld [vmem:[#allocation2 + $0x168] sm:$0xff]
        %v942 = vld [vmem:[#allocation2 + $0x170] sm:$0xff]
        %v943 = vld [vmem:[#allocation2 + $0x178] sm:$0x3]
        %v944 = vld [vmem:[#allocation2 + $0x180] sm:$0xff]
        %v945 = vld [vmem:[#allocation2 + $0x188] sm:$0xff]
        %v946 = vld [vmem:[#allocation2 + $0x190] sm:$0x3]
        %v947 = vld [vmem:[#allocation2 + $0x198] sm:$0xff]
        %v948 = vld [vmem:[#allocation2 + $0x1a0] sm:$0xff]
        %v949 = vld [vmem:[#allocation2 + $0x1a8] sm:$0x3]
        %950 = vst.msk [vmem:[#allocation3] sm:$0xff] %vm807, %v896
        %951 = vst.msk [vmem:[#allocation3 + $0x8] sm:$0xff] %vm807, %v897
        %952 = vst.msk [vmem:[#allocation3 + $0x10] sm:$0xff] %vm807, %v899
        %953 = vst.msk [vmem:[#allocation3 + $0x18] sm:$0xff] %vm807, %v900
        %954 = vst.msk [vmem:[#allocation3 + $0x20] sm:$0xff] %vm807, %v902
        %955 = vst.msk [vmem:[#allocation3 + $0x28] sm:$0xff] %vm807, %v903
        %956 = vst.msk [vmem:[#allocation3 + $0x30] sm:$0xff] %vm807, %v905
        %957 = vst.msk [vmem:[#allocation3 + $0x38] sm:$0xff] %vm807, %v906
        %958 = vst.msk [vmem:[#allocation3 + $0x40] sm:$0xff] %vm807, %v908
        %959 = vst.msk [vmem:[#allocation3 + $0x48] sm:$0xff] %vm807, %v909
        %960 = vst.msk [vmem:[#allocation3 + $0x50] sm:$0xff] %vm807, %v911
        %961 = vst.msk [vmem:[#allocation3 + $0x58] sm:$0xff] %vm807, %v912
        %962 = vst.msk [vmem:[#allocation3 + $0x60] sm:$0xff] %vm807, %v914
        %963 = vst.msk [vmem:[#allocation3 + $0x68] sm:$0xff] %vm807, %v915
        %964 = vst.msk [vmem:[#allocation3 + $0x70] sm:$0xff] %vm807, %v917
        %965 = vst.msk [vmem:[#allocation3 + $0x78] sm:$0xff] %vm807, %v918
        %966 = vst.msk [vmem:[#allocation3 + $0x80] sm:$0xff] %vm807, %v920
        %967 = vst.msk [vmem:[#allocation3 + $0x88] sm:$0xff] %vm807, %v921
        %968 = vst.msk [vmem:[#allocation3 + $0x90] sm:$0xff] %vm807, %v923
        %969 = vst.msk [vmem:[#allocation3 + $0x98] sm:$0xff] %vm807, %v924
        %970 = vst.msk [vmem:[#allocation3 + $0xa0] sm:$0xff] %vm807, %v926
        %971 = vst.msk [vmem:[#allocation3 + $0xa8] sm:$0xff] %vm807, %v927
        %972 = vst.msk [vmem:[#allocation3 + $0xb0] sm:$0xff] %vm807, %v929
        %973 = vst.msk [vmem:[#allocation3 + $0xb8] sm:$0xff] %vm807, %v930
        %974 = vst.msk [vmem:[#allocation3 + $0xc0] sm:$0xff] %vm807, %v932
        %975 = vst.msk [vmem:[#allocation3 + $0xc8] sm:$0xff] %vm807, %v933
        %976 = vst.msk [vmem:[#allocation3 + $0xd0] sm:$0xff] %vm807, %v935
        %977 = vst.msk [vmem:[#allocation3 + $0xd8] sm:$0xff] %vm807, %v936
        %978 = vst.msk [vmem:[#allocation3 + $0xe0] sm:$0xff] %vm807, %v938
        %979 = vst.msk [vmem:[#allocation3 + $0xe8] sm:$0xff] %vm807, %v939
        %980 = vst.msk [vmem:[#allocation3 + $0xf0] sm:$0xff] %vm807, %v941
        %981 = vst.msk [vmem:[#allocation3 + $0xf8] sm:$0xff] %vm807, %v942
        %vm1030 = vcmask 1046528
        %v1031 = vrot.slane %v896, 1
        %v1032 = vrot.slane %v897, 1
        %v1033 = vsel %vm1030, %v1031, %v1032
        %v1034 = vrot.slane %v898, 1
        %v1035 = vsel %vm1030, %v1032, %v1034
        %v1036 = vrot.slane %v899, 1
        %v1037 = vrot.slane %v900, 1
        %v1038 = vsel %vm1030, %v1036, %v1037
        %v1039 = vrot.slane %v901, 1
        %v1040 = vsel %vm1030, %v1037, %v1039
        %v1041 = vrot.slane %v902, 1
        %v1042 = vrot.slane %v903, 1
        %v1043 = vsel %vm1030, %v1041, %v1042
        %v1044 = vrot.slane %v904, 1
        %v1045 = vsel %vm1030, %v1042, %v1044
        %v1046 = vrot.slane %v905, 1
        %v1047 = vrot.slane %v906, 1
        %v1048 = vsel %vm1030, %v1046, %v1047
        %v1049 = vrot.slane %v907, 1
        %v1050 = vsel %vm1030, %v1047, %v1049
        %v1051 = vrot.slane %v908, 1
        %v1052 = vrot.slane %v909, 1
        %v1053 = vsel %vm1030, %v1051, %v1052
        %v1054 = vrot.slane %v910, 1
        %v1055 = vsel %vm1030, %v1052, %v1054
        %v1056 = vrot.slane %v911, 1
        %v1057 = vrot.slane %v912, 1
        %v1058 = vsel %vm1030, %v1056, %v1057
        %v1059 = vrot.slane %v913, 1
        %v1060 = vsel %vm1030, %v1057, %v1059
        %v1061 = vrot.slane %v914, 1
        %v1062 = vrot.slane %v915, 1
        %v1063 = vsel %vm1030, %v1061, %v1062
        %v1064 = vrot.slane %v916, 1
        %v1065 = vsel %vm1030, %v1062, %v1064
        %v1066 = vrot.slane %v917, 1
        %v1067 = vrot.slane %v918, 1
        %v1068 = vsel %vm1030, %v1066, %v1067
        %v1069 = vrot.slane %v919, 1
        %v1070 = vsel %vm1030, %v1067, %v1069
        %v1071 = vrot.slane %v920, 1
        %v1072 = vrot.slane %v921, 1
        %v1073 = vsel %vm1030, %v1071, %v1072
        %v1074 = vrot.slane %v922, 1
        %v1075 = vsel %vm1030, %v1072, %v1074
        %v1076 = vrot.slane %v923, 1
        %v1077 = vrot.slane %v924, 1
        %v1078 = vsel %vm1030, %v1076, %v1077
        %v1079 = vrot.slane %v925, 1
        %v1080 = vsel %vm1030, %v1077, %v1079
        %v1081 = vrot.slane %v926, 1
        %v1082 = vrot.slane %v927, 1
        %v1083 = vsel %vm1030, %v1081, %v1082
        %v1084 = vrot.slane %v928, 1
        %v1085 = vsel %vm1030, %v1082, %v1084
        %v1086 = vrot.slane %v929, 1
        %v1087 = vrot.slane %v930, 1
        %v1088 = vsel %vm1030, %v1086, %v1087
        %v1089 = vrot.slane %v931, 1
        %v1090 = vsel %vm1030, %v1087, %v1089
        %v1091 = vrot.slane %v932, 1
        %v1092 = vrot.slane %v933, 1
        %v1093 = vsel %vm1030, %v1091, %v1092
        %v1094 = vrot.slane %v934, 1
        %v1095 = vsel %vm1030, %v1092, %v1094
        %v1096 = vrot.slane %v935, 1
        %v1097 = vrot.slane %v936, 1
        %v1098 = vsel %vm1030, %v1096, %v1097
        %v1099 = vrot.slane %v937, 1
        %v1100 = vsel %vm1030, %v1097, %v1099
        %v1101 = vrot.slane %v938, 1
        %v1102 = vrot.slane %v939, 1
        %v1103 = vsel %vm1030, %v1101, %v1102
        %v1104 = vrot.slane %v940, 1
        %v1105 = vsel %vm1030, %v1102, %v1104
        %v1106 = vrot.slane %v941, 1
        %v1107 = vrot.slane %v942, 1
        %v1108 = vsel %vm1030, %v1106, %v1107
        %v1109 = vrot.slane %v943, 1
        %v1110 = vsel %vm1030, %v1107, %v1109
        %1111 = vrot.lane.b32.xlu0 %v1033, 3
        %v1112 = vpop.permute.xlu0 %1111
        %1113 = vrot.lane.b32.xlu0 %v1035, 3
        %v1114 = vpop.permute.xlu0 %1113
        %1115 = vrot.lane.b32.xlu0 %v1038, 3
        %v1116 = vpop.permute.xlu0 %1115
        %1117 = vrot.lane.b32.xlu0 %v1040, 3
        %v1118 = vpop.permute.xlu0 %1117
        %1119 = vrot.lane.b32.xlu0 %v1043, 3
        %v1120 = vpop.permute.xlu0 %1119
        %1121 = vrot.lane.b32.xlu0 %v1045, 3
        %v1122 = vpop.permute.xlu0 %1121
        %1123 = vrot.lane.b32.xlu0 %v1048, 3
        %v1124 = vpop.permute.xlu0 %1123
        %1125 = vrot.lane.b32.xlu0 %v1050, 3
        %v1126 = vpop.permute.xlu0 %1125
        %1127 = vrot.lane.b32.xlu0 %v1053, 3
        %v1128 = vpop.permute.xlu0 %1127
        %1129 = vrot.lane.b32.xlu0 %v1055, 3
        %v1130 = vpop.permute.xlu0 %1129
        %1131 = vrot.lane.b32.xlu0 %v1058, 3
        %v1132 = vpop.permute.xlu0 %1131
        %1133 = vrot.lane.b32.xlu0 %v1060, 3
        %v1134 = vpop.permute.xlu0 %1133
        %1135 = vrot.lane.b32.xlu0 %v1063, 3
        %v1136 = vpop.permute.xlu0 %1135
        %1137 = vrot.lane.b32.xlu0 %v1065, 3
        %v1138 = vpop.permute.xlu0 %1137
        %1139 = vrot.lane.b32.xlu0 %v1068, 3
        %v1140 = vpop.permute.xlu0 %1139
        %1141 = vrot.lane.b32.xlu0 %v1070, 3
        %v1142 = vpop.permute.xlu0 %1141
        %1143 = vrot.lane.b32.xlu0 %v1073, 3
        %v1144 = vpop.permute.xlu0 %1143
        %1145 = vrot.lane.b32.xlu0 %v1075, 3
        %v1146 = vpop.permute.xlu0 %1145
        %1147 = vrot.lane.b32.xlu0 %v1078, 3
        %v1148 = vpop.permute.xlu0 %1147
        %1149 = vrot.lane.b32.xlu0 %v1080, 3
        %v1150 = vpop.permute.xlu0 %1149
        %1151 = vrot.lane.b32.xlu0 %v1083, 3
        %v1152 = vpop.permute.xlu0 %1151
        %1153 = vrot.lane.b32.xlu0 %v1085, 3
        %v1154 = vpop.permute.xlu0 %1153
        %1155 = vrot.lane.b32.xlu0 %v1088, 3
        %v1156 = vpop.permute.xlu0 %1155
        %1157 = vrot.lane.b32.xlu0 %v1090, 3
        %v1158 = vpop.permute.xlu0 %1157
        %1159 = vrot.lane.b32.xlu0 %v1093, 3
        %v1160 = vpop.permute.xlu0 %1159
        %1161 = vrot.lane.b32.xlu0 %v1095, 3
        %v1162 = vpop.permute.xlu0 %1161
        %1163 = vrot.lane.b32.xlu0 %v1098, 3
        %v1164 = vpop.permute.xlu0 %1163
        %1165 = vrot.lane.b32.xlu0 %v1100, 3
        %v1166 = vpop.permute.xlu0 %1165
        %1167 = vrot.lane.b32.xlu0 %v1103, 3
        %v1168 = vpop.permute.xlu0 %1167
        %1169 = vrot.lane.b32.xlu0 %v1105, 3
        %v1170 = vpop.permute.xlu0 %1169
        %1171 = vrot.lane.b32.xlu0 %v1108, 3
        %v1172 = vpop.permute.xlu0 %1171
        %1173 = vrot.lane.b32.xlu0 %v1110, 3
        %v1174 = vpop.permute.xlu0 %1173
        %vm1207 = vcmask 48152
        %1208 = vst.msk [vmem:[#allocation3] sm:$0xff] %vm1207, %v1112
        %1209 = vst.msk [vmem:[#allocation3 + $0x8] sm:$0xff] %vm1207, %v1114
        %1210 = vst.msk [vmem:[#allocation3 + $0x10] sm:$0xff] %vm1207, %v1116
        %1211 = vst.msk [vmem:[#allocation3 + $0x18] sm:$0xff] %vm1207, %v1118
        %1212 = vst.msk [vmem:[#allocation3 + $0x20] sm:$0xff] %vm1207, %v1120
        %1213 = vst.msk [vmem:[#allocation3 + $0x28] sm:$0xff] %vm1207, %v1122
        %1214 = vst.msk [vmem:[#allocation3 + $0x30] sm:$0xff] %vm1207, %v1124
        %1215 = vst.msk [vmem:[#allocation3 + $0x38] sm:$0xff] %vm1207, %v1126
        %1216 = vst.msk [vmem:[#allocation3 + $0x40] sm:$0xff] %vm1207, %v1128
        %1217 = vst.msk [vmem:[#allocation3 + $0x48] sm:$0xff] %vm1207, %v1130
        %1218 = vst.msk [vmem:[#allocation3 + $0x50] sm:$0xff] %vm1207, %v1132
        %1219 = vst.msk [vmem:[#allocation3 + $0x58] sm:$0xff] %vm1207, %v1134
        %1220 = vst.msk [vmem:[#allocation3 + $0x60] sm:$0xff] %vm1207, %v1136
        %1221 = vst.msk [vmem:[#allocation3 + $0x68] sm:$0xff] %vm1207, %v1138
        %1222 = vst.msk [vmem:[#allocation3 + $0x70] sm:$0xff] %vm1207, %v1140
        %1223 = vst.msk [vmem:[#allocation3 + $0x78] sm:$0xff] %vm1207, %v1142
        %1224 = vst.msk [vmem:[#allocation3 + $0x80] sm:$0xff] %vm1207, %v1144
        %1225 = vst.msk [vmem:[#allocation3 + $0x88] sm:$0xff] %vm1207, %v1146
        %1226 = vst.msk [vmem:[#allocation3 + $0x90] sm:$0xff] %vm1207, %v1148
        %1227 = vst.msk [vmem:[#allocation3 + $0x98] sm:$0xff] %vm1207, %v1150
        %1228 = vst.msk [vmem:[#allocation3 + $0xa0] sm:$0xff] %vm1207, %v1152
        %1229 = vst.msk [vmem:[#allocation3 + $0xa8] sm:$0xff] %vm1207, %v1154
        %1230 = vst.msk [vmem:[#allocation3 + $0xb0] sm:$0xff] %vm1207, %v1156
        %1231 = vst.msk [vmem:[#allocation3 + $0xb8] sm:$0xff] %vm1207, %v1158
        %1232 = vst.msk [vmem:[#allocation3 + $0xc0] sm:$0xff] %vm1207, %v1160
        %1233 = vst.msk [vmem:[#allocation3 + $0xc8] sm:$0xff] %vm1207, %v1162
        %1234 = vst.msk [vmem:[#allocation3 + $0xd0] sm:$0xff] %vm1207, %v1164
        %1235 = vst.msk [vmem:[#allocation3 + $0xd8] sm:$0xff] %vm1207, %v1166
        %1236 = vst.msk [vmem:[#allocation3 + $0xe0] sm:$0xff] %vm1207, %v1168
        %1237 = vst.msk [vmem:[#allocation3 + $0xe8] sm:$0xff] %vm1207, %v1170
        %1238 = vst.msk [vmem:[#allocation3 + $0xf0] sm:$0xff] %vm1207, %v1172
        %1239 = vst.msk [vmem:[#allocation3 + $0xf8] sm:$0xff] %vm1207, %v1174
        %vm1240 = vcmask 1045504
        %v1241 = vrot.slane %v896, 2
        %v1242 = vrot.slane %v897, 2
        %v1243 = vsel %vm1240, %v1241, %v1242
        %v1244 = vrot.slane %v898, 2
        %v1245 = vsel %vm1240, %v1242, %v1244
        %v1246 = vrot.slane %v899, 2
        %v1247 = vrot.slane %v900, 2
        %v1248 = vsel %vm1240, %v1246, %v1247
        %v1249 = vrot.slane %v901, 2
        %v1250 = vsel %vm1240, %v1247, %v1249
        %v1251 = vrot.slane %v902, 2
        %v1252 = vrot.slane %v903, 2
        %v1253 = vsel %vm1240, %v1251, %v1252
        %v1254 = vrot.slane %v904, 2
        %v1255 = vsel %vm1240, %v1252, %v1254
        %v1256 = vrot.slane %v905, 2
        %v1257 = vrot.slane %v906, 2
        %v1258 = vsel %vm1240, %v1256, %v1257
        %v1259 = vrot.slane %v907, 2
        %v1260 = vsel %vm1240, %v1257, %v1259
        %v1261 = vrot.slane %v908, 2
        %v1262 = vrot.slane %v909, 2
        %v1263 = vsel %vm1240, %v1261, %v1262
        %v1264 = vrot.slane %v910, 2
        %v1265 = vsel %vm1240, %v1262, %v1264
        %v1266 = vrot.slane %v911, 2
        %v1267 = vrot.slane %v912, 2
        %v1268 = vsel %vm1240, %v1266, %v1267
        %v1269 = vrot.slane %v913, 2
        %v1270 = vsel %vm1240, %v1267, %v1269
        %v1271 = vrot.slane %v914, 2
        %v1272 = vrot.slane %v915, 2
        %v1273 = vsel %vm1240, %v1271, %v1272
        %v1274 = vrot.slane %v916, 2
        %v1275 = vsel %vm1240, %v1272, %v1274
        %v1276 = vrot.slane %v917, 2
        %v1277 = vrot.slane %v918, 2
        %v1278 = vsel %vm1240, %v1276, %v1277
        %v1279 = vrot.slane %v919, 2
        %v1280 = vsel %vm1240, %v1277, %v1279
        %v1281 = vrot.slane %v920, 2
        %v1282 = vrot.slane %v921, 2
        %v1283 = vsel %vm1240, %v1281, %v1282
        %v1284 = vrot.slane %v922, 2
        %v1285 = vsel %vm1240, %v1282, %v1284
        %v1286 = vrot.slane %v923, 2
        %v1287 = vrot.slane %v924, 2
        %v1288 = vsel %vm1240, %v1286, %v1287
        %v1289 = vrot.slane %v925, 2
        %v1290 = vsel %vm1240, %v1287, %v1289
        %v1291 = vrot.slane %v926, 2
        %v1292 = vrot.slane %v927, 2
        %v1293 = vsel %vm1240, %v1291, %v1292
        %v1294 = vrot.slane %v928, 2
        %v1295 = vsel %vm1240, %v1292, %v1294
        %v1296 = vrot.slane %v929, 2
        %v1297 = vrot.slane %v930, 2
        %v1298 = vsel %vm1240, %v1296, %v1297
        %v1299 = vrot.slane %v931, 2
        %v1300 = vsel %vm1240, %v1297, %v1299
        %v1301 = vrot.slane %v932, 2
        %v1302 = vrot.slane %v933, 2
        %v1303 = vsel %vm1240, %v1301, %v1302
        %v1304 = vrot.slane %v934, 2
        %v1305 = vsel %vm1240, %v1302, %v1304
        %v1306 = vrot.slane %v935, 2
        %v1307 = vrot.slane %v936, 2
        %v1308 = vsel %vm1240, %v1306, %v1307
        %v1309 = vrot.slane %v937, 2
        %v1310 = vsel %vm1240, %v1307, %v1309
        %v1311 = vrot.slane %v938, 2
        %v1312 = vrot.slane %v939, 2
        %v1313 = vsel %vm1240, %v1311, %v1312
        %v1314 = vrot.slane %v940, 2
        %v1315 = vsel %vm1240, %v1312, %v1314
        %v1316 = vrot.slane %v941, 2
        %v1317 = vrot.slane %v942, 2
        %v1318 = vsel %vm1240, %v1316, %v1317
        %v1319 = vrot.slane %v943, 2
        %v1320 = vsel %vm1240, %v1317, %v1319
        %1321 = vrot.lane.b32.xlu0 %v1243, 6
        %v1322 = vpop.permute.xlu0 %1321
        %1323 = vrot.lane.b32.xlu0 %v1245, 6
        %v1324 = vpop.permute.xlu0 %1323
        %1325 = vrot.lane.b32.xlu0 %v1248, 6
        %v1326 = vpop.permute.xlu0 %1325
        %1327 = vrot.lane.b32.xlu0 %v1250, 6
        %v1328 = vpop.permute.xlu0 %1327
        %1329 = vrot.lane.b32.xlu0 %v1253, 6
        %v1330 = vpop.permute.xlu0 %1329
        %1331 = vrot.lane.b32.xlu0 %v1255, 6
        %v1332 = vpop.permute.xlu0 %1331
        %1333 = vrot.lane.b32.xlu0 %v1258, 6
        %v1334 = vpop.permute.xlu0 %1333
        %1335 = vrot.lane.b32.xlu0 %v1260, 6
        %v1336 = vpop.permute.xlu0 %1335
        %1337 = vrot.lane.b32.xlu0 %v1263, 6
        %v1338 = vpop.permute.xlu0 %1337
        %1339 = vrot.lane.b32.xlu0 %v1265, 6
        %v1340 = vpop.permute.xlu0 %1339
        %1341 = vrot.lane.b32.xlu0 %v1268, 6
        %v1342 = vpop.permute.xlu0 %1341
        %1343 = vrot.lane.b32.xlu0 %v1270, 6
        %v1344 = vpop.permute.xlu0 %1343
        %1345 = vrot.lane.b32.xlu0 %v1273, 6
        %v1346 = vpop.permute.xlu0 %1345
        %1347 = vrot.lane.b32.xlu0 %v1275, 6
        %v1348 = vpop.permute.xlu0 %1347
        %1349 = vrot.lane.b32.xlu0 %v1278, 6
        %v1350 = vpop.permute.xlu0 %1349
        %1351 = vrot.lane.b32.xlu0 %v1280, 6
        %v1352 = vpop.permute.xlu0 %1351
        %1353 = vrot.lane.b32.xlu0 %v1283, 6
        %v1354 = vpop.permute.xlu0 %1353
        %1355 = vrot.lane.b32.xlu0 %v1285, 6
        %v1356 = vpop.permute.xlu0 %1355
        %1357 = vrot.lane.b32.xlu0 %v1288, 6
        %v1358 = vpop.permute.xlu0 %1357
        %1359 = vrot.lane.b32.xlu0 %v1290, 6
        %v1360 = vpop.permute.xlu0 %1359
        %1361 = vrot.lane.b32.xlu0 %v1293, 6
        %v1362 = vpop.permute.xlu0 %1361
        %1363 = vrot.lane.b32.xlu0 %v1295, 6
        %v1364 = vpop.permute.xlu0 %1363
        %1365 = vrot.lane.b32.xlu0 %v1298, 6
        %v1366 = vpop.permute.xlu0 %1365
        %1367 = vrot.lane.b32.xlu0 %v1300, 6
        %v1368 = vpop.permute.xlu0 %1367
        %1369 = vrot.lane.b32.xlu0 %v1303, 6
        %v1370 = vpop.permute.xlu0 %1369
        %1371 = vrot.lane.b32.xlu0 %v1305, 6
        %v1372 = vpop.permute.xlu0 %1371
        %1373 = vrot.lane.b32.xlu0 %v1308, 6
        %v1374 = vpop.permute.xlu0 %1373
        %1375 = vrot.lane.b32.xlu0 %v1310, 6
        %v1376 = vpop.permute.xlu0 %1375
        %1377 = vrot.lane.b32.xlu0 %v1313, 6
        %v1378 = vpop.permute.xlu0 %1377
        %1379 = vrot.lane.b32.xlu0 %v1315, 6
        %v1380 = vpop.permute.xlu0 %1379
        %1381 = vrot.lane.b32.xlu0 %v1318, 6
        %v1382 = vpop.permute.xlu0 %1381
        %1383 = vrot.lane.b32.xlu0 %v1320, 6
        %v1384 = vpop.permute.xlu0 %1383
        %vm1417 = vcmask 72752
        %1418 = vst.msk [vmem:[#allocation3] sm:$0xff] %vm1417, %v1322
        %1419 = vst.msk [vmem:[#allocation3 + $0x8] sm:$0xff] %vm1417, %v1324
        %1420 = vst.msk [vmem:[#allocation3 + $0x10] sm:$0xff] %vm1417, %v1326
        %1421 = vst.msk [vmem:[#allocation3 + $0x18] sm:$0xff] %vm1417, %v1328
        %1422 = vst.msk [vmem:[#allocation3 + $0x20] sm:$0xff] %vm1417, %v1330
        %1423 = vst.msk [vmem:[#allocation3 + $0x28] sm:$0xff] %vm1417, %v1332
        %1424 = vst.msk [vmem:[#allocation3 + $0x30] sm:$0xff] %vm1417, %v1334
        %1425 = vst.msk [vmem:[#allocation3 + $0x38] sm:$0xff] %vm1417, %v1336
        %1426 = vst.msk [vmem:[#allocation3 + $0x40] sm:$0xff] %vm1417, %v1338
        %1427 = vst.msk [vmem:[#allocation3 + $0x48] sm:$0xff] %vm1417, %v1340
        %1428 = vst.msk [vmem:[#allocation3 + $0x50] sm:$0xff] %vm1417, %v1342
        %1429 = vst.msk [vmem:[#allocation3 + $0x58] sm:$0xff] %vm1417, %v1344
        %1430 = vst.msk [vmem:[#allocation3 + $0x60] sm:$0xff] %vm1417, %v1346
        %1431 = vst.msk [vmem:[#allocation3 + $0x68] sm:$0xff] %vm1417, %v1348
        %1432 = vst.msk [vmem:[#allocation3 + $0x70] sm:$0xff] %vm1417, %v1350
        %1433 = vst.msk [vmem:[#allocation3 + $0x78] sm:$0xff] %vm1417, %v1352
        %1434 = vst.msk [vmem:[#allocation3 + $0x80] sm:$0xff] %vm1417, %v1354
        %1435 = vst.msk [vmem:[#allocation3 + $0x88] sm:$0xff] %vm1417, %v1356
        %1436 = vst.msk [vmem:[#allocation3 + $0x90] sm:$0xff] %vm1417, %v1358
        %1437 = vst.msk [vmem:[#allocation3 + $0x98] sm:$0xff] %vm1417, %v1360
        %1438 = vst.msk [vmem:[#allocation3 + $0xa0] sm:$0xff] %vm1417, %v1362
        %1439 = vst.msk [vmem:[#allocation3 + $0xa8] sm:$0xff] %vm1417, %v1364
        %1440 = vst.msk [vmem:[#allocation3 + $0xb0] sm:$0xff] %vm1417, %v1366
        %1441 = vst.msk [vmem:[#allocation3 + $0xb8] sm:$0xff] %vm1417, %v1368
        %1442 = vst.msk [vmem:[#allocation3 + $0xc0] sm:$0xff] %vm1417, %v1370
        %1443 = vst.msk [vmem:[#allocation3 + $0xc8] sm:$0xff] %vm1417, %v1372
        %1444 = vst.msk [vmem:[#allocation3 + $0xd0] sm:$0xff] %vm1417, %v1374
        %1445 = vst.msk [vmem:[#allocation3 + $0xd8] sm:$0xff] %vm1417, %v1376
        %1446 = vst.msk [vmem:[#allocation3 + $0xe0] sm:$0xff] %vm1417, %v1378
        %1447 = vst.msk [vmem:[#allocation3 + $0xe8] sm:$0xff] %vm1417, %v1380
        %1448 = vst.msk [vmem:[#allocation3 + $0xf0] sm:$0xff] %vm1417, %v1382
        %1449 = vst.msk [vmem:[#allocation3 + $0xf8] sm:$0xff] %vm1417, %v1384
        %1452 = vrot.lane.b32.xlu0 %v899, 9
        %v1453 = vpop.permute.xlu0 %1452
        %1454 = vrot.lane.b32.xlu0 %v900, 9
        %v1455 = vpop.permute.xlu0 %1454
        %1456 = vrot.lane.b32.xlu0 %v902, 9
        %v1457 = vpop.permute.xlu0 %1456
        %1458 = vrot.lane.b32.xlu0 %v903, 9
        %v1459 = vpop.permute.xlu0 %1458
        %1460 = vrot.lane.b32.xlu0 %v905, 9
        %v1461 = vpop.permute.xlu0 %1460
        %1462 = vrot.lane.b32.xlu0 %v906, 9
        %v1463 = vpop.permute.xlu0 %1462
        %1464 = vrot.lane.b32.xlu0 %v908, 9
        %v1465 = vpop.permute.xlu0 %1464
        %1466 = vrot.lane.b32.xlu0 %v909, 9
        %v1467 = vpop.permute.xlu0 %1466
        %1468 = vrot.lane.b32.xlu0 %v911, 9
        %v1469 = vpop.permute.xlu0 %1468
        %1470 = vrot.lane.b32.xlu0 %v912, 9
        %v1471 = vpop.permute.xlu0 %1470
        %1472 = vrot.lane.b32.xlu0 %v914, 9
        %v1473 = vpop.permute.xlu0 %1472
        %1474 = vrot.lane.b32.xlu0 %v915, 9
        %v1475 = vpop.permute.xlu0 %1474
        %1476 = vrot.lane.b32.xlu0 %v917, 9
        %v1477 = vpop.permute.xlu0 %1476
        %1478 = vrot.lane.b32.xlu0 %v918, 9
        %v1479 = vpop.permute.xlu0 %1478
        %1480 = vrot.lane.b32.xlu0 %v920, 9
        %v1481 = vpop.permute.xlu0 %1480
        %1482 = vrot.lane.b32.xlu0 %v921, 9
        %v1483 = vpop.permute.xlu0 %1482
        %1484 = vrot.lane.b32.xlu0 %v923, 9
        %v1485 = vpop.permute.xlu0 %1484
        %1486 = vrot.lane.b32.xlu0 %v924, 9
        %v1487 = vpop.permute.xlu0 %1486
        %1488 = vrot.lane.b32.xlu0 %v926, 9
        %v1489 = vpop.permute.xlu0 %1488
        %1490 = vrot.lane.b32.xlu0 %v927, 9
        %v1491 = vpop.permute.xlu0 %1490
        %1492 = vrot.lane.b32.xlu0 %v929, 9
        %v1493 = vpop.permute.xlu0 %1492
        %1494 = vrot.lane.b32.xlu0 %v930, 9
        %v1495 = vpop.permute.xlu0 %1494
        %1496 = vrot.lane.b32.xlu0 %v932, 9
        %v1497 = vpop.permute.xlu0 %1496
        %1498 = vrot.lane.b32.xlu0 %v933, 9
        %v1499 = vpop.permute.xlu0 %1498
        %1500 = vrot.lane.b32.xlu0 %v935, 9
        %v1501 = vpop.permute.xlu0 %1500
        %1502 = vrot.lane.b32.xlu0 %v936, 9
        %v1503 = vpop.permute.xlu0 %1502
        %1504 = vrot.lane.b32.xlu0 %v938, 9
        %v1505 = vpop.permute.xlu0 %1504
        %1506 = vrot.lane.b32.xlu0 %v939, 9
        %v1507 = vpop.permute.xlu0 %1506
        %1508 = vrot.lane.b32.xlu0 %v941, 9
        %v1509 = vpop.permute.xlu0 %1508
        %1510 = vrot.lane.b32.xlu0 %v942, 9
        %v1511 = vpop.permute.xlu0 %1510
        %1512 = vrot.lane.b32.xlu0 %v944, 9
        %v1513 = vpop.permute.xlu0 %1512
        %1514 = vrot.lane.b32.xlu0 %v945, 9
        %v1515 = vpop.permute.xlu0 %1514
        %vm1548 = vcmask 97352
        %1549 = vst.msk [vmem:[#allocation3] sm:$0xff] %vm1548, %v1453
        %1550 = vst.msk [vmem:[#allocation3 + $0x8] sm:$0xff] %vm1548, %v1455
        %1551 = vst.msk [vmem:[#allocation3 + $0x10] sm:$0xff] %vm1548, %v1457
        %1552 = vst.msk [vmem:[#allocation3 + $0x18] sm:$0xff] %vm1548, %v1459
        %1553 = vst.msk [vmem:[#allocation3 + $0x20] sm:$0xff] %vm1548, %v1461
        %1554 = vst.msk [vmem:[#allocation3 + $0x28] sm:$0xff] %vm1548, %v1463
        %1555 = vst.msk [vmem:[#allocation3 + $0x30] sm:$0xff] %vm1548, %v1465
        %1556 = vst.msk [vmem:[#allocation3 + $0x38] sm:$0xff] %vm1548, %v1467
        %1557 = vst.msk [vmem:[#allocation3 + $0x40] sm:$0xff] %vm1548, %v1469
        %1558 = vst.msk [vmem:[#allocation3 + $0x48] sm:$0xff] %vm1548, %v1471
        %1559 = vst.msk [vmem:[#allocation3 + $0x50] sm:$0xff] %vm1548, %v1473
        %1560 = vst.msk [vmem:[#allocation3 + $0x58] sm:$0xff] %vm1548, %v1475
        %1561 = vst.msk [vmem:[#allocation3 + $0x60] sm:$0xff] %vm1548, %v1477
        %1562 = vst.msk [vmem:[#allocation3 + $0x68] sm:$0xff] %vm1548, %v1479
        %1563 = vst.msk [vmem:[#allocation3 + $0x70] sm:$0xff] %vm1548, %v1481
        %1564 = vst.msk [vmem:[#allocation3 + $0x78] sm:$0xff] %vm1548, %v1483
        %1565 = vst.msk [vmem:[#allocation3 + $0x80] sm:$0xff] %vm1548, %v1485
        %1566 = vst.msk [vmem:[#allocation3 + $0x88] sm:$0xff] %vm1548, %v1487
        %1567 = vst.msk [vmem:[#allocation3 + $0x90] sm:$0xff] %vm1548, %v1489
        %1568 = vst.msk [vmem:[#allocation3 + $0x98] sm:$0xff] %vm1548, %v1491
        %1569 = vst.msk [vmem:[#allocation3 + $0xa0] sm:$0xff] %vm1548, %v1493
        %1570 = vst.msk [vmem:[#allocation3 + $0xa8] sm:$0xff] %vm1548, %v1495
        %1571 = vst.msk [vmem:[#allocation3 + $0xb0] sm:$0xff] %vm1548, %v1497
        %1572 = vst.msk [vmem:[#allocation3 + $0xb8] sm:$0xff] %vm1548, %v1499
        %1573 = vst.msk [vmem:[#allocation3 + $0xc0] sm:$0xff] %vm1548, %v1501
        %1574 = vst.msk [vmem:[#allocation3 + $0xc8] sm:$0xff] %vm1548, %v1503
        %1575 = vst.msk [vmem:[#allocation3 + $0xd0] sm:$0xff] %vm1548, %v1505
        %1576 = vst.msk [vmem:[#allocation3 + $0xd8] sm:$0xff] %vm1548, %v1507
        %1577 = vst.msk [vmem:[#allocation3 + $0xe0] sm:$0xff] %vm1548, %v1509
        %1578 = vst.msk [vmem:[#allocation3 + $0xe8] sm:$0xff] %vm1548, %v1511
        %1579 = vst.msk [vmem:[#allocation3 + $0xf0] sm:$0xff] %vm1548, %v1513
        %1580 = vst.msk [vmem:[#allocation3 + $0xf8] sm:$0xff] %vm1548, %v1515
        %v1582 = vrot.slane %v944, 1
        %v1583 = vrot.slane %v945, 1
        %v1584 = vsel %vm1030, %v1582, %v1583
        %v1585 = vrot.slane %v946, 1
        %v1586 = vsel %vm1030, %v1583, %v1585
        %1587 = vrot.lane.b32.xlu0 %v1038, 12
        %v1588 = vpop.permute.xlu0 %1587
        %1589 = vrot.lane.b32.xlu0 %v1040, 12
        %v1590 = vpop.permute.xlu0 %1589
        %1591 = vrot.lane.b32.xlu0 %v1043, 12
        %v1592 = vpop.permute.xlu0 %1591
        %1593 = vrot.lane.b32.xlu0 %v1045, 12
        %v1594 = vpop.permute.xlu0 %1593
        %1595 = vrot.lane.b32.xlu0 %v1048, 12
        %v1596 = vpop.permute.xlu0 %1595
        %1597 = vrot.lane.b32.xlu0 %v1050, 12
        %v1598 = vpop.permute.xlu0 %1597
        %1599 = vrot.lane.b32.xlu0 %v1053, 12
        %v1600 = vpop.permute.xlu0 %1599
        %1601 = vrot.lane.b32.xlu0 %v1055, 12
        %v1602 = vpop.permute.xlu0 %1601
        %1603 = vrot.lane.b32.xlu0 %v1058, 12
        %v1604 = vpop.permute.xlu0 %1603
        %1605 = vrot.lane.b32.xlu0 %v1060, 12
        %v1606 = vpop.permute.xlu0 %1605
        %1607 = vrot.lane.b32.xlu0 %v1063, 12
        %v1608 = vpop.permute.xlu0 %1607
        %1609 = vrot.lane.b32.xlu0 %v1065, 12
        %v1610 = vpop.permute.xlu0 %1609
        %1611 = vrot.lane.b32.xlu0 %v1068, 12
        %v1612 = vpop.permute.xlu0 %1611
        %1613 = vrot.lane.b32.xlu0 %v1070, 12
        %v1614 = vpop.permute.xlu0 %1613
        %1615 = vrot.lane.b32.xlu0 %v1073, 12
        %v1616 = vpop.permute.xlu0 %1615
        %1617 = vrot.lane.b32.xlu0 %v1075, 12
        %v1618 = vpop.permute.xlu0 %1617
        %1619 = vrot.lane.b32.xlu0 %v1078, 12
        %v1620 = vpop.permute.xlu0 %1619
        %1621 = vrot.lane.b32.xlu0 %v1080, 12
        %v1622 = vpop.permute.xlu0 %1621
        %1623 = vrot.lane.b32.xlu0 %v1083, 12
        %v1624 = vpop.permute.xlu0 %1623
        %1625 = vrot.lane.b32.xlu0 %v1085, 12
        %v1626 = vpop.permute.xlu0 %1625
        %1627 = vrot.lane.b32.xlu0 %v1088, 12
        %v1628 = vpop.permute.xlu0 %1627
        %1629 = vrot.lane.b32.xlu0 %v1090, 12
        %v1630 = vpop.permute.xlu0 %1629
        %1631 = vrot.lane.b32.xlu0 %v1093, 12
        %v1632 = vpop.permute.xlu0 %1631
        %1633 = vrot.lane.b32.xlu0 %v1095, 12
        %v1634 = vpop.permute.xlu0 %1633
        %1635 = vrot.lane.b32.xlu0 %v1098, 12
        %v1636 = vpop.permute.xlu0 %1635
        %1637 = vrot.lane.b32.xlu0 %v1100, 12
        %v1638 = vpop.permute.xlu0 %1637
        %1639 = vrot.lane.b32.xlu0 %v1103, 12
        %v1640 = vpop.permute.xlu0 %1639
        %1641 = vrot.lane.b32.xlu0 %v1105, 12
        %v1642 = vpop.permute.xlu0 %1641
        %1643 = vrot.lane.b32.xlu0 %v1108, 12
        %v1644 = vpop.permute.xlu0 %1643
        %1645 = vrot.lane.b32.xlu0 %v1110, 12
        %v1646 = vpop.permute.xlu0 %1645
        %1647 = vrot.lane.b32.xlu0 %v1584, 12
        %v1648 = vpop.permute.xlu0 %1647
        %1649 = vrot.lane.b32.xlu0 %v1586, 12
        %v1650 = vpop.permute.xlu0 %1649
        %vm1683 = vcmask 121952
        %1684 = vst.msk [vmem:[#allocation3] sm:$0xff] %vm1683, %v1588
        %1685 = vst.msk [vmem:[#allocation3 + $0x8] sm:$0xff] %vm1683, %v1590
        %1686 = vst.msk [vmem:[#allocation3 + $0x10] sm:$0xff] %vm1683, %v1592
        %1687 = vst.msk [vmem:[#allocation3 + $0x18] sm:$0xff] %vm1683, %v1594
        %1688 = vst.msk [vmem:[#allocation3 + $0x20] sm:$0xff] %vm1683, %v1596
        %1689 = vst.msk [vmem:[#allocation3 + $0x28] sm:$0xff] %vm1683, %v1598
        %1690 = vst.msk [vmem:[#allocation3 + $0x30] sm:$0xff] %vm1683, %v1600
        %1691 = vst.msk [vmem:[#allocation3 + $0x38] sm:$0xff] %vm1683, %v1602
        %1692 = vst.msk [vmem:[#allocation3 + $0x40] sm:$0xff] %vm1683, %v1604
        %1693 = vst.msk [vmem:[#allocation3 + $0x48] sm:$0xff] %vm1683, %v1606
        %1694 = vst.msk [vmem:[#allocation3 + $0x50] sm:$0xff] %vm1683, %v1608
        %1695 = vst.msk [vmem:[#allocation3 + $0x58] sm:$0xff] %vm1683, %v1610
        %1696 = vst.msk [vmem:[#allocation3 + $0x60] sm:$0xff] %vm1683, %v1612
        %1697 = vst.msk [vmem:[#allocation3 + $0x68] sm:$0xff] %vm1683, %v1614
        %1698 = vst.msk [vmem:[#allocation3 + $0x70] sm:$0xff] %vm1683, %v1616
        %1699 = vst.msk [vmem:[#allocation3 + $0x78] sm:$0xff] %vm1683, %v1618
        %1700 = vst.msk [vmem:[#allocation3 + $0x80] sm:$0xff] %vm1683, %v1620
        %1701 = vst.msk [vmem:[#allocation3 + $0x88] sm:$0xff] %vm1683, %v1622
        %1702 = vst.msk [vmem:[#allocation3 + $0x90] sm:$0xff] %vm1683, %v1624
        %1703 = vst.msk [vmem:[#allocation3 + $0x98] sm:$0xff] %vm1683, %v1626
        %1704 = vst.msk [vmem:[#allocation3 + $0xa0] sm:$0xff] %vm1683, %v1628
        %1705 = vst.msk [vmem:[#allocation3 + $0xa8] sm:$0xff] %vm1683, %v1630
        %1706 = vst.msk [vmem:[#allocation3 + $0xb0] sm:$0xff] %vm1683, %v1632
        %1707 = vst.msk [vmem:[#allocation3 + $0xb8] sm:$0xff] %vm1683, %v1634
        %1708 = vst.msk [vmem:[#allocation3 + $0xc0] sm:$0xff] %vm1683, %v1636
        %1709 = vst.msk [vmem:[#allocation3 + $0xc8] sm:$0xff] %vm1683, %v1638
        %1710 = vst.msk [vmem:[#allocation3 + $0xd0] sm:$0xff] %vm1683, %v1640
        %1711 = vst.msk [vmem:[#allocation3 + $0xd8] sm:$0xff] %vm1683, %v1642
        %1712 = vst.msk [vmem:[#allocation3 + $0xe0] sm:$0xff] %vm1683, %v1644
        %1713 = vst.msk [vmem:[#allocation3 + $0xe8] sm:$0xff] %vm1683, %v1646
        %1714 = vst.msk [vmem:[#allocation3 + $0xf0] sm:$0xff] %vm1683, %v1648
        %1715 = vst.msk [vmem:[#allocation3 + $0xf8] sm:$0xff] %vm1683, %v1650
        %v1716 = vrot.slane %v944, 2
        %v1717 = vrot.slane %v945, 2
        %v1718 = vsel %vm1240, %v1716, %v1717
        %v1719 = vrot.slane %v946, 2
        %v1720 = vsel %vm1240, %v1717, %v1719
        %1721 = vrot.lane.b32.xlu0 %v1248, 15
        %v1722 = vpop.permute.xlu0 %1721
        %1723 = vrot.lane.b32.xlu0 %v1250, 15
        %v1724 = vpop.permute.xlu0 %1723
        %1725 = vrot.lane.b32.xlu0 %v1253, 15
        %v1726 = vpop.permute.xlu0 %1725
        %1727 = vrot.lane.b32.xlu0 %v1255, 15
        %v1728 = vpop.permute.xlu0 %1727
        %1729 = vrot.lane.b32.xlu0 %v1258, 15
        %v1730 = vpop.permute.xlu0 %1729
        %1731 = vrot.lane.b32.xlu0 %v1260, 15
        %v1732 = vpop.permute.xlu0 %1731
        %1733 = vrot.lane.b32.xlu0 %v1263, 15
        %v1734 = vpop.permute.xlu0 %1733
        %1735 = vrot.lane.b32.xlu0 %v1265, 15
        %v1736 = vpop.permute.xlu0 %1735
        %1737 = vrot.lane.b32.xlu0 %v1268, 15
        %v1738 = vpop.permute.xlu0 %1737
        %1739 = vrot.lane.b32.xlu0 %v1270, 15
        %v1740 = vpop.permute.xlu0 %1739
        %1741 = vrot.lane.b32.xlu0 %v1273, 15
        %v1742 = vpop.permute.xlu0 %1741
        %1743 = vrot.lane.b32.xlu0 %v1275, 15
        %v1744 = vpop.permute.xlu0 %1743
        %1745 = vrot.lane.b32.xlu0 %v1278, 15
        %v1746 = vpop.permute.xlu0 %1745
        %1747 = vrot.lane.b32.xlu0 %v1280, 15
        %v1748 = vpop.permute.xlu0 %1747
        %1749 = vrot.lane.b32.xlu0 %v1283, 15
        %v1750 = vpop.permute.xlu0 %1749
        %1751 = vrot.lane.b32.xlu0 %v1285, 15
        %v1752 = vpop.permute.xlu0 %1751
        %1753 = vrot.lane.b32.xlu0 %v1288, 15
        %v1754 = vpop.permute.xlu0 %1753
        %1755 = vrot.lane.b32.xlu0 %v1290, 15
        %v1756 = vpop.permute.xlu0 %1755
        %1757 = vrot.lane.b32.xlu0 %v1293, 15
        %v1758 = vpop.permute.xlu0 %1757
        %1759 = vrot.lane.b32.xlu0 %v1295, 15
        %v1760 = vpop.permute.xlu0 %1759
        %1761 = vrot.lane.b32.xlu0 %v1298, 15
        %v1762 = vpop.permute.xlu0 %1761
        %1763 = vrot.lane.b32.xlu0 %v1300, 15
        %v1764 = vpop.permute.xlu0 %1763
        %1765 = vrot.lane.b32.xlu0 %v1303, 15
        %v1766 = vpop.permute.xlu0 %1765
        %1767 = vrot.lane.b32.xlu0 %v1305, 15
        %v1768 = vpop.permute.xlu0 %1767
        %1769 = vrot.lane.b32.xlu0 %v1308, 15
        %v1770 = vpop.permute.xlu0 %1769
        %1771 = vrot.lane.b32.xlu0 %v1310, 15
        %v1772 = vpop.permute.xlu0 %1771
        %1773 = vrot.lane.b32.xlu0 %v1313, 15
        %v1774 = vpop.permute.xlu0 %1773
        %1775 = vrot.lane.b32.xlu0 %v1315, 15
        %v1776 = vpop.permute.xlu0 %1775
        %1777 = vrot.lane.b32.xlu0 %v1318, 15
        %v1778 = vpop.permute.xlu0 %1777
        %1779 = vrot.lane.b32.xlu0 %v1320, 15
        %v1780 = vpop.permute.xlu0 %1779
        %1781 = vrot.lane.b32.xlu0 %v1718, 15
        %v1782 = vpop.permute.xlu0 %1781
        %1783 = vrot.lane.b32.xlu0 %v1720, 15
        %v1784 = vpop.permute.xlu0 %1783
        %vm1817 = vcmask 146552
        %1818 = vst.msk [vmem:[#allocation3] sm:$0xff] %vm1817, %v1722
        %1819 = vst.msk [vmem:[#allocation3 + $0x8] sm:$0xff] %vm1817, %v1724
        %1820 = vst.msk [vmem:[#allocation3 + $0x10] sm:$0xff] %vm1817, %v1726
        %1821 = vst.msk [vmem:[#allocation3 + $0x18] sm:$0xff] %vm1817, %v1728
        %1822 = vst.msk [vmem:[#allocation3 + $0x20] sm:$0xff] %vm1817, %v1730
        %1823 = vst.msk [vmem:[#allocation3 + $0x28] sm:$0xff] %vm1817, %v1732
        %1824 = vst.msk [vmem:[#allocation3 + $0x30] sm:$0xff] %vm1817, %v1734
        %1825 = vst.msk [vmem:[#allocation3 + $0x38] sm:$0xff] %vm1817, %v1736
        %1826 = vst.msk [vmem:[#allocation3 + $0x40] sm:$0xff] %vm1817, %v1738
        %1827 = vst.msk [vmem:[#allocation3 + $0x48] sm:$0xff] %vm1817, %v1740
        %1828 = vst.msk [vmem:[#allocation3 + $0x50] sm:$0xff] %vm1817, %v1742
        %1829 = vst.msk [vmem:[#allocation3 + $0x58] sm:$0xff] %vm1817, %v1744
        %1830 = vst.msk [vmem:[#allocation3 + $0x60] sm:$0xff] %vm1817, %v1746
        %1831 = vst.msk [vmem:[#allocation3 + $0x68] sm:$0xff] %vm1817, %v1748
        %1832 = vst.msk [vmem:[#allocation3 + $0x70] sm:$0xff] %vm1817, %v1750
        %1833 = vst.msk [vmem:[#allocation3 + $0x78] sm:$0xff] %vm1817, %v1752
        %1834 = vst.msk [vmem:[#allocation3 + $0x80] sm:$0xff] %vm1817, %v1754
        %1835 = vst.msk [vmem:[#allocation3 + $0x88] sm:$0xff] %vm1817, %v1756
        %1836 = vst.msk [vmem:[#allocation3 + $0x90] sm:$0xff] %vm1817, %v1758
        %1837 = vst.msk [vmem:[#allocation3 + $0x98] sm:$0xff] %vm1817, %v1760
        %1838 = vst.msk [vmem:[#allocation3 + $0xa0] sm:$0xff] %vm1817, %v1762
        %1839 = vst.msk [vmem:[#allocation3 + $0xa8] sm:$0xff] %vm1817, %v1764
        %1840 = vst.msk [vmem:[#allocation3 + $0xb0] sm:$0xff] %vm1817, %v1766
        %1841 = vst.msk [vmem:[#allocation3 + $0xb8] sm:$0xff] %vm1817, %v1768
        %1842 = vst.msk [vmem:[#allocation3 + $0xc0] sm:$0xff] %vm1817, %v1770
        %1843 = vst.msk [vmem:[#allocation3 + $0xc8] sm:$0xff] %vm1817, %v1772
        %1844 = vst.msk [vmem:[#allocation3 + $0xd0] sm:$0xff] %vm1817, %v1774
        %1845 = vst.msk [vmem:[#allocation3 + $0xd8] sm:$0xff] %vm1817, %v1776
        %1846 = vst.msk [vmem:[#allocation3 + $0xe0] sm:$0xff] %vm1817, %v1778
        %1847 = vst.msk [vmem:[#allocation3 + $0xe8] sm:$0xff] %vm1817, %v1780
        %1848 = vst.msk [vmem:[#allocation3 + $0xf0] sm:$0xff] %vm1817, %v1782
        %1849 = vst.msk [vmem:[#allocation3 + $0xf8] sm:$0xff] %vm1817, %v1784
        %1852 = vrot.lane.b32.xlu0 %v902, 18
        %v1853 = vpop.permute.xlu0 %1852
        %1854 = vrot.lane.b32.xlu0 %v903, 18
        %v1855 = vpop.permute.xlu0 %1854
        %1856 = vrot.lane.b32.xlu0 %v905, 18
        %v1857 = vpop.permute.xlu0 %1856
        %1858 = vrot.lane.b32.xlu0 %v906, 18
        %v1859 = vpop.permute.xlu0 %1858
        %1860 = vrot.lane.b32.xlu0 %v908, 18
        %v1861 = vpop.permute.xlu0 %1860
        %1862 = vrot.lane.b32.xlu0 %v909, 18
        %v1863 = vpop.permute.xlu0 %1862
        %1864 = vrot.lane.b32.xlu0 %v911, 18
        %v1865 = vpop.permute.xlu0 %1864
        %1866 = vrot.lane.b32.xlu0 %v912, 18
        %v1867 = vpop.permute.xlu0 %1866
        %1868 = vrot.lane.b32.xlu0 %v914, 18
        %v1869 = vpop.permute.xlu0 %1868
        %1870 = vrot.lane.b32.xlu0 %v915, 18
        %v1871 = vpop.permute.xlu0 %1870
        %1872 = vrot.lane.b32.xlu0 %v917, 18
        %v1873 = vpop.permute.xlu0 %1872
        %1874 = vrot.lane.b32.xlu0 %v918, 18
        %v1875 = vpop.permute.xlu0 %1874
        %1876 = vrot.lane.b32.xlu0 %v920, 18
        %v1877 = vpop.permute.xlu0 %1876
        %1878 = vrot.lane.b32.xlu0 %v921, 18
        %v1879 = vpop.permute.xlu0 %1878
        %1880 = vrot.lane.b32.xlu0 %v923, 18
        %v1881 = vpop.permute.xlu0 %1880
        %1882 = vrot.lane.b32.xlu0 %v924, 18
        %v1883 = vpop.permute.xlu0 %1882
        %1884 = vrot.lane.b32.xlu0 %v926, 18
        %v1885 = vpop.permute.xlu0 %1884
        %1886 = vrot.lane.b32.xlu0 %v927, 18
        %v1887 = vpop.permute.xlu0 %1886
        %1888 = vrot.lane.b32.xlu0 %v929, 18
        %v1889 = vpop.permute.xlu0 %1888
        %1890 = vrot.lane.b32.xlu0 %v930, 18
        %v1891 = vpop.permute.xlu0 %1890
        %1892 = vrot.lane.b32.xlu0 %v932, 18
        %v1893 = vpop.permute.xlu0 %1892
        %1894 = vrot.lane.b32.xlu0 %v933, 18
        %v1895 = vpop.permute.xlu0 %1894
        %1896 = vrot.lane.b32.xlu0 %v935, 18
        %v1897 = vpop.permute.xlu0 %1896
        %1898 = vrot.lane.b32.xlu0 %v936, 18
        %v1899 = vpop.permute.xlu0 %1898
        %1900 = vrot.lane.b32.xlu0 %v938, 18
        %v1901 = vpop.permute.xlu0 %1900
        %1902 = vrot.lane.b32.xlu0 %v939, 18
        %v1903 = vpop.permute.xlu0 %1902
        %1904 = vrot.lane.b32.xlu0 %v941, 18
        %v1905 = vpop.permute.xlu0 %1904
        %1906 = vrot.lane.b32.xlu0 %v942, 18
        %v1907 = vpop.permute.xlu0 %1906
        %1908 = vrot.lane.b32.xlu0 %v944, 18
        %v1909 = vpop.permute.xlu0 %1908
        %1910 = vrot.lane.b32.xlu0 %v945, 18
        %v1911 = vpop.permute.xlu0 %1910
        %1912 = vrot.lane.b32.xlu0 %v947, 18
        %v1913 = vpop.permute.xlu0 %1912
        %1914 = vrot.lane.b32.xlu0 %v948, 18
        %v1915 = vpop.permute.xlu0 %1914
        %vm1948 = vcmask 171152
        %1949 = vst.msk [vmem:[#allocation3] sm:$0xff] %vm1948, %v1853
        %1950 = vst.msk [vmem:[#allocation3 + $0x8] sm:$0xff] %vm1948, %v1855
        %1951 = vst.msk [vmem:[#allocation3 + $0x10] sm:$0xff] %vm1948, %v1857
        %1952 = vst.msk [vmem:[#allocation3 + $0x18] sm:$0xff] %vm1948, %v1859
        %1953 = vst.msk [vmem:[#allocation3 + $0x20] sm:$0xff] %vm1948, %v1861
        %1954 = vst.msk [vmem:[#allocation3 + $0x28] sm:$0xff] %vm1948, %v1863
        %1955 = vst.msk [vmem:[#allocation3 + $0x30] sm:$0xff] %vm1948, %v1865
        %1956 = vst.msk [vmem:[#allocation3 + $0x38] sm:$0xff] %vm1948, %v1867
        %1957 = vst.msk [vmem:[#allocation3 + $0x40] sm:$0xff] %vm1948, %v1869
        %1958 = vst.msk [vmem:[#allocation3 + $0x48] sm:$0xff] %vm1948, %v1871
        %1959 = vst.msk [vmem:[#allocation3 + $0x50] sm:$0xff] %vm1948, %v1873
        %1960 = vst.msk [vmem:[#allocation3 + $0x58] sm:$0xff] %vm1948, %v1875
        %1961 = vst.msk [vmem:[#allocation3 + $0x60] sm:$0xff] %vm1948, %v1877
        %1962 = vst.msk [vmem:[#allocation3 + $0x68] sm:$0xff] %vm1948, %v1879
        %1963 = vst.msk [vmem:[#allocation3 + $0x70] sm:$0xff] %vm1948, %v1881
        %1964 = vst.msk [vmem:[#allocation3 + $0x78] sm:$0xff] %vm1948, %v1883
        %1965 = vst.msk [vmem:[#allocation3 + $0x80] sm:$0xff] %vm1948, %v1885
        %1966 = vst.msk [vmem:[#allocation3 + $0x88] sm:$0xff] %vm1948, %v1887
        %1967 = vst.msk [vmem:[#allocation3 + $0x90] sm:$0xff] %vm1948, %v1889
        %1968 = vst.msk [vmem:[#allocation3 + $0x98] sm:$0xff] %vm1948, %v1891
        %1969 = vst.msk [vmem:[#allocation3 + $0xa0] sm:$0xff] %vm1948, %v1893
        %1970 = vst.msk [vmem:[#allocation3 + $0xa8] sm:$0xff] %vm1948, %v1895
        %1971 = vst.msk [vmem:[#allocation3 + $0xb0] sm:$0xff] %vm1948, %v1897
        %1972 = vst.msk [vmem:[#allocation3 + $0xb8] sm:$0xff] %vm1948, %v1899
        %1973 = vst.msk [vmem:[#allocation3 + $0xc0] sm:$0xff] %vm1948, %v1901
        %1974 = vst.msk [vmem:[#allocation3 + $0xc8] sm:$0xff] %vm1948, %v1903
        %1975 = vst.msk [vmem:[#allocation3 + $0xd0] sm:$0xff] %vm1948, %v1905
        %1976 = vst.msk [vmem:[#allocation3 + $0xd8] sm:$0xff] %vm1948, %v1907
        %1977 = vst.msk [vmem:[#allocation3 + $0xe0] sm:$0xff] %vm1948, %v1909
        %1978 = vst.msk [vmem:[#allocation3 + $0xe8] sm:$0xff] %vm1948, %v1911
        %1979 = vst.msk [vmem:[#allocation3 + $0xf0] sm:$0xff] %vm1948, %v1913
        %1980 = vst.msk [vmem:[#allocation3 + $0xf8] sm:$0xff] %vm1948, %v1915
        %v1982 = vrot.slane %v947, 1
        %v1983 = vrot.slane %v948, 1
        %v1984 = vsel %vm1030, %v1982, %v1983
        %v1985 = vrot.slane %v949, 1
        %v1986 = vsel %vm1030, %v1983, %v1985
        %1987 = vrot.lane.b32.xlu0 %v1043, 21
        %v1988 = vpop.permute.xlu0 %1987
        %1989 = vrot.lane.b32.xlu0 %v1045, 21
        %v1990 = vpop.permute.xlu0 %1989
        %1991 = vrot.lane.b32.xlu0 %v1048, 21
        %v1992 = vpop.permute.xlu0 %1991
        %1993 = vrot.lane.b32.xlu0 %v1050, 21
        %v1994 = vpop.permute.xlu0 %1993
        %1995 = vrot.lane.b32.xlu0 %v1053, 21
        %v1996 = vpop.permute.xlu0 %1995
        %1997 = vrot.lane.b32.xlu0 %v1055, 21
        %v1998 = vpop.permute.xlu0 %1997
        %1999 = vrot.lane.b32.xlu0 %v1058, 21
        %v2000 = vpop.permute.xlu0 %1999
        %2001 = vrot.lane.b32.xlu0 %v1060, 21
        %v2002 = vpop.permute.xlu0 %2001
        %2003 = vrot.lane.b32.xlu0 %v1063, 21
        %v2004 = vpop.permute.xlu0 %2003
        %2005 = vrot.lane.b32.xlu0 %v1065, 21
        %v2006 = vpop.permute.xlu0 %2005
        %2007 = vrot.lane.b32.xlu0 %v1068, 21
        %v2008 = vpop.permute.xlu0 %2007
        %2009 = vrot.lane.b32.xlu0 %v1070, 21
        %v2010 = vpop.permute.xlu0 %2009
        %2011 = vrot.lane.b32.xlu0 %v1073, 21
        %v2012 = vpop.permute.xlu0 %2011
        %2013 = vrot.lane.b32.xlu0 %v1075, 21
        %v2014 = vpop.permute.xlu0 %2013
        %2015 = vrot.lane.b32.xlu0 %v1078, 21
        %v2016 = vpop.permute.xlu0 %2015
        %2017 = vrot.lane.b32.xlu0 %v1080, 21
        %v2018 = vpop.permute.xlu0 %2017
        %2019 = vrot.lane.b32.xlu0 %v1083, 21
        %v2020 = vpop.permute.xlu0 %2019
        %2021 = vrot.lane.b32.xlu0 %v1085, 21
        %v2022 = vpop.permute.xlu0 %2021
        %2023 = vrot.lane.b32.xlu0 %v1088, 21
        %v2024 = vpop.permute.xlu0 %2023
        %2025 = vrot.lane.b32.xlu0 %v1090, 21
        %v2026 = vpop.permute.xlu0 %2025
        %2027 = vrot.lane.b32.xlu0 %v1093, 21
        %v2028 = vpop.permute.xlu0 %2027
        %2029 = vrot.lane.b32.xlu0 %v1095, 21
        %v2030 = vpop.permute.xlu0 %2029
        %2031 = vrot.lane.b32.xlu0 %v1098, 21
        %v2032 = vpop.permute.xlu0 %2031
        %2033 = vrot.lane.b32.xlu0 %v1100, 21
        %v2034 = vpop.permute.xlu0 %2033
        %2035 = vrot.lane.b32.xlu0 %v1103, 21
        %v2036 = vpop.permute.xlu0 %2035
        %2037 = vrot.lane.b32.xlu0 %v1105, 21
        %v2038 = vpop.permute.xlu0 %2037
        %2039 = vrot.lane.b32.xlu0 %v1108, 21
        %v2040 = vpop.permute.xlu0 %2039
        %2041 = vrot.lane.b32.xlu0 %v1110, 21
        %v2042 = vpop.permute.xlu0 %2041
        %2043 = vrot.lane.b32.xlu0 %v1584, 21
        %v2044 = vpop.permute.xlu0 %2043
        %2045 = vrot.lane.b32.xlu0 %v1586, 21
        %v2046 = vpop.permute.xlu0 %2045
        %2047 = vrot.lane.b32.xlu0 %v1984, 21
        %v2048 = vpop.permute.xlu0 %2047
        %2049 = vrot.lane.b32.xlu0 %v1986, 21
        %v2050 = vpop.permute.xlu0 %2049
        %vm2083 = vcmask 195752
        %2084 = vst.msk [vmem:[#allocation3] sm:$0xff] %vm2083, %v1988
        %2085 = vst.msk [vmem:[#allocation3 + $0x8] sm:$0xff] %vm2083, %v1990
        %2086 = vst.msk [vmem:[#allocation3 + $0x10] sm:$0xff] %vm2083, %v1992
        %2087 = vst.msk [vmem:[#allocation3 + $0x18] sm:$0xff] %vm2083, %v1994
        %2088 = vst.msk [vmem:[#allocation3 + $0x20] sm:$0xff] %vm2083, %v1996
        %2089 = vst.msk [vmem:[#allocation3 + $0x28] sm:$0xff] %vm2083, %v1998
        %2090 = vst.msk [vmem:[#allocation3 + $0x30] sm:$0xff] %vm2083, %v2000
        %2091 = vst.msk [vmem:[#allocation3 + $0x38] sm:$0xff] %vm2083, %v2002
        %2092 = vst.msk [vmem:[#allocation3 + $0x40] sm:$0xff] %vm2083, %v2004
        %2093 = vst.msk [vmem:[#allocation3 + $0x48] sm:$0xff] %vm2083, %v2006
        %2094 = vst.msk [vmem:[#allocation3 + $0x50] sm:$0xff] %vm2083, %v2008
        %2095 = vst.msk [vmem:[#allocation3 + $0x58] sm:$0xff] %vm2083, %v2010
        %2096 = vst.msk [vmem:[#allocation3 + $0x60] sm:$0xff] %vm2083, %v2012
        %2097 = vst.msk [vmem:[#allocation3 + $0x68] sm:$0xff] %vm2083, %v2014
        %2098 = vst.msk [vmem:[#allocation3 + $0x70] sm:$0xff] %vm2083, %v2016
        %2099 = vst.msk [vmem:[#allocation3 + $0x78] sm:$0xff] %vm2083, %v2018
        %2100 = vst.msk [vmem:[#allocation3 + $0x80] sm:$0xff] %vm2083, %v2020
        %2101 = vst.msk [vmem:[#allocation3 + $0x88] sm:$0xff] %vm2083, %v2022
        %2102 = vst.msk [vmem:[#allocation3 + $0x90] sm:$0xff] %vm2083, %v2024
        %2103 = vst.msk [vmem:[#allocation3 + $0x98] sm:$0xff] %vm2083, %v2026
        %2104 = vst.msk [vmem:[#allocation3 + $0xa0] sm:$0xff] %vm2083, %v2028
        %2105 = vst.msk [vmem:[#allocation3 + $0xa8] sm:$0xff] %vm2083, %v2030
        %2106 = vst.msk [vmem:[#allocation3 + $0xb0] sm:$0xff] %vm2083, %v2032
        %2107 = vst.msk [vmem:[#allocation3 + $0xb8] sm:$0xff] %vm2083, %v2034
        %2108 = vst.msk [vmem:[#allocation3 + $0xc0] sm:$0xff] %vm2083, %v2036
        %2109 = vst.msk [vmem:[#allocation3 + $0xc8] sm:$0xff] %vm2083, %v2038
        %2110 = vst.msk [vmem:[#allocation3 + $0xd0] sm:$0xff] %vm2083, %v2040
        %2111 = vst.msk [vmem:[#allocation3 + $0xd8] sm:$0xff] %vm2083, %v2042
        %2112 = vst.msk [vmem:[#allocation3 + $0xe0] sm:$0xff] %vm2083, %v2044
        %2113 = vst.msk [vmem:[#allocation3 + $0xe8] sm:$0xff] %vm2083, %v2046
        %2114 = vst.msk [vmem:[#allocation3 + $0xf0] sm:$0xff] %vm2083, %v2048
        %2115 = vst.msk [vmem:[#allocation3 + $0xf8] sm:$0xff] %vm2083, %v2050
        %v2116 = vrot.slane %v947, 2
        %v2117 = vrot.slane %v948, 2
        %v2118 = vsel %vm1240, %v2116, %v2117
        %v2119 = vrot.slane %v949, 2
        %v2120 = vsel %vm1240, %v2117, %v2119
        %2121 = vrot.lane.b32.xlu0 %v1253, 24
        %v2122 = vpop.permute.xlu0 %2121
        %2123 = vrot.lane.b32.xlu0 %v1255, 24
        %v2124 = vpop.permute.xlu0 %2123
        %2125 = vrot.lane.b32.xlu0 %v1258, 24
        %v2126 = vpop.permute.xlu0 %2125
        %2127 = vrot.lane.b32.xlu0 %v1260, 24
        %v2128 = vpop.permute.xlu0 %2127
        %2129 = vrot.lane.b32.xlu0 %v1263, 24
        %v2130 = vpop.permute.xlu0 %2129
        %2131 = vrot.lane.b32.xlu0 %v1265, 24
        %v2132 = vpop.permute.xlu0 %2131
        %2133 = vrot.lane.b32.xlu0 %v1268, 24
        %v2134 = vpop.permute.xlu0 %2133
        %2135 = vrot.lane.b32.xlu0 %v1270, 24
        %v2136 = vpop.permute.xlu0 %2135
        %2137 = vrot.lane.b32.xlu0 %v1273, 24
        %v2138 = vpop.permute.xlu0 %2137
        %2139 = vrot.lane.b32.xlu0 %v1275, 24
        %v2140 = vpop.permute.xlu0 %2139
        %2141 = vrot.lane.b32.xlu0 %v1278, 24
        %v2142 = vpop.permute.xlu0 %2141
        %2143 = vrot.lane.b32.xlu0 %v1280, 24
        %v2144 = vpop.permute.xlu0 %2143
        %2145 = vrot.lane.b32.xlu0 %v1283, 24
        %v2146 = vpop.permute.xlu0 %2145
        %2147 = vrot.lane.b32.xlu0 %v1285, 24
        %v2148 = vpop.permute.xlu0 %2147
        %2149 = vrot.lane.b32.xlu0 %v1288, 24
        %v2150 = vpop.permute.xlu0 %2149
        %2151 = vrot.lane.b32.xlu0 %v1290, 24
        %v2152 = vpop.permute.xlu0 %2151
        %2153 = vrot.lane.b32.xlu0 %v1293, 24
        %v2154 = vpop.permute.xlu0 %2153
        %2155 = vrot.lane.b32.xlu0 %v1295, 24
        %v2156 = vpop.permute.xlu0 %2155
        %2157 = vrot.lane.b32.xlu0 %v1298, 24
        %v2158 = vpop.permute.xlu0 %2157
        %2159 = vrot.lane.b32.xlu0 %v1300, 24
        %v2160 = vpop.permute.xlu0 %2159
        %2161 = vrot.lane.b32.xlu0 %v1303, 24
        %v2162 = vpop.permute.xlu0 %2161
        %2163 = vrot.lane.b32.xlu0 %v1305, 24
        %v2164 = vpop.permute.xlu0 %2163
        %2165 = vrot.lane.b32.xlu0 %v1308, 24
        %v2166 = vpop.permute.xlu0 %2165
        %2167 = vrot.lane.b32.xlu0 %v1310, 24
        %v2168 = vpop.permute.xlu0 %2167
        %2169 = vrot.lane.b32.xlu0 %v1313, 24
        %v2170 = vpop.permute.xlu0 %2169
        %2171 = vrot.lane.b32.xlu0 %v1315, 24
        %v2172 = vpop.permute.xlu0 %2171
        %2173 = vrot.lane.b32.xlu0 %v1318, 24
        %v2174 = vpop.permute.xlu0 %2173
        %2175 = vrot.lane.b32.xlu0 %v1320, 24
        %v2176 = vpop.permute.xlu0 %2175
        %2177 = vrot.lane.b32.xlu0 %v1718, 24
        %v2178 = vpop.permute.xlu0 %2177
        %2179 = vrot.lane.b32.xlu0 %v1720, 24
        %v2180 = vpop.permute.xlu0 %2179
        %2181 = vrot.lane.b32.xlu0 %v2118, 24
        %v2182 = vpop.permute.xlu0 %2181
        %2183 = vrot.lane.b32.xlu0 %v2120, 24
        %v2184 = vpop.permute.xlu0 %2183
        %vm2217 = vcmask 220352
        %2218 = vst.msk [vmem:[#allocation3] sm:$0xff] %vm2217, %v2122
        %2219 = vst.msk [vmem:[#allocation3 + $0x8] sm:$0xff] %vm2217, %v2124
        %2220 = vst.msk [vmem:[#allocation3 + $0x10] sm:$0xff] %vm2217, %v2126
        %2221 = vst.msk [vmem:[#allocation3 + $0x18] sm:$0xff] %vm2217, %v2128
        %2222 = vst.msk [vmem:[#allocation3 + $0x20] sm:$0xff] %vm2217, %v2130
        %2223 = vst.msk [vmem:[#allocation3 + $0x28] sm:$0xff] %vm2217, %v2132
        %2224 = vst.msk [vmem:[#allocation3 + $0x30] sm:$0xff] %vm2217, %v2134
        %2225 = vst.msk [vmem:[#allocation3 + $0x38] sm:$0xff] %vm2217, %v2136
        %2226 = vst.msk [vmem:[#allocation3 + $0x40] sm:$0xff] %vm2217, %v2138
        %2227 = vst.msk [vmem:[#allocation3 + $0x48] sm:$0xff] %vm2217, %v2140
        %2228 = vst.msk [vmem:[#allocation3 + $0x50] sm:$0xff] %vm2217, %v2142
        %2229 = vst.msk [vmem:[#allocation3 + $0x58] sm:$0xff] %vm2217, %v2144
        %2230 = vst.msk [vmem:[#allocation3 + $0x60] sm:$0xff] %vm2217, %v2146
        %2231 = vst.msk [vmem:[#allocation3 + $0x68] sm:$0xff] %vm2217, %v2148
        %2232 = vst.msk [vmem:[#allocation3 + $0x70] sm:$0xff] %vm2217, %v2150
        %2233 = vst.msk [vmem:[#allocation3 + $0x78] sm:$0xff] %vm2217, %v2152
        %2234 = vst.msk [vmem:[#allocation3 + $0x80] sm:$0xff] %vm2217, %v2154
        %2235 = vst.msk [vmem:[#allocation3 + $0x88] sm:$0xff] %vm2217, %v2156
        %2236 = vst.msk [vmem:[#allocation3 + $0x90] sm:$0xff] %vm2217, %v2158
        %2237 = vst.msk [vmem:[#allocation3 + $0x98] sm:$0xff] %vm2217, %v2160
        %2238 = vst.msk [vmem:[#allocation3 + $0xa0] sm:$0xff] %vm2217, %v2162
        %2239 = vst.msk [vmem:[#allocation3 + $0xa8] sm:$0xff] %vm2217, %v2164
        %2240 = vst.msk [vmem:[#allocation3 + $0xb0] sm:$0xff] %vm2217, %v2166
        %2241 = vst.msk [vmem:[#allocation3 + $0xb8] sm:$0xff] %vm2217, %v2168
        %2242 = vst.msk [vmem:[#allocation3 + $0xc0] sm:$0xff] %vm2217, %v2170
        %2243 = vst.msk [vmem:[#allocation3 + $0xc8] sm:$0xff] %vm2217, %v2172
        %2244 = vst.msk [vmem:[#allocation3 + $0xd0] sm:$0xff] %vm2217, %v2174
        %2245 = vst.msk [vmem:[#allocation3 + $0xd8] sm:$0xff] %vm2217, %v2176
        %2246 = vst.msk [vmem:[#allocation3 + $0xe0] sm:$0xff] %vm2217, %v2178
        %2247 = vst.msk [vmem:[#allocation3 + $0xe8] sm:$0xff] %vm2217, %v2180
        %2248 = vst.msk [vmem:[#allocation3 + $0xf0] sm:$0xff] %vm2217, %v2182
        %2249 = vst.msk [vmem:[#allocation3 + $0xf8] sm:$0xff] %vm2217, %v2184
        %v2250 = vld [vmem:[#allocation3] sm:$0xff]
        %v2251 = vld [vmem:[#allocation3 + $0x8] sm:$0xff]
        %v2252 = vld [vmem:[#allocation3 + $0x10] sm:$0xff]
        %v2253 = vld [vmem:[#allocation3 + $0x18] sm:$0xff]
        %v2254 = vld [vmem:[#allocation3 + $0x20] sm:$0xff]
        %v2255 = vld [vmem:[#allocation3 + $0x28] sm:$0xff]
        %v2256 = vld [vmem:[#allocation3 + $0x30] sm:$0xff]
        %v2257 = vld [vmem:[#allocation3 + $0x38] sm:$0xff]
        %v2258 = vld [vmem:[#allocation3 + $0x40] sm:$0xff]
        %v2259 = vld [vmem:[#allocation3 + $0x48] sm:$0xff]
        %v2260 = vld [vmem:[#allocation3 + $0x50] sm:$0xff]
        %v2261 = vld [vmem:[#allocation3 + $0x58] sm:$0xff]
        %v2262 = vld [vmem:[#allocation3 + $0x60] sm:$0xff]
        %v2263 = vld [vmem:[#allocation3 + $0x68] sm:$0xff]
        %v2264 = vld [vmem:[#allocation3 + $0x70] sm:$0xff]
        %v2265 = vld [vmem:[#allocation3 + $0x78] sm:$0xff]
        %v2266 = vld [vmem:[#allocation3 + $0x80] sm:$0xff]
        %v2267 = vld [vmem:[#allocation3 + $0x88] sm:$0xff]
        %v2268 = vld [vmem:[#allocation3 + $0x90] sm:$0xff]
        %v2269 = vld [vmem:[#allocation3 + $0x98] sm:$0xff]
        %v2270 = vld [vmem:[#allocation3 + $0xa0] sm:$0xff]
        %v2271 = vld [vmem:[#allocation3 + $0xa8] sm:$0xff]
        %v2272 = vld [vmem:[#allocation3 + $0xb0] sm:$0xff]
        %v2273 = vld [vmem:[#allocation3 + $0xb8] sm:$0xff]
        %v2274 = vld [vmem:[#allocation3 + $0xc0] sm:$0xff]
        %v2275 = vld [vmem:[#allocation3 + $0xc8] sm:$0xff]
        %v2276 = vld [vmem:[#allocation3 + $0xd0] sm:$0xff]
        %v2277 = vld [vmem:[#allocation3 + $0xd8] sm:$0xff]
        %v2278 = vld [vmem:[#allocation3 + $0xe0] sm:$0xff]
        %v2279 = vld [vmem:[#allocation3 + $0xe8] sm:$0xff]
        %v2280 = vld [vmem:[#allocation3 + $0xf0] sm:$0xff]
        %v2281 = vld [vmem:[#allocation3 + $0xf8] sm:$0xff]
        %v2282 = vld [vmem:[%s1] sm:$0xff]
        %v2283 = vld [vmem:[%s1 + $0x8] sm:$0xff]
        %v2284 = vld [vmem:[%s1 + $0x10] sm:$0xff]
        %v2285 = vld [vmem:[%s1 + $0x18] sm:$0x7]
        %v2286 = vld [vmem:[%s2] sm:$0x1]
        %v2288 = vlaneseq
        %v2289 = vshrl.u32 %v2288, 7
        %v2290 = vsub.s32 0, %v2289
        %v2291 = vrot.slane %v2286, %v2290
        %vm2293 = vcmask 220160
        %v2295 = vsel %vm2293, %v2250, 0
        %v2298 = vsel %vm2293, %v2251, 0
        %v2301 = vsel %vm2293, %v2252, 0
        %v2304 = vsel %vm2293, %v2253, 0
        %v2307 = vsel %vm2293, %v2254, 0
        %v2310 = vsel %vm2293, %v2255, 0
        %v2313 = vsel %vm2293, %v2256, 0
        %v2316 = vsel %vm2293, %v2257, 0
        %v2319 = vsel %vm2293, %v2258, 0
        %v2322 = vsel %vm2293, %v2259, 0
        %v2325 = vsel %vm2293, %v2260, 0
        %v2328 = vsel %vm2293, %v2261, 0
        %v2331 = vsel %vm2293, %v2262, 0
        %v2334 = vsel %vm2293, %v2263, 0
        %v2337 = vsel %vm2293, %v2264, 0
        %v2340 = vsel %vm2293, %v2265, 0
        %v2343 = vsel %vm2293, %v2266, 0
        %v2346 = vsel %vm2293, %v2267, 0
        %v2349 = vsel %vm2293, %v2268, 0
        %v2352 = vsel %vm2293, %v2269, 0
        %v2355 = vsel %vm2293, %v2270, 0
        %v2358 = vsel %vm2293, %v2271, 0
        %v2361 = vsel %vm2293, %v2272, 0
        %v2364 = vsel %vm2293, %v2273, 0
        %v2367 = vsel %vm2293, %v2274, 0
        %v2370 = vsel %vm2293, %v2275, 0
        %v2373 = vsel %vm2293, %v2276, 0
        %v2376 = vsel %vm2293, %v2277, 0
        %v2379 = vsel %vm2293, %v2278, 0
        %v2382 = vsel %vm2293, %v2279, 0
        %v2385 = vsel %vm2293, %v2280, 0
        %v2388 = vsel %vm2293, %v2281, 0
        %vm2390 = vcmask 1042432
        %v2392 = vsel %vm2390, %v2285, 0
        %2394 = vmatprep.subr.mxu0 0.0
        %2395 = vmatpush1.msra.mxu0 %v2282
        %2396 = vmatprep.subr.mxu0 0.0
        %2397 = vmatpush1.msra.mxu0 %v2283
        %2398 = vmatprep.subr.mxu0 0.0
        %2399 = vmatpush1.msra.mxu0 %v2284
        %2400 = vmatprep.subr.mxu0 0.0
        %2401 = vmatpush1.msra.mxu0 %v2392
        %2402 = vmatprep.subr.mxu0 0.0
        %2403 = vmatpush1.msra.mxu0 0.0
        %2404 = vmatprep.subr.mxu0 0.0
        %2405 = vmatpush1.msra.mxu0 0.0
        %2406 = vmatprep.subr.mxu0 0.0
        %2407 = vmatpush1.msra.mxu0 0.0
        %2408 = vmatprep.subr.mxu0 0.0
        %2409 = vmatpush1.msra.mxu0 0.0
        %2410 = vmatprep.subr.mxu0 0.0
        %2411 = vmatpush1.msra.mxu0 0.0
        %2412 = vmatprep.subr.mxu0 0.0
        %2413 = vmatpush1.msra.mxu0 0.0
        %2414 = vmatprep.subr.mxu0 0.0
        %2415 = vmatpush1.msra.mxu0 0.0
        %2416 = vmatprep.subr.mxu0 0.0
        %2417 = vmatpush1.msra.mxu0 0.0
        %2418 = vmatprep.subr.mxu0 0.0
        %2419 = vmatpush1.msra.mxu0 0.0
        %2420 = vmatprep.subr.mxu0 0.0
        %2421 = vmatpush1.msra.mxu0 0.0
        %2422 = vmatprep.subr.mxu0 0.0
        %2423 = vmatpush1.msra.mxu0 0.0
        %2424 = vmatprep.subr.mxu0 0.0
        %2425 = vmatpush1.msra.mxu0 0.0
        %2426 = vmatprep.subr.mxu0 0.0
        %2427 = vmatpush1.msra.mxu0 0.0
        %2428 = vmatprep.subr.mxu0 0.0
        %2429 = vmatpush1.msra.mxu0 0.0
        %2430 = vmatprep.subr.mxu0 0.0
        %2431 = vmatpush1.msra.mxu0 0.0
        %2432 = vmatprep.subr.mxu0 0.0
        %2433 = vmatpush1.msra.mxu0 0.0
        %2434 = vmatprep.subr.mxu0 0.0
        %2435 = vmatpush1.msra.mxu0 0.0
        %2436 = vmatprep.subr.mxu0 0.0
        %2437 = vmatpush1.msra.mxu0 0.0
        %2438 = vmatprep.subr.mxu0 0.0
        %2439 = vmatpush1.msra.mxu0 0.0
        %2440 = vmatprep.subr.mxu0 0.0
        %2441 = vmatpush1.msra.mxu0 0.0
        %2442 = vmatprep.subr.mxu0 0.0
        %2443 = vmatpush1.msra.mxu0 0.0
        %2444 = vmatprep.subr.mxu0 0.0
        %2445 = vmatpush1.msra.mxu0 0.0
        %2446 = vmatprep.subr.mxu0 0.0
        %2447 = vmatpush1.msra.mxu0 0.0
        %2448 = vmatprep.subr.mxu0 0.0
        %2449 = vmatpush1.msra.mxu0 0.0
        %2450 = vmatprep.subr.mxu0 0.0
        %2451 = vmatpush1.msra.mxu0 0.0
        %2452 = vmatprep.subr.mxu0 0.0
        %2453 = vmatpush1.msra.mxu0 0.0
        %2454 = vmatprep.subr.mxu0 0.0
        %2455 = vmatpush1.msra.mxu0 0.0
        %2456 = vmatprep.subr.mxu0 0.0
        %2457 = vmatpush1.msra.mxu0 0.0
        %2458 = vmatprep.mubr.f32.mxu0 0.0
        %2459 = vmatmul.mubr.f32.gmra.mrb[0].mxu0 %v2295
        %v2460 = vpop.f32.mrb[0].mxu0
        %v2461 = vadd.f32 %v2291, %v2460
        %v2462 = vpop.f32.mrb[0].mxu0
        %2463 = vmatprep.mubr.f32.mxu0 0.0
        %2464 = vmatmul.mubr.f32.gmra.mrb[0].mxu0 %v2298
        %v2465 = vpop.f32.mrb[0].mxu0
        %v2466 = vadd.f32 %v2291, %v2465
        %v2467 = vpop.f32.mrb[0].mxu0
        %2468 = vmatprep.mubr.f32.mxu0 0.0
        %2469 = vmatmul.mubr.f32.gmra.mrb[0].mxu0 %v2301
        %v2470 = vpop.f32.mrb[0].mxu0
        %v2471 = vadd.f32 %v2291, %v2470
        %v2472 = vpop.f32.mrb[0].mxu0
        %2473 = vmatprep.mubr.f32.mxu0 0.0
        %2474 = vmatmul.mubr.f32.gmra.mrb[0].mxu0 %v2304
        %v2475 = vpop.f32.mrb[0].mxu0
        %v2476 = vadd.f32 %v2291, %v2475
        %v2477 = vpop.f32.mrb[0].mxu0
        %2478 = vmatprep.mubr.f32.mxu0 0.0
        %2479 = vmatmul.mubr.f32.gmra.mrb[0].mxu0 %v2307
        %v2480 = vpop.f32.mrb[0].mxu0
        %v2481 = vadd.f32 %v2291, %v2480
        %v2482 = vpop.f32.mrb[0].mxu0
        %2483 = vmatprep.mubr.f32.mxu0 0.0
        %2484 = vmatmul.mubr.f32.gmra.mrb[0].mxu0 %v2310
        %v2485 = vpop.f32.mrb[0].mxu0
        %v2486 = vadd.f32 %v2291, %v2485
        %v2487 = vpop.f32.mrb[0].mxu0
        %2488 = vmatprep.mubr.f32.mxu0 0.0
        %2489 = vmatmul.mubr.f32.gmra.mrb[0].mxu0 %v2313
        %v2490 = vpop.f32.mrb[0].mxu0
        %v2491 = vadd.f32 %v2291, %v2490
        %v2492 = vpop.f32.mrb[0].mxu0
        %2493 = vmatprep.mubr.f32.mxu0 0.0
        %2494 = vmatmul.mubr.f32.gmra.mrb[0].mxu0 %v2316
        %v2495 = vpop.f32.mrb[0].mxu0
        %v2496 = vadd.f32 %v2291, %v2495
        %v2497 = vpop.f32.mrb[0].mxu0
        %2498 = vmatprep.mubr.f32.mxu0 0.0
        %2499 = vmatmul.mubr.f32.gmra.mrb[0].mxu0 %v2319
        %v2500 = vpop.f32.mrb[0].mxu0
        %v2501 = vadd.f32 %v2291, %v2500
        %v2502 = vpop.f32.mrb[0].mxu0
        %2503 = vmatprep.mubr.f32.mxu0 0.0
        %2504 = vmatmul.mubr.f32.gmra.mrb[0].mxu0 %v2322
        %v2505 = vpop.f32.mrb[0].mxu0
        %v2506 = vadd.f32 %v2291, %v2505
        %v2507 = vpop.f32.mrb[0].mxu0
        %2508 = vmatprep.mubr.f32.mxu0 0.0
        %2509 = vmatmul.mubr.f32.gmra.mrb[0].mxu0 %v2325
        %v2510 = vpop.f32.mrb[0].mxu0
        %v2511 = vadd.f32 %v2291, %v2510
        %v2512 = vpop.f32.mrb[0].mxu0
        %2513 = vmatprep.mubr.f32.mxu0 0.0
        %2514 = vmatmul.mubr.f32.gmra.mrb[0].mxu0 %v2328
        %v2515 = vpop.f32.mrb[0].mxu0
        %v2516 = vadd.f32 %v2291, %v2515
        %v2517 = vpop.f32.mrb[0].mxu0
        %2518 = vmatprep.mubr.f32.mxu0 0.0
        %2519 = vmatmul.mubr.f32.gmra.mrb[0].mxu0 %v2331
        %v2520 = vpop.f32.mrb[0].mxu0
        %v2521 = vadd.f32 %v2291, %v2520
        %v2522 = vpop.f32.mrb[0].mxu0
        %2523 = vmatprep.mubr.f32.mxu0 0.0
        %2524 = vmatmul.mubr.f32.gmra.mrb[0].mxu0 %v2334
        %v2525 = vpop.f32.mrb[0].mxu0
        %v2526 = vadd.f32 %v2291, %v2525
        %v2527 = vpop.f32.mrb[0].mxu0
        %2528 = vmatprep.mubr.f32.mxu0 0.0
        %2529 = vmatmul.mubr.f32.gmra.mrb[0].mxu0 %v2337
        %v2530 = vpop.f32.mrb[0].mxu0
        %v2531 = vadd.f32 %v2291, %v2530
        %v2532 = vpop.f32.mrb[0].mxu0
        %2533 = vmatprep.mubr.f32.mxu0 0.0
        %2534 = vmatmul.mubr.f32.gmra.mrb[0].mxu0 %v2340
        %v2535 = vpop.f32.mrb[0].mxu0
        %v2536 = vadd.f32 %v2291, %v2535
        %v2537 = vpop.f32.mrb[0].mxu0
        %2538 = vmatprep.mubr.f32.mxu0 0.0
        %2539 = vmatmul.mubr.f32.gmra.mrb[0].mxu0 %v2343
        %v2540 = vpop.f32.mrb[0].mxu0
        %v2541 = vadd.f32 %v2291, %v2540
        %v2542 = vpop.f32.mrb[0].mxu0
        %2543 = vmatprep.mubr.f32.mxu0 0.0
        %2544 = vmatmul.mubr.f32.gmra.mrb[0].mxu0 %v2346
        %v2545 = vpop.f32.mrb[0].mxu0
        %v2546 = vadd.f32 %v2291, %v2545
        %v2547 = vpop.f32.mrb[0].mxu0
        %2548 = vmatprep.mubr.f32.mxu0 0.0
        %2549 = vmatmul.mubr.f32.gmra.mrb[0].mxu0 %v2349
        %v2550 = vpop.f32.mrb[0].mxu0
        %v2551 = vadd.f32 %v2291, %v2550
        %v2552 = vpop.f32.mrb[0].mxu0
        %2553 = vmatprep.mubr.f32.mxu0 0.0
        %2554 = vmatmul.mubr.f32.gmra.mrb[0].mxu0 %v2352
        %v2555 = vpop.f32.mrb[0].mxu0
        %v2556 = vadd.f32 %v2291, %v2555
        %v2557 = vpop.f32.mrb[0].mxu0
        %2558 = vmatprep.mubr.f32.mxu0 0.0
        %2559 = vmatmul.mubr.f32.gmra.mrb[0].mxu0 %v2355
        %v2560 = vpop.f32.mrb[0].mxu0
        %v2561 = vadd.f32 %v2291, %v2560
        %v2562 = vpop.f32.mrb[0].mxu0
        %2563 = vmatprep.mubr.f32.mxu0 0.0
        %2564 = vmatmul.mubr.f32.gmra.mrb[0].mxu0 %v2358
        %v2565 = vpop.f32.mrb[0].mxu0
        %v2566 = vadd.f32 %v2291, %v2565
        %v2567 = vpop.f32.mrb[0].mxu0
        %2568 = vmatprep.mubr.f32.mxu0 0.0
        %2569 = vmatmul.mubr.f32.gmra.mrb[0].mxu0 %v2361
        %v2570 = vpop.f32.mrb[0].mxu0
        %v2571 = vadd.f32 %v2291, %v2570
        %v2572 = vpop.f32.mrb[0].mxu0
        %2573 = vmatprep.mubr.f32.mxu0 0.0
        %2574 = vmatmul.mubr.f32.gmra.mrb[0].mxu0 %v2364
        %v2575 = vpop.f32.mrb[0].mxu0
        %v2576 = vadd.f32 %v2291, %v2575
        %v2577 = vpop.f32.mrb[0].mxu0
        %2578 = vmatprep.mubr.f32.mxu0 0.0
        %2579 = vmatmul.mubr.f32.gmra.mrb[0].mxu0 %v2367
        %v2580 = vpop.f32.mrb[0].mxu0
        %v2581 = vadd.f32 %v2291, %v2580
        %v2582 = vpop.f32.mrb[0].mxu0
        %2583 = vmatprep.mubr.f32.mxu0 0.0
        %2584 = vmatmul.mubr.f32.gmra.mrb[0].mxu0 %v2370
        %v2585 = vpop.f32.mrb[0].mxu0
        %v2586 = vadd.f32 %v2291, %v2585
        %v2587 = vpop.f32.mrb[0].mxu0
        %2588 = vmatprep.mubr.f32.mxu0 0.0
        %2589 = vmatmul.mubr.f32.gmra.mrb[0].mxu0 %v2373
        %v2590 = vpop.f32.mrb[0].mxu0
        %v2591 = vadd.f32 %v2291, %v2590
        %v2592 = vpop.f32.mrb[0].mxu0
        %2593 = vmatprep.mubr.f32.mxu0 0.0
        %2594 = vmatmul.mubr.f32.gmra.mrb[0].mxu0 %v2376
        %v2595 = vpop.f32.mrb[0].mxu0
        %v2596 = vadd.f32 %v2291, %v2595
        %v2597 = vpop.f32.mrb[0].mxu0
        %2598 = vmatprep.mubr.f32.mxu0 0.0
        %2599 = vmatmul.mubr.f32.gmra.mrb[0].mxu0 %v2379
        %v2600 = vpop.f32.mrb[0].mxu0
        %v2601 = vadd.f32 %v2291, %v2600
        %v2602 = vpop.f32.mrb[0].mxu0
        %2603 = vmatprep.mubr.f32.mxu0 0.0
        %2604 = vmatmul.mubr.f32.gmra.mrb[0].mxu0 %v2382
        %v2605 = vpop.f32.mrb[0].mxu0
        %v2606 = vadd.f32 %v2291, %v2605
        %v2607 = vpop.f32.mrb[0].mxu0
        %2608 = vmatprep.mubr.f32.mxu0 0.0
        %2609 = vmatmul.mubr.f32.gmra.mrb[0].mxu0 %v2385
        %v2610 = vpop.f32.mrb[0].mxu0
        %v2611 = vadd.f32 %v2291, %v2610
        %v2612 = vpop.f32.mrb[0].mxu0
        %2613 = vmatprep.mubr.f32.mxu0 0.0
        %2614 = vmatmul.mubr.f32.gmra.mrb[0].mxu0 %v2388
        %v2615 = vpop.f32.mrb[0].mxu0
        %v2616 = vadd.f32 %v2291, %v2615
        %v2617 = vpop.f32.mrb[0].mxu0
        %2618 = vdwg.mxu0
        %v2619 = vmax.f32 %v2461, 0.0
        %v2620 = vmax.f32 %v2466, 0.0
        %v2621 = vmax.f32 %v2471, 0.0
        %v2622 = vmax.f32 %v2476, 0.0
        %v2623 = vmax.f32 %v2481, 0.0
        %v2624 = vmax.f32 %v2486, 0.0
        %v2625 = vmax.f32 %v2491, 0.0
        %v2626 = vmax.f32 %v2496, 0.0
        %v2627 = vmax.f32 %v2501, 0.0
        %v2628 = vmax.f32 %v2506, 0.0
        %v2629 = vmax.f32 %v2511, 0.0
        %v2630 = vmax.f32 %v2516, 0.0
        %v2631 = vmax.f32 %v2521, 0.0
        %v2632 = vmax.f32 %v2526, 0.0
        %v2633 = vmax.f32 %v2531, 0.0
        %v2634 = vmax.f32 %v2536, 0.0
        %v2635 = vmax.f32 %v2541, 0.0
        %v2636 = vmax.f32 %v2546, 0.0
        %v2637 = vmax.f32 %v2551, 0.0
        %v2638 = vmax.f32 %v2556, 0.0
        %v2639 = vmax.f32 %v2561, 0.0
        %v2640 = vmax.f32 %v2566, 0.0
        %v2641 = vmax.f32 %v2571, 0.0
        %v2642 = vmax.f32 %v2576, 0.0
        %v2643 = vmax.f32 %v2581, 0.0
        %v2644 = vmax.f32 %v2586, 0.0
        %v2645 = vmax.f32 %v2591, 0.0
        %v2646 = vmax.f32 %v2596, 0.0
        %v2647 = vmax.f32 %v2601, 0.0
        %v2648 = vmax.f32 %v2606, 0.0
        %v2649 = vmax.f32 %v2611, 0.0
        %v2650 = vmax.f32 %v2616, 0.0
        %vm2651 = vcmask 130048
        %v2652 = vsel %vm2651, %v2619, -inf
        %v2653 = vsel %vm2651, %v2621, -inf
        %v2654 = vmax.f32 %v2652, %v2653
        %v2655 = vsel %vm2651, %v2620, -inf
        %v2656 = vsel %vm2651, %v2622, -inf
        %v2657 = vmax.f32 %v2655, %v2656
        %v2658 = vsel %vm2651, %v2623, -inf
        %v2659 = vsel %vm2651, %v2625, -inf
        %v2660 = vmax.f32 %v2658, %v2659
        %v2661 = vsel %vm2651, %v2624, -inf
        %v2662 = vsel %vm2651, %v2626, -inf
        %v2663 = vmax.f32 %v2661, %v2662
        %v2664 = vsel %vm2651, %v2627, -inf
        %v2665 = vsel %vm2651, %v2629, -inf
        %v2666 = vmax.f32 %v2664, %v2665
        %v2667 = vsel %vm2651, %v2628, -inf
        %v2668 = vsel %vm2651, %v2630, -inf
        %v2669 = vmax.f32 %v2667, %v2668
        %v2670 = vsel %vm2651, %v2631, -inf
        %v2671 = vsel %vm2651, %v2633, -inf
        %v2672 = vmax.f32 %v2670, %v2671
        %v2673 = vsel %vm2651, %v2632, -inf
        %v2674 = vsel %vm2651, %v2634, -inf
        %v2675 = vmax.f32 %v2673, %v2674
        %v2676 = vsel %vm2651, %v2635, -inf
        %v2677 = vsel %vm2651, %v2637, -inf
        %v2678 = vmax.f32 %v2676, %v2677
        %v2679 = vsel %vm2651, %v2636, -inf
        %v2680 = vsel %vm2651, %v2638, -inf
        %v2681 = vmax.f32 %v2679, %v2680
        %v2682 = vsel %vm2651, %v2639, -inf
        %v2683 = vsel %vm2651, %v2641, -inf
        %v2684 = vmax.f32 %v2682, %v2683
        %v2685 = vsel %vm2651, %v2640, -inf
        %v2686 = vsel %vm2651, %v2642, -inf
        %v2687 = vmax.f32 %v2685, %v2686
        %v2688 = vsel %vm2651, %v2643, -inf
        %v2689 = vsel %vm2651, %v2645, -inf
        %v2690 = vmax.f32 %v2688, %v2689
        %v2691 = vsel %vm2651, %v2644, -inf
        %v2692 = vsel %vm2651, %v2646, -inf
        %v2693 = vmax.f32 %v2691, %v2692
        %v2694 = vsel %vm2651, %v2647, -inf
        %v2695 = vsel %vm2651, %v2649, -inf
        %v2696 = vmax.f32 %v2694, %v2695
        %v2697 = vsel %vm2651, %v2648, -inf
        %v2698 = vsel %vm2651, %v2650, -inf
        %v2699 = vmax.f32 %v2697, %v2698
        %v2716 = vcombine.high %v2654, %v2654
        %v2718 = vunpack.c.l.s4 1983009808
        %v2719 = vunpack.c.0.s8 %v2718
        %v2720 = vlaneseq
        %v2721 = vshrl.u32 %v2720, 7
        %v2722 = vsub.s32 %v2719, %v2721
        %v2723 = vrot.slane %v2654, %v2722
        %v2725 = vunpack.c.l.s4 1983009808
        %v2726 = vunpack.c.0.s8 %v2725
        %v2727 = vlaneseq
        %v2728 = vshrl.u32 %v2727, 7
        %v2729 = vsub.s32 %v2726, %v2728
        %v2730 = vrot.slane %v2716, %v2729
        %v2731 = vcombine.high %v2723, %v2723
        %v2732 = vcombine.high %v2730, %v2730
        %v2733 = vcombine.high %v2657, %v2657
        %v2735 = vunpack.c.l.s4 1983009808
        %v2736 = vunpack.c.0.s8 %v2735
        %v2737 = vlaneseq
        %v2738 = vshrl.u32 %v2737, 7
        %v2739 = vsub.s32 %v2736, %v2738
        %v2740 = vrot.slane %v2657, %v2739
        %v2742 = vunpack.c.l.s4 1983009808
        %v2743 = vunpack.c.0.s8 %v2742
        %v2744 = vlaneseq
        %v2745 = vshrl.u32 %v2744, 7
        %v2746 = vsub.s32 %v2743, %v2745
        %v2747 = vrot.slane %v2733, %v2746
        %v2748 = vcombine.high %v2740, %v2740
        %v2749 = vcombine.high %v2747, %v2747
        %v2750 = vcombine.high %v2660, %v2660
        %v2752 = vunpack.c.l.s4 1983009808
        %v2753 = vunpack.c.0.s8 %v2752
        %v2754 = vlaneseq
        %v2755 = vshrl.u32 %v2754, 7
        %v2756 = vsub.s32 %v2753, %v2755
        %v2757 = vrot.slane %v2660, %v2756
        %v2759 = vunpack.c.l.s4 1983009808
        %v2760 = vunpack.c.0.s8 %v2759
        %v2761 = vlaneseq
        %v2762 = vshrl.u32 %v2761, 7
        %v2763 = vsub.s32 %v2760, %v2762
        %v2764 = vrot.slane %v2750, %v2763
        %v2765 = vcombine.high %v2757, %v2757
        %v2766 = vcombine.high %v2764, %v2764
        %v2767 = vcombine.high %v2663, %v2663
        %v2769 = vunpack.c.l.s4 1983009808
        %v2770 = vunpack.c.0.s8 %v2769
        %v2771 = vlaneseq
        %v2772 = vshrl.u32 %v2771, 7
        %v2773 = vsub.s32 %v2770, %v2772
        %v2774 = vrot.slane %v2663, %v2773
        %v2776 = vunpack.c.l.s4 1983009808
        %v2777 = vunpack.c.0.s8 %v2776
        %v2778 = vlaneseq
        %v2779 = vshrl.u32 %v2778, 7
        %v2780 = vsub.s32 %v2777, %v2779
        %v2781 = vrot.slane %v2767, %v2780
        %v2782 = vcombine.high %v2774, %v2774
        %v2783 = vcombine.high %v2781, %v2781
        %v2784 = vcombine.high %v2666, %v2666
        %v2786 = vunpack.c.l.s4 1983009808
        %v2787 = vunpack.c.0.s8 %v2786
        %v2788 = vlaneseq
        %v2789 = vshrl.u32 %v2788, 7
        %v2790 = vsub.s32 %v2787, %v2789
        %v2791 = vrot.slane %v2666, %v2790
        %v2793 = vunpack.c.l.s4 1983009808
        %v2794 = vunpack.c.0.s8 %v2793
        %v2795 = vlaneseq
        %v2796 = vshrl.u32 %v2795, 7
        %v2797 = vsub.s32 %v2794, %v2796
        %v2798 = vrot.slane %v2784, %v2797
        %v2799 = vcombine.high %v2791, %v2791
        %v2800 = vcombine.high %v2798, %v2798
        %v2801 = vcombine.high %v2669, %v2669
        %v2803 = vunpack.c.l.s4 1983009808
        %v2804 = vunpack.c.0.s8 %v2803
        %v2805 = vlaneseq
        %v2806 = vshrl.u32 %v2805, 7
        %v2807 = vsub.s32 %v2804, %v2806
        %v2808 = vrot.slane %v2669, %v2807
        %v2810 = vunpack.c.l.s4 1983009808
        %v2811 = vunpack.c.0.s8 %v2810
        %v2812 = vlaneseq
        %v2813 = vshrl.u32 %v2812, 7
        %v2814 = vsub.s32 %v2811, %v2813
        %v2815 = vrot.slane %v2801, %v2814
        %v2816 = vcombine.high %v2808, %v2808
        %v2817 = vcombine.high %v2815, %v2815
        %v2818 = vcombine.high %v2672, %v2672
        %v2820 = vunpack.c.l.s4 1983009808
        %v2821 = vunpack.c.0.s8 %v2820
        %v2822 = vlaneseq
        %v2823 = vshrl.u32 %v2822, 7
        %v2824 = vsub.s32 %v2821, %v2823
        %v2825 = vrot.slane %v2672, %v2824
        %v2827 = vunpack.c.l.s4 1983009808
        %v2828 = vunpack.c.0.s8 %v2827
        %v2829 = vlaneseq
        %v2830 = vshrl.u32 %v2829, 7
        %v2831 = vsub.s32 %v2828, %v2830
        %v2832 = vrot.slane %v2818, %v2831
        %v2833 = vcombine.high %v2825, %v2825
        %v2834 = vcombine.high %v2832, %v2832
        %v2835 = vcombine.high %v2675, %v2675
        %v2837 = vunpack.c.l.s4 1983009808
        %v2838 = vunpack.c.0.s8 %v2837
        %v2839 = vlaneseq
        %v2840 = vshrl.u32 %v2839, 7
        %v2841 = vsub.s32 %v2838, %v2840
        %v2842 = vrot.slane %v2675, %v2841
        %v2844 = vunpack.c.l.s4 1983009808
        %v2845 = vunpack.c.0.s8 %v2844
        %v2846 = vlaneseq
        %v2847 = vshrl.u32 %v2846, 7
        %v2848 = vsub.s32 %v2845, %v2847
        %v2849 = vrot.slane %v2835, %v2848
        %v2850 = vcombine.high %v2842, %v2842
        %v2851 = vcombine.high %v2849, %v2849
        %v2852 = vcombine.high %v2678, %v2678
        %v2854 = vunpack.c.l.s4 1983009808
        %v2855 = vunpack.c.0.s8 %v2854
        %v2856 = vlaneseq
        %v2857 = vshrl.u32 %v2856, 7
        %v2858 = vsub.s32 %v2855, %v2857
        %v2859 = vrot.slane %v2678, %v2858
        %v2861 = vunpack.c.l.s4 1983009808
        %v2862 = vunpack.c.0.s8 %v2861
        %v2863 = vlaneseq
        %v2864 = vshrl.u32 %v2863, 7
        %v2865 = vsub.s32 %v2862, %v2864
        %v2866 = vrot.slane %v2852, %v2865
        %v2867 = vcombine.high %v2859, %v2859
        %v2868 = vcombine.high %v2866, %v2866
        %v2869 = vcombine.high %v2681, %v2681
        %v2871 = vunpack.c.l.s4 1983009808
        %v2872 = vunpack.c.0.s8 %v2871
        %v2873 = vlaneseq
        %v2874 = vshrl.u32 %v2873, 7
        %v2875 = vsub.s32 %v2872, %v2874
        %v2876 = vrot.slane %v2681, %v2875
        %v2878 = vunpack.c.l.s4 1983009808
        %v2879 = vunpack.c.0.s8 %v2878
        %v2880 = vlaneseq
        %v2881 = vshrl.u32 %v2880, 7
        %v2882 = vsub.s32 %v2879, %v2881
        %v2883 = vrot.slane %v2869, %v2882
        %v2884 = vcombine.high %v2876, %v2876
        %v2885 = vcombine.high %v2883, %v2883
        %v2886 = vcombine.high %v2684, %v2684
        %v2888 = vunpack.c.l.s4 1983009808
        %v2889 = vunpack.c.0.s8 %v2888
        %v2890 = vlaneseq
        %v2891 = vshrl.u32 %v2890, 7
        %v2892 = vsub.s32 %v2889, %v2891
        %v2893 = vrot.slane %v2684, %v2892
        %v2895 = vunpack.c.l.s4 1983009808
        %v2896 = vunpack.c.0.s8 %v2895
        %v2897 = vlaneseq
        %v2898 = vshrl.u32 %v2897, 7
        %v2899 = vsub.s32 %v2896, %v2898
        %v2900 = vrot.slane %v2886, %v2899
        %v2901 = vcombine.high %v2893, %v2893
        %v2902 = vcombine.high %v2900, %v2900
        %v2903 = vcombine.high %v2687, %v2687
        %v2905 = vunpack.c.l.s4 1983009808
        %v2906 = vunpack.c.0.s8 %v2905
        %v2907 = vlaneseq
        %v2908 = vshrl.u32 %v2907, 7
        %v2909 = vsub.s32 %v2906, %v2908
        %v2910 = vrot.slane %v2687, %v2909
        %v2912 = vunpack.c.l.s4 1983009808
        %v2913 = vunpack.c.0.s8 %v2912
        %v2914 = vlaneseq
        %v2915 = vshrl.u32 %v2914, 7
        %v2916 = vsub.s32 %v2913, %v2915
        %v2917 = vrot.slane %v2903, %v2916
        %v2918 = vcombine.high %v2910, %v2910
        %v2919 = vcombine.high %v2917, %v2917
        %v2920 = vcombine.high %v2690, %v2690
        %v2922 = vunpack.c.l.s4 1983009808
        %v2923 = vunpack.c.0.s8 %v2922
        %v2924 = vlaneseq
        %v2925 = vshrl.u32 %v2924, 7
        %v2926 = vsub.s32 %v2923, %v2925
        %v2927 = vrot.slane %v2690, %v2926
        %v2929 = vunpack.c.l.s4 1983009808
        %v2930 = vunpack.c.0.s8 %v2929
        %v2931 = vlaneseq
        %v2932 = vshrl.u32 %v2931, 7
        %v2933 = vsub.s32 %v2930, %v2932
        %v2934 = vrot.slane %v2920, %v2933
        %v2935 = vcombine.high %v2927, %v2927
        %v2936 = vcombine.high %v2934, %v2934
        %v2937 = vcombine.high %v2693, %v2693
        %v2939 = vunpack.c.l.s4 1983009808
        %v2940 = vunpack.c.0.s8 %v2939
        %v2941 = vlaneseq
        %v2942 = vshrl.u32 %v2941, 7
        %v2943 = vsub.s32 %v2940, %v2942
        %v2944 = vrot.slane %v2693, %v2943
        %v2946 = vunpack.c.l.s4 1983009808
        %v2947 = vunpack.c.0.s8 %v2946
        %v2948 = vlaneseq
        %v2949 = vshrl.u32 %v2948, 7
        %v2950 = vsub.s32 %v2947, %v2949
        %v2951 = vrot.slane %v2937, %v2950
        %v2952 = vcombine.high %v2944, %v2944
        %v2953 = vcombine.high %v2951, %v2951
        %v2954 = vcombine.high %v2696, %v2696
        %v2956 = vunpack.c.l.s4 1983009808
        %v2957 = vunpack.c.0.s8 %v2956
        %v2958 = vlaneseq
        %v2959 = vshrl.u32 %v2958, 7
        %v2960 = vsub.s32 %v2957, %v2959
        %v2961 = vrot.slane %v2696, %v2960
        %v2963 = vunpack.c.l.s4 1983009808
        %v2964 = vunpack.c.0.s8 %v2963
        %v2965 = vlaneseq
        %v2966 = vshrl.u32 %v2965, 7
        %v2967 = vsub.s32 %v2964, %v2966
        %v2968 = vrot.slane %v2954, %v2967
        %v2969 = vcombine.high %v2961, %v2961
        %v2970 = vcombine.high %v2968, %v2968
        %v2971 = vcombine.high %v2699, %v2699
        %v2973 = vunpack.c.l.s4 1983009808
        %v2974 = vunpack.c.0.s8 %v2973
        %v2975 = vlaneseq
        %v2976 = vshrl.u32 %v2975, 7
        %v2977 = vsub.s32 %v2974, %v2976
        %v2978 = vrot.slane %v2699, %v2977
        %v2980 = vunpack.c.l.s4 1983009808
        %v2981 = vunpack.c.0.s8 %v2980
        %v2982 = vlaneseq
        %v2983 = vshrl.u32 %v2982, 7
        %v2984 = vsub.s32 %v2981, %v2983
        %v2985 = vrot.slane %v2971, %v2984
        %v2986 = vcombine.high %v2978, %v2978
        %v2987 = vcombine.high %v2985, %v2985
        %vm3052 = vcmask 123904
        %v3053 = vsel %vm3052, %v2723, -inf
        %v3054 = vrot.slane %v3053, 4
        %v3055 = vmax.f32 %v3053, %v3054
        %v3056 = vrot.slane %v3055, 2
        %v3057 = vmax.f32 %v3055, %v3056
        %v3058 = vrot.slane %v3057, 1
        %v3059 = vmax.f32 %v3057, %v3058
        %v3060 = vsel %vm3052, %v2731, -inf
        %v3061 = vrot.slane %v3060, 4
        %v3062 = vmax.f32 %v3060, %v3061
        %v3063 = vrot.slane %v3062, 2
        %v3064 = vmax.f32 %v3062, %v3063
        %v3065 = vrot.slane %v3064, 1
        %v3066 = vmax.f32 %v3064, %v3065
        %v3067 = vsel %vm3052, %v2730, -inf
        %v3068 = vrot.slane %v3067, 4
        %v3069 = vmax.f32 %v3067, %v3068
        %v3070 = vrot.slane %v3069, 2
        %v3071 = vmax.f32 %v3069, %v3070
        %v3072 = vrot.slane %v3071, 1
        %v3073 = vmax.f32 %v3071, %v3072
        %v3074 = vsel %vm3052, %v2732, -inf
        %v3075 = vrot.slane %v3074, 4
        %v3076 = vmax.f32 %v3074, %v3075
        %v3077 = vrot.slane %v3076, 2
        %v3078 = vmax.f32 %v3076, %v3077
        %v3079 = vrot.slane %v3078, 1
        %v3080 = vmax.f32 %v3078, %v3079
        %v3081 = vsel %vm3052, %v2740, -inf
        %v3082 = vrot.slane %v3081, 4
        %v3083 = vmax.f32 %v3081, %v3082
        %v3084 = vrot.slane %v3083, 2
        %v3085 = vmax.f32 %v3083, %v3084
        %v3086 = vrot.slane %v3085, 1
        %v3087 = vmax.f32 %v3085, %v3086
        %v3088 = vsel %vm3052, %v2748, -inf
        %v3089 = vrot.slane %v3088, 4
        %v3090 = vmax.f32 %v3088, %v3089
        %v3091 = vrot.slane %v3090, 2
        %v3092 = vmax.f32 %v3090, %v3091
        %v3093 = vrot.slane %v3092, 1
        %v3094 = vmax.f32 %v3092, %v3093
        %v3095 = vsel %vm3052, %v2747, -inf
        %v3096 = vrot.slane %v3095, 4
        %v3097 = vmax.f32 %v3095, %v3096
        %v3098 = vrot.slane %v3097, 2
        %v3099 = vmax.f32 %v3097, %v3098
        %v3100 = vrot.slane %v3099, 1
        %v3101 = vmax.f32 %v3099, %v3100
        %v3102 = vsel %vm3052, %v2749, -inf
        %v3103 = vrot.slane %v3102, 4
        %v3104 = vmax.f32 %v3102, %v3103
        %v3105 = vrot.slane %v3104, 2
        %v3106 = vmax.f32 %v3104, %v3105
        %v3107 = vrot.slane %v3106, 1
        %v3108 = vmax.f32 %v3106, %v3107
        %v3109 = vsel %vm3052, %v2757, -inf
        %v3110 = vrot.slane %v3109, 4
        %v3111 = vmax.f32 %v3109, %v3110
        %v3112 = vrot.slane %v3111, 2
        %v3113 = vmax.f32 %v3111, %v3112
        %v3114 = vrot.slane %v3113, 1
        %v3115 = vmax.f32 %v3113, %v3114
        %v3116 = vsel %vm3052, %v2765, -inf
        %v3117 = vrot.slane %v3116, 4
        %v3118 = vmax.f32 %v3116, %v3117
        %v3119 = vrot.slane %v3118, 2
        %v3120 = vmax.f32 %v3118, %v3119
        %v3121 = vrot.slane %v3120, 1
        %v3122 = vmax.f32 %v3120, %v3121
        %v3123 = vsel %vm3052, %v2764, -inf
        %v3124 = vrot.slane %v3123, 4
        %v3125 = vmax.f32 %v3123, %v3124
        %v3126 = vrot.slane %v3125, 2
        %v3127 = vmax.f32 %v3125, %v3126
        %v3128 = vrot.slane %v3127, 1
        %v3129 = vmax.f32 %v3127, %v3128
        %v3130 = vsel %vm3052, %v2766, -inf
        %v3131 = vrot.slane %v3130, 4
        %v3132 = vmax.f32 %v3130, %v3131
        %v3133 = vrot.slane %v3132, 2
        %v3134 = vmax.f32 %v3132, %v3133
        %v3135 = vrot.slane %v3134, 1
        %v3136 = vmax.f32 %v3134, %v3135
        %v3137 = vsel %vm3052, %v2774, -inf
        %v3138 = vrot.slane %v3137, 4
        %v3139 = vmax.f32 %v3137, %v3138
        %v3140 = vrot.slane %v3139, 2
        %v3141 = vmax.f32 %v3139, %v3140
        %v3142 = vrot.slane %v3141, 1
        %v3143 = vmax.f32 %v3141, %v3142
        %v3144 = vsel %vm3052, %v2782, -inf
        %v3145 = vrot.slane %v3144, 4
        %v3146 = vmax.f32 %v3144, %v3145
        %v3147 = vrot.slane %v3146, 2
        %v3148 = vmax.f32 %v3146, %v3147
        %v3149 = vrot.slane %v3148, 1
        %v3150 = vmax.f32 %v3148, %v3149
        %v3151 = vsel %vm3052, %v2781, -inf
        %v3152 = vrot.slane %v3151, 4
        %v3153 = vmax.f32 %v3151, %v3152
        %v3154 = vrot.slane %v3153, 2
        %v3155 = vmax.f32 %v3153, %v3154
        %v3156 = vrot.slane %v3155, 1
        %v3157 = vmax.f32 %v3155, %v3156
        %v3158 = vsel %vm3052, %v2783, -inf
        %v3159 = vrot.slane %v3158, 4
        %v3160 = vmax.f32 %v3158, %v3159
        %v3161 = vrot.slane %v3160, 2
        %v3162 = vmax.f32 %v3160, %v3161
        %v3163 = vrot.slane %v3162, 1
        %v3164 = vmax.f32 %v3162, %v3163
        %v3165 = vsel %vm3052, %v2791, -inf
        %v3166 = vrot.slane %v3165, 4
        %v3167 = vmax.f32 %v3165, %v3166
        %v3168 = vrot.slane %v3167, 2
        %v3169 = vmax.f32 %v3167, %v3168
        %v3170 = vrot.slane %v3169, 1
        %v3171 = vmax.f32 %v3169, %v3170
        %v3172 = vsel %vm3052, %v2799, -inf
        %v3173 = vrot.slane %v3172, 4
        %v3174 = vmax.f32 %v3172, %v3173
        %v3175 = vrot.slane %v3174, 2
        %v3176 = vmax.f32 %v3174, %v3175
        %v3177 = vrot.slane %v3176, 1
        %v3178 = vmax.f32 %v3176, %v3177
        %v3179 = vsel %vm3052, %v2798, -inf
        %v3180 = vrot.slane %v3179, 4
        %v3181 = vmax.f32 %v3179, %v3180
        %v3182 = vrot.slane %v3181, 2
        %v3183 = vmax.f32 %v3181, %v3182
        %v3184 = vrot.slane %v3183, 1
        %v3185 = vmax.f32 %v3183, %v3184
        %v3186 = vsel %vm3052, %v2800, -inf
        %v3187 = vrot.slane %v3186, 4
        %v3188 = vmax.f32 %v3186, %v3187
        %v3189 = vrot.slane %v3188, 2
        %v3190 = vmax.f32 %v3188, %v3189
        %v3191 = vrot.slane %v3190, 1
        %v3192 = vmax.f32 %v3190, %v3191
        %v3193 = vsel %vm3052, %v2808, -inf
        %v3194 = vrot.slane %v3193, 4
        %v3195 = vmax.f32 %v3193, %v3194
        %v3196 = vrot.slane %v3195, 2
        %v3197 = vmax.f32 %v3195, %v3196
        %v3198 = vrot.slane %v3197, 1
        %v3199 = vmax.f32 %v3197, %v3198
        %v3200 = vsel %vm3052, %v2816, -inf
        %v3201 = vrot.slane %v3200, 4
        %v3202 = vmax.f32 %v3200, %v3201
        %v3203 = vrot.slane %v3202, 2
        %v3204 = vmax.f32 %v3202, %v3203
        %v3205 = vrot.slane %v3204, 1
        %v3206 = vmax.f32 %v3204, %v3205
        %v3207 = vsel %vm3052, %v2815, -inf
        %v3208 = vrot.slane %v3207, 4
        %v3209 = vmax.f32 %v3207, %v3208
        %v3210 = vrot.slane %v3209, 2
        %v3211 = vmax.f32 %v3209, %v3210
        %v3212 = vrot.slane %v3211, 1
        %v3213 = vmax.f32 %v3211, %v3212
        %v3214 = vsel %vm3052, %v2817, -inf
        %v3215 = vrot.slane %v3214, 4
        %v3216 = vmax.f32 %v3214, %v3215
        %v3217 = vrot.slane %v3216, 2
        %v3218 = vmax.f32 %v3216, %v3217
        %v3219 = vrot.slane %v3218, 1
        %v3220 = vmax.f32 %v3218, %v3219
        %v3221 = vsel %vm3052, %v2825, -inf
        %v3222 = vrot.slane %v3221, 4
        %v3223 = vmax.f32 %v3221, %v3222
        %v3224 = vrot.slane %v3223, 2
        %v3225 = vmax.f32 %v3223, %v3224
        %v3226 = vrot.slane %v3225, 1
        %v3227 = vmax.f32 %v3225, %v3226
        %v3228 = vsel %vm3052, %v2833, -inf
        %v3229 = vrot.slane %v3228, 4
        %v3230 = vmax.f32 %v3228, %v3229
        %v3231 = vrot.slane %v3230, 2
        %v3232 = vmax.f32 %v3230, %v3231
        %v3233 = vrot.slane %v3232, 1
        %v3234 = vmax.f32 %v3232, %v3233
        %v3235 = vsel %vm3052, %v2832, -inf
        %v3236 = vrot.slane %v3235, 4
        %v3237 = vmax.f32 %v3235, %v3236
        %v3238 = vrot.slane %v3237, 2
        %v3239 = vmax.f32 %v3237, %v3238
        %v3240 = vrot.slane %v3239, 1
        %v3241 = vmax.f32 %v3239, %v3240
        %v3242 = vsel %vm3052, %v2834, -inf
        %v3243 = vrot.slane %v3242, 4
        %v3244 = vmax.f32 %v3242, %v3243
        %v3245 = vrot.slane %v3244, 2
        %v3246 = vmax.f32 %v3244, %v3245
        %v3247 = vrot.slane %v3246, 1
        %v3248 = vmax.f32 %v3246, %v3247
        %v3249 = vsel %vm3052, %v2842, -inf
        %v3250 = vrot.slane %v3249, 4
        %v3251 = vmax.f32 %v3249, %v3250
        %v3252 = vrot.slane %v3251, 2
        %v3253 = vmax.f32 %v3251, %v3252
        %v3254 = vrot.slane %v3253, 1
        %v3255 = vmax.f32 %v3253, %v3254
        %v3256 = vsel %vm3052, %v2850, -inf
        %v3257 = vrot.slane %v3256, 4
        %v3258 = vmax.f32 %v3256, %v3257
        %v3259 = vrot.slane %v3258, 2
        %v3260 = vmax.f32 %v3258, %v3259
        %v3261 = vrot.slane %v3260, 1
        %v3262 = vmax.f32 %v3260, %v3261
        %v3263 = vsel %vm3052, %v2849, -inf
        %v3264 = vrot.slane %v3263, 4
        %v3265 = vmax.f32 %v3263, %v3264
        %v3266 = vrot.slane %v3265, 2
        %v3267 = vmax.f32 %v3265, %v3266
        %v3268 = vrot.slane %v3267, 1
        %v3269 = vmax.f32 %v3267, %v3268
        %v3270 = vsel %vm3052, %v2851, -inf
        %v3271 = vrot.slane %v3270, 4
        %v3272 = vmax.f32 %v3270, %v3271
        %v3273 = vrot.slane %v3272, 2
        %v3274 = vmax.f32 %v3272, %v3273
        %v3275 = vrot.slane %v3274, 1
        %v3276 = vmax.f32 %v3274, %v3275
        %v3277 = vsel %vm3052, %v2859, -inf
        %v3278 = vrot.slane %v3277, 4
        %v3279 = vmax.f32 %v3277, %v3278
        %v3280 = vrot.slane %v3279, 2
        %v3281 = vmax.f32 %v3279, %v3280
        %v3282 = vrot.slane %v3281, 1
        %v3283 = vmax.f32 %v3281, %v3282
        %v3284 = vsel %vm3052, %v2867, -inf
        %v3285 = vrot.slane %v3284, 4
        %v3286 = vmax.f32 %v3284, %v3285
        %v3287 = vrot.slane %v3286, 2
        %v3288 = vmax.f32 %v3286, %v3287
        %v3289 = vrot.slane %v3288, 1
        %v3290 = vmax.f32 %v3288, %v3289
        %v3291 = vsel %vm3052, %v2866, -inf
        %v3292 = vrot.slane %v3291, 4
        %v3293 = vmax.f32 %v3291, %v3292
        %v3294 = vrot.slane %v3293, 2
        %v3295 = vmax.f32 %v3293, %v3294
        %v3296 = vrot.slane %v3295, 1
        %v3297 = vmax.f32 %v3295, %v3296
        %v3298 = vsel %vm3052, %v2868, -inf
        %v3299 = vrot.slane %v3298, 4
        %v3300 = vmax.f32 %v3298, %v3299
        %v3301 = vrot.slane %v3300, 2
        %v3302 = vmax.f32 %v3300, %v3301
        %v3303 = vrot.slane %v3302, 1
        %v3304 = vmax.f32 %v3302, %v3303
        %v3305 = vsel %vm3052, %v2876, -inf
        %v3306 = vrot.slane %v3305, 4
        %v3307 = vmax.f32 %v3305, %v3306
        %v3308 = vrot.slane %v3307, 2
        %v3309 = vmax.f32 %v3307, %v3308
        %v3310 = vrot.slane %v3309, 1
        %v3311 = vmax.f32 %v3309, %v3310
        %v3312 = vsel %vm3052, %v2884, -inf
        %v3313 = vrot.slane %v3312, 4
        %v3314 = vmax.f32 %v3312, %v3313
        %v3315 = vrot.slane %v3314, 2
        %v3316 = vmax.f32 %v3314, %v3315
        %v3317 = vrot.slane %v3316, 1
        %v3318 = vmax.f32 %v3316, %v3317
        %v3319 = vsel %vm3052, %v2883, -inf
        %v3320 = vrot.slane %v3319, 4
        %v3321 = vmax.f32 %v3319, %v3320
        %v3322 = vrot.slane %v3321, 2
        %v3323 = vmax.f32 %v3321, %v3322
        %v3324 = vrot.slane %v3323, 1
        %v3325 = vmax.f32 %v3323, %v3324
        %v3326 = vsel %vm3052, %v2885, -inf
        %v3327 = vrot.slane %v3326, 4
        %v3328 = vmax.f32 %v3326, %v3327
        %v3329 = vrot.slane %v3328, 2
        %v3330 = vmax.f32 %v3328, %v3329
        %v3331 = vrot.slane %v3330, 1
        %v3332 = vmax.f32 %v3330, %v3331
        %v3333 = vsel %vm3052, %v2893, -inf
        %v3334 = vrot.slane %v3333, 4
        %v3335 = vmax.f32 %v3333, %v3334
        %v3336 = vrot.slane %v3335, 2
        %v3337 = vmax.f32 %v3335, %v3336
        %v3338 = vrot.slane %v3337, 1
        %v3339 = vmax.f32 %v3337, %v3338
        %v3340 = vsel %vm3052, %v2901, -inf
        %v3341 = vrot.slane %v3340, 4
        %v3342 = vmax.f32 %v3340, %v3341
        %v3343 = vrot.slane %v3342, 2
        %v3344 = vmax.f32 %v3342, %v3343
        %v3345 = vrot.slane %v3344, 1
        %v3346 = vmax.f32 %v3344, %v3345
        %v3347 = vsel %vm3052, %v2900, -inf
        %v3348 = vrot.slane %v3347, 4
        %v3349 = vmax.f32 %v3347, %v3348
        %v3350 = vrot.slane %v3349, 2
        %v3351 = vmax.f32 %v3349, %v3350
        %v3352 = vrot.slane %v3351, 1
        %v3353 = vmax.f32 %v3351, %v3352
        %v3354 = vsel %vm3052, %v2902, -inf
        %v3355 = vrot.slane %v3354, 4
        %v3356 = vmax.f32 %v3354, %v3355
        %v3357 = vrot.slane %v3356, 2
        %v3358 = vmax.f32 %v3356, %v3357
        %v3359 = vrot.slane %v3358, 1
        %v3360 = vmax.f32 %v3358, %v3359
        %v3361 = vsel %vm3052, %v2910, -inf
        %v3362 = vrot.slane %v3361, 4
        %v3363 = vmax.f32 %v3361, %v3362
        %v3364 = vrot.slane %v3363, 2
        %v3365 = vmax.f32 %v3363, %v3364
        %v3366 = vrot.slane %v3365, 1
        %v3367 = vmax.f32 %v3365, %v3366
        %v3368 = vsel %vm3052, %v2918, -inf
        %v3369 = vrot.slane %v3368, 4
        %v3370 = vmax.f32 %v3368, %v3369
        %v3371 = vrot.slane %v3370, 2
        %v3372 = vmax.f32 %v3370, %v3371
        %v3373 = vrot.slane %v3372, 1
        %v3374 = vmax.f32 %v3372, %v3373
        %v3375 = vsel %vm3052, %v2917, -inf
        %v3376 = vrot.slane %v3375, 4
        %v3377 = vmax.f32 %v3375, %v3376
        %v3378 = vrot.slane %v3377, 2
        %v3379 = vmax.f32 %v3377, %v3378
        %v3380 = vrot.slane %v3379, 1
        %v3381 = vmax.f32 %v3379, %v3380
        %v3382 = vsel %vm3052, %v2919, -inf
        %v3383 = vrot.slane %v3382, 4
        %v3384 = vmax.f32 %v3382, %v3383
        %v3385 = vrot.slane %v3384, 2
        %v3386 = vmax.f32 %v3384, %v3385
        %v3387 = vrot.slane %v3386, 1
        %v3388 = vmax.f32 %v3386, %v3387
        %v3389 = vsel %vm3052, %v2927, -inf
        %v3390 = vrot.slane %v3389, 4
        %v3391 = vmax.f32 %v3389, %v3390
        %v3392 = vrot.slane %v3391, 2
        %v3393 = vmax.f32 %v3391, %v3392
        %v3394 = vrot.slane %v3393, 1
        %v3395 = vmax.f32 %v3393, %v3394
        %v3396 = vsel %vm3052, %v2935, -inf
        %v3397 = vrot.slane %v3396, 4
        %v3398 = vmax.f32 %v3396, %v3397
        %v3399 = vrot.slane %v3398, 2
        %v3400 = vmax.f32 %v3398, %v3399
        %v3401 = vrot.slane %v3400, 1
        %v3402 = vmax.f32 %v3400, %v3401
        %v3403 = vsel %vm3052, %v2934, -inf
        %v3404 = vrot.slane %v3403, 4
        %v3405 = vmax.f32 %v3403, %v3404
        %v3406 = vrot.slane %v3405, 2
        %v3407 = vmax.f32 %v3405, %v3406
        %v3408 = vrot.slane %v3407, 1
        %v3409 = vmax.f32 %v3407, %v3408
        %v3410 = vsel %vm3052, %v2936, -inf
        %v3411 = vrot.slane %v3410, 4
        %v3412 = vmax.f32 %v3410, %v3411
        %v3413 = vrot.slane %v3412, 2
        %v3414 = vmax.f32 %v3412, %v3413
        %v3415 = vrot.slane %v3414, 1
        %v3416 = vmax.f32 %v3414, %v3415
        %v3417 = vsel %vm3052, %v2944, -inf
        %v3418 = vrot.slane %v3417, 4
        %v3419 = vmax.f32 %v3417, %v3418
        %v3420 = vrot.slane %v3419, 2
        %v3421 = vmax.f32 %v3419, %v3420
        %v3422 = vrot.slane %v3421, 1
        %v3423 = vmax.f32 %v3421, %v3422
        %v3424 = vsel %vm3052, %v2952, -inf
        %v3425 = vrot.slane %v3424, 4
        %v3426 = vmax.f32 %v3424, %v3425
        %v3427 = vrot.slane %v3426, 2
        %v3428 = vmax.f32 %v3426, %v3427
        %v3429 = vrot.slane %v3428, 1
        %v3430 = vmax.f32 %v3428, %v3429
        %v3431 = vsel %vm3052, %v2951, -inf
        %v3432 = vrot.slane %v3431, 4
        %v3433 = vmax.f32 %v3431, %v3432
        %v3434 = vrot.slane %v3433, 2
        %v3435 = vmax.f32 %v3433, %v3434
        %v3436 = vrot.slane %v3435, 1
        %v3437 = vmax.f32 %v3435, %v3436
        %v3438 = vsel %vm3052, %v2953, -inf
        %v3439 = vrot.slane %v3438, 4
        %v3440 = vmax.f32 %v3438, %v3439
        %v3441 = vrot.slane %v3440, 2
        %v3442 = vmax.f32 %v3440, %v3441
        %v3443 = vrot.slane %v3442, 1
        %v3444 = vmax.f32 %v3442, %v3443
        %v3445 = vsel %vm3052, %v2961, -inf
        %v3446 = vrot.slane %v3445, 4
        %v3447 = vmax.f32 %v3445, %v3446
        %v3448 = vrot.slane %v3447, 2
        %v3449 = vmax.f32 %v3447, %v3448
        %v3450 = vrot.slane %v3449, 1
        %v3451 = vmax.f32 %v3449, %v3450
        %v3452 = vsel %vm3052, %v2969, -inf
        %v3453 = vrot.slane %v3452, 4
        %v3454 = vmax.f32 %v3452, %v3453
        %v3455 = vrot.slane %v3454, 2
        %v3456 = vmax.f32 %v3454, %v3455
        %v3457 = vrot.slane %v3456, 1
        %v3458 = vmax.f32 %v3456, %v3457
        %v3459 = vsel %vm3052, %v2968, -inf
        %v3460 = vrot.slane %v3459, 4
        %v3461 = vmax.f32 %v3459, %v3460
        %v3462 = vrot.slane %v3461, 2
        %v3463 = vmax.f32 %v3461, %v3462
        %v3464 = vrot.slane %v3463, 1
        %v3465 = vmax.f32 %v3463, %v3464
        %v3466 = vsel %vm3052, %v2970, -inf
        %v3467 = vrot.slane %v3466, 4
        %v3468 = vmax.f32 %v3466, %v3467
        %v3469 = vrot.slane %v3468, 2
        %v3470 = vmax.f32 %v3468, %v3469
        %v3471 = vrot.slane %v3470, 1
        %v3472 = vmax.f32 %v3470, %v3471
        %v3473 = vsel %vm3052, %v2978, -inf
        %v3474 = vrot.slane %v3473, 4
        %v3475 = vmax.f32 %v3473, %v3474
        %v3476 = vrot.slane %v3475, 2
        %v3477 = vmax.f32 %v3475, %v3476
        %v3478 = vrot.slane %v3477, 1
        %v3479 = vmax.f32 %v3477, %v3478
        %v3480 = vsel %vm3052, %v2986, -inf
        %v3481 = vrot.slane %v3480, 4
        %v3482 = vmax.f32 %v3480, %v3481
        %v3483 = vrot.slane %v3482, 2
        %v3484 = vmax.f32 %v3482, %v3483
        %v3485 = vrot.slane %v3484, 1
        %v3486 = vmax.f32 %v3484, %v3485
        %v3487 = vsel %vm3052, %v2985, -inf
        %v3488 = vrot.slane %v3487, 4
        %v3489 = vmax.f32 %v3487, %v3488
        %v3490 = vrot.slane %v3489, 2
        %v3491 = vmax.f32 %v3489, %v3490
        %v3492 = vrot.slane %v3491, 1
        %v3493 = vmax.f32 %v3491, %v3492
        %v3494 = vsel %vm3052, %v2987, -inf
        %v3495 = vrot.slane %v3494, 4
        %v3496 = vmax.f32 %v3494, %v3495
        %v3497 = vrot.slane %v3496, 2
        %v3498 = vmax.f32 %v3496, %v3497
        %v3499 = vrot.slane %v3498, 1
        %v3500 = vmax.f32 %v3498, %v3499
        %vm3565 = vcmask 1041409
        %v3566 = vsel %vm3565, %v3066, %v3059
        %vm3567 = vcmask 1042434
        %v3568 = vsel %vm3567, %v3073, %v3566
        %vm3569 = vcmask 1043459
        %v3570 = vsel %vm3569, %v3080, %v3568
        %vm3571 = vcmask 1044484
        %v3572 = vsel %vm3571, %v3087, %v3570
        %vm3573 = vcmask 1045509
        %v3574 = vsel %vm3573, %v3094, %v3572
        %vm3575 = vcmask 1046534
        %v3576 = vsel %vm3575, %v3101, %v3574
        %vm3577 = vcmask 1047559
        %v3578 = vsel %vm3577, %v3108, %v3576
        %v3579 = vsel %vm3565, %v3122, %v3115
        %v3580 = vsel %vm3567, %v3129, %v3579
        %v3581 = vsel %vm3569, %v3136, %v3580
        %v3582 = vsel %vm3571, %v3143, %v3581
        %v3583 = vsel %vm3573, %v3150, %v3582
        %v3584 = vsel %vm3575, %v3157, %v3583
        %v3585 = vsel %vm3577, %v3164, %v3584
        %v3586 = vsel %vm3565, %v3178, %v3171
        %v3587 = vsel %vm3567, %v3185, %v3586
        %v3588 = vsel %vm3569, %v3192, %v3587
        %v3589 = vsel %vm3571, %v3199, %v3588
        %v3590 = vsel %vm3573, %v3206, %v3589
        %v3591 = vsel %vm3575, %v3213, %v3590
        %v3592 = vsel %vm3577, %v3220, %v3591
        %v3593 = vsel %vm3565, %v3234, %v3227
        %v3594 = vsel %vm3567, %v3241, %v3593
        %v3595 = vsel %vm3569, %v3248, %v3594
        %v3596 = vsel %vm3571, %v3255, %v3595
        %v3597 = vsel %vm3573, %v3262, %v3596
        %v3598 = vsel %vm3575, %v3269, %v3597
        %v3599 = vsel %vm3577, %v3276, %v3598
        %v3600 = vsel %vm3565, %v3290, %v3283
        %v3601 = vsel %vm3567, %v3297, %v3600
        %v3602 = vsel %vm3569, %v3304, %v3601
        %v3603 = vsel %vm3571, %v3311, %v3602
        %v3604 = vsel %vm3573, %v3318, %v3603
        %v3605 = vsel %vm3575, %v3325, %v3604
        %v3606 = vsel %vm3577, %v3332, %v3605
        %v3607 = vsel %vm3565, %v3346, %v3339
        %v3608 = vsel %vm3567, %v3353, %v3607
        %v3609 = vsel %vm3569, %v3360, %v3608
        %v3610 = vsel %vm3571, %v3367, %v3609
        %v3611 = vsel %vm3573, %v3374, %v3610
        %v3612 = vsel %vm3575, %v3381, %v3611
        %v3613 = vsel %vm3577, %v3388, %v3612
        %v3614 = vsel %vm3565, %v3402, %v3395
        %v3615 = vsel %vm3567, %v3409, %v3614
        %v3616 = vsel %vm3569, %v3416, %v3615
        %v3617 = vsel %vm3571, %v3423, %v3616
        %v3618 = vsel %vm3573, %v3430, %v3617
        %v3619 = vsel %vm3575, %v3437, %v3618
        %v3620 = vsel %vm3577, %v3444, %v3619
        %v3621 = vsel %vm3565, %v3458, %v3451
        %v3622 = vsel %vm3567, %v3465, %v3621
        %v3623 = vsel %vm3569, %v3472, %v3622
        %v3624 = vsel %vm3571, %v3479, %v3623
        %v3625 = vsel %vm3573, %v3486, %v3624
        %v3626 = vsel %vm3575, %v3493, %v3625
        %v3627 = vsel %vm3577, %v3500, %v3626
        %v3636 = vcombine.low %v3578, %v3592
        %v3637 = vcombine.high %v3578, %v3592
        %v3639 = vunpack.c.l.s4 1983009808
        %v3640 = vunpack.c.0.s8 %v3639
        %v3641 = vlaneseq
        %v3642 = vshrl.u32 %v3641, 7
        %v3643 = vsub.s32 %v3640, %v3642
        %v3644 = vrot.slane %v3636, %v3643
        %v3646 = vunpack.c.l.s4 1983009808
        %v3647 = vunpack.c.0.s8 %v3646
        %v3648 = vlaneseq
        %v3649 = vshrl.u32 %v3648, 7
        %v3650 = vsub.s32 %v3647, %v3649
        %v3651 = vrot.slane %v3637, %v3650
        %v3652 = vcombine.low %v3585, %v3599
        %v3653 = vcombine.high %v3585, %v3599
        %v3655 = vunpack.c.l.s4 1983009808
        %v3656 = vunpack.c.0.s8 %v3655
        %v3657 = vlaneseq
        %v3658 = vshrl.u32 %v3657, 7
        %v3659 = vsub.s32 %v3656, %v3658
        %v3660 = vrot.slane %v3652, %v3659
        %v3662 = vunpack.c.l.s4 1983009808
        %v3663 = vunpack.c.0.s8 %v3662
        %v3664 = vlaneseq
        %v3665 = vshrl.u32 %v3664, 7
        %v3666 = vsub.s32 %v3663, %v3665
        %v3667 = vrot.slane %v3653, %v3666
        %v3668 = vcombine.low %v3606, %v3620
        %v3669 = vcombine.high %v3606, %v3620
        %v3671 = vunpack.c.l.s4 1983009808
        %v3672 = vunpack.c.0.s8 %v3671
        %v3673 = vlaneseq
        %v3674 = vshrl.u32 %v3673, 7
        %v3675 = vsub.s32 %v3672, %v3674
        %v3676 = vrot.slane %v3668, %v3675
        %v3678 = vunpack.c.l.s4 1983009808
        %v3679 = vunpack.c.0.s8 %v3678
        %v3680 = vlaneseq
        %v3681 = vshrl.u32 %v3680, 7
        %v3682 = vsub.s32 %v3679, %v3681
        %v3683 = vrot.slane %v3669, %v3682
        %v3684 = vcombine.low %v3613, %v3627
        %v3685 = vcombine.high %v3613, %v3627
        %v3687 = vunpack.c.l.s4 1983009808
        %v3688 = vunpack.c.0.s8 %v3687
        %v3689 = vlaneseq
        %v3690 = vshrl.u32 %v3689, 7
        %v3691 = vsub.s32 %v3688, %v3690
        %v3692 = vrot.slane %v3684, %v3691
        %v3694 = vunpack.c.l.s4 1983009808
        %v3695 = vunpack.c.0.s8 %v3694
        %v3696 = vlaneseq
        %v3697 = vshrl.u32 %v3696, 7
        %v3698 = vsub.s32 %v3695, %v3697
        %v3699 = vrot.slane %v3685, %v3698
        %v3700 = vcombine.low %v3644, %v3660
        %v3701 = vcombine.high %v3644, %v3660
        %v3703 = vunpack.c.l.s4 1934713408
        %v3704 = vunpack.c.0.s8 %v3703
        %v3705 = vlaneseq
        %v3706 = vshrl.u32 %v3705, 7
        %v3707 = vsub.s32 %v3704, %v3706
        %v3708 = vrot.slane %v3700, %v3707
        %v3710 = vunpack.c.l.s4 1934713408
        %v3711 = vunpack.c.0.s8 %v3710
        %v3712 = vlaneseq
        %v3713 = vshrl.u32 %v3712, 7
        %v3714 = vsub.s32 %v3711, %v3713
        %v3715 = vrot.slane %v3701, %v3714
        %v3716 = vcombine.low %v3651, %v3667
        %v3717 = vcombine.high %v3651, %v3667
        %v3719 = vunpack.c.l.s4 1934713408
        %v3720 = vunpack.c.0.s8 %v3719
        %v3721 = vlaneseq
        %v3722 = vshrl.u32 %v3721, 7
        %v3723 = vsub.s32 %v3720, %v3722
        %v3724 = vrot.slane %v3716, %v3723
        %v3726 = vunpack.c.l.s4 1934713408
        %v3727 = vunpack.c.0.s8 %v3726
        %v3728 = vlaneseq
        %v3729 = vshrl.u32 %v3728, 7
        %v3730 = vsub.s32 %v3727, %v3729
        %v3731 = vrot.slane %v3717, %v3730
        %v3732 = vcombine.low %v3676, %v3692
        %v3733 = vcombine.high %v3676, %v3692
        %v3735 = vunpack.c.l.s4 1934713408
        %v3736 = vunpack.c.0.s8 %v3735
        %v3737 = vlaneseq
        %v3738 = vshrl.u32 %v3737, 7
        %v3739 = vsub.s32 %v3736, %v3738
        %v3740 = vrot.slane %v3732, %v3739
        %v3742 = vunpack.c.l.s4 1934713408
        %v3743 = vunpack.c.0.s8 %v3742
        %v3744 = vlaneseq
        %v3745 = vshrl.u32 %v3744, 7
        %v3746 = vsub.s32 %v3743, %v3745
        %v3747 = vrot.slane %v3733, %v3746
        %v3748 = vcombine.low %v3683, %v3699
        %v3749 = vcombine.high %v3683, %v3699
        %v3751 = vunpack.c.l.s4 1934713408
        %v3752 = vunpack.c.0.s8 %v3751
        %v3753 = vlaneseq
        %v3754 = vshrl.u32 %v3753, 7
        %v3755 = vsub.s32 %v3752, %v3754
        %v3756 = vrot.slane %v3748, %v3755
        %v3758 = vunpack.c.l.s4 1934713408
        %v3759 = vunpack.c.0.s8 %v3758
        %v3760 = vlaneseq
        %v3761 = vshrl.u32 %v3760, 7
        %v3762 = vsub.s32 %v3759, %v3761
        %v3763 = vrot.slane %v3749, %v3762
        %v3764 = vcombine.low %v3708, %v3740
        %v3765 = vcombine.high %v3708, %v3740
        %v3766 = vcombine.low %v3715, %v3747
        %v3767 = vcombine.high %v3715, %v3747
        %v3768 = vcombine.low %v3724, %v3756
        %v3769 = vcombine.high %v3724, %v3756
        %v3770 = vcombine.low %v3731, %v3763
        %v3771 = vcombine.high %v3731, %v3763
        %3773 = vrot.lane.b32.xlu0 %v3765, 16
        %v3774 = vpop.permute.xlu0 %3773
        %3777 = vrot.lane.b32.xlu0 %v3766, 32
        %v3778 = vpop.permute.xlu0 %3777
        %3781 = vrot.lane.b32.xlu0 %v3767, 48
        %v3782 = vpop.permute.xlu0 %3781
        %3785 = vrot.lane.b32.xlu0 %v3768, 64
        %v3786 = vpop.permute.xlu0 %3785
        %3789 = vrot.lane.b32.xlu0 %v3769, 80
        %v3790 = vpop.permute.xlu0 %3789
        %3793 = vrot.lane.b32.xlu0 %v3770, 96
        %v3794 = vpop.permute.xlu0 %3793
        %3797 = vrot.lane.b32.xlu0 %v3771, 112
        %v3798 = vpop.permute.xlu0 %3797
        %v3800 = vsel %vm2651, %v3764, %v3774
        %vm3801 = vcmask 261120
        %v3802 = vsel %vm3801, %v3800, %v3778
        %vm3803 = vcmask 392192
        %v3804 = vsel %vm3803, %v3802, %v3782
        %vm3805 = vcmask 523264
        %v3806 = vsel %vm3805, %v3804, %v3786
        %vm3807 = vcmask 654336
        %v3808 = vsel %vm3807, %v3806, %v3790
        %vm3809 = vcmask 785408
        %v3810 = vsel %vm3809, %v3808, %v3794
        %vm3811 = vcmask 916480
        %v3812 = vsel %vm3811, %v3810, %v3798
        %3813 = vst [vmem:[%s163] sm:$0xff] %v3812
        %s3814 = sand.u32 %s93, 1
        %s3815 = scalar_lea.sflag [#allocation5], %s3814
        %s3816 = sand.u32 %s93, 1
        %s3817 = smul.addr %s3816, 8
        %s3818 = scalar_lea.vmem [#allocation4], %s3817
        // Predicated region
        $region33: #{tpu_custom_call.1} parent=31 // pred_check
          %p3819 = pneg %p103
        $region34: #{tpu_custom_call.1} parent=31 // pred_check_branch
          %3821 = sbr.rel (%p3819) target = $region36
        $region35: #{tpu_custom_call.1} parent=31 // pred_region
          %s3823 = ssub.s32 128, 128
          %3824 = vsyncadd %s3815, %s3823
          %s3825 = smul.addr %s17, 128
          %s3826 = scalar_lea.hbm %s3, %s3825
          %s3828 = sshll.u32 %s3818, 4
          %s3829 = int_to_ptr.vmem [resolvable:$true] %s3828
          %3831 = dma.vmem_to_hbm [thread:$0]  %s3829, 128, %s3826, %s3815
        $region36: #{tpu_custom_call.1} parent=31 // pred_fallthru
          _
      $region32: #{tpu_custom_call.1} parent=5 // pred_fallthru
        _
      %p3832 = scmp.le.s32.totalorder 2, %s12
      // Predicated region
      $region37: #{tpu_custom_call.1} parent=5 // pred_check
        %p3833 = pneg %p3832
      $region38: #{tpu_custom_call.1} parent=5 // pred_check_branch
        %3835 = sbr.rel (%p3833) target = $region40
      $region39: #{tpu_custom_call.1} parent=5 // pred_region
        %s3836 = ssub.s32 %s12, 2
        // Predicated region
        $region41: #{tpu_custom_call.1} parent=39 // pred_check
          %p3837 = pneg %p109
        $region42: #{tpu_custom_call.1} parent=39 // pred_check_branch
          %3839 = sbr.rel (%p3837) target = $region44
        $region43: #{tpu_custom_call.1} parent=39 // pred_region
          %s3840 = sand.u32 %s94, 1
          %s3841 = scalar_lea.sflag [#allocation5], %s3840
          %s3842 = sand.u32 %s94, 1
          %s3843 = smul.addr %s3842, 8
          %s3844 = scalar_lea.vmem [#allocation4], %s3843
          %3845 = dma.done %s3841, 128
        $region44: #{tpu_custom_call.1} parent=39 // pred_fallthru
          _
      $region40: #{tpu_custom_call.1} parent=5 // pred_fallthru
        _
    $region6: #{tpu_custom_call.1} parent=1 // loop_footer
      %s16 = sadd.s32 1, %s12
    $region7: #{tpu_custom_call.1} parent=1 // loop_footer_branch
      %11 = sbr.rel target = $region3
    $region8: #{tpu_custom_call.1} parent=1 // loop_exit
      _
    %3846 = vsyncpa [#allocation5], 1
    %s3847 = scalar_lea.sflag [#allocation5], 1
    %3848 = vsyncpa %s3847, 1

</llo_original>
